<compile_context>
chip_gen: v7x
topology: tpu7x:2x2x1
jax: 0.10.0
libtpu: 0.0.40
codegen_flags: <defaults>
</compile_context>

<pallas_src>
import math

import jax
import jax.numpy as jnp
from jax import lax
from jax.experimental import pallas as pl
from jax.experimental.pallas import tpu as pltpu

# ---------------- configuration (small, consistent with the module) ----------------
B = 2            # batch
D_MODEL = 32     # d_model
SEQ = D_MODEL    # seq length MUST equal d_model (key = x.transpose(1, 2) in the module)
NHEAD = 4
HEAD_DIM = D_MODEL // NHEAD
DIM_FF = 64
LN_EPS = 1e-5
# TODO(synk): selfAttn_mask / selfAttn_padding_mask are None in this synthetic setup; masks not implemented.


def _make_kernel(bb):
    """Build a kernel that processes `bb` batch elements per grid step."""
    BL = bb * SEQ
    scale = 1.0 / math.sqrt(HEAD_DIM)

    def kernel(x_ref,
               wqvT_ref, bqv_ref, wkT_ref, bk_ref, woT_ref, bo_ref,
               w1T_ref, b1_ref, w2T_ref, b2_ref,
               g1_ref, be1_ref, g2_ref, be2_ref,
               o_ref):
        x2 = x_ref[...].reshape(BL, D_MODEL)                         # (bb*L, D)

        # fused Q|V in-projection: single (BL, D) x (D, 2D) matmul (weights pre-transposed)
        qv = jnp.dot(x2, wqvT_ref[...],
                     preferred_element_type=jnp.float32) + bqv_ref[...]

        wkT = wkT_ref[...]
        bk = bk_ref[...]
        woT = woT_ref[...]

        attn_rows = []
        for b in range(bb):                                          # static unroll (bb <= 2)
            rs = slice(b * SEQ, (b + 1) * SEQ)
            xb = x2[rs]                                              # (L, D)
            # K projection consumes x^T per batch (module semantics; requires L == D)
            kb = jnp.dot(xb.T, wkT, preferred_element_type=jnp.float32) + bk
            acc = jnp.zeros((SEQ, D_MODEL), jnp.float32)
            for h in range(NHEAD):                                   # static unroll over heads
                cs = slice(h * HEAD_DIM, (h + 1) * HEAD_DIM)
                qh = qv[rs, h * HEAD_DIM:(h + 1) * HEAD_DIM]
                vh = qv[rs, D_MODEL + h * HEAD_DIM:D_MODEL + (h + 1) * HEAD_DIM]
                kh = kb[:, cs]
                # q @ k^T without an explicit transpose (contract on last dims)
                s = lax.dot_general(qh, kh, (((1,), (1,)), ((), ())),
                                    preferred_element_type=jnp.float32) * scale
                s = s - jnp.max(s, axis=-1, keepdims=True)
                p = jnp.exp(s)
                p = p * pl.reciprocal(jnp.sum(p, axis=-1, keepdims=True), approx=False)
                ho = jnp.dot(p, vh, preferred_element_type=jnp.float32)
                # fold the output projection into the head loop -> no lane-offset concatenate
                acc = acc + jnp.dot(ho, woT[h * HEAD_DIM:(h + 1) * HEAD_DIM, :],
                                    preferred_element_type=jnp.float32)
            attn_rows.append(acc)
        attn = (jnp.concatenate(attn_rows, axis=0) if bb > 1 else attn_rows[0]) + bo_ref[...]

        # residual + LayerNorm1 (rsqrt -> EUP slot)
        y1 = x2 + attn
        mu1 = jnp.mean(y1, axis=-1, keepdims=True)
        var1 = jnp.mean((y1 - mu1) ** 2, axis=-1, keepdims=True)
        y1 = (y1 - mu1) * lax.rsqrt(var1 + LN_EPS) * g1_ref[...] + be1_ref[...]

        # FFN: linear1 -> relu -> linear2 (weights pre-transposed)
        hdn = jnp.maximum(
            jnp.dot(y1, w1T_ref[...], preferred_element_type=jnp.float32) + b1_ref[...], 0.0)
        y2 = jnp.dot(hdn, w2T_ref[...], preferred_element_type=jnp.float32) + b2_ref[...]

        # residual + LayerNorm2
        y = y1 + y2
        mu2 = jnp.mean(y, axis=-1, keepdims=True)
        var2 = jnp.mean((y - mu2) ** 2, axis=-1, keepdims=True)
        out = (y - mu2) * lax.rsqrt(var2 + LN_EPS) * g2_ref[...] + be2_ref[...]

        o_ref[...] = out.reshape(bb, SEQ, D_MODEL)

    return kernel


def _batch_grid(Bn):
    """grid size along batch: 2 on v7x (one half per TensorCore), 1 on single-TC chips."""
    try:
        kind = jax.devices()[0].device_kind.lower()
    except Exception:
        kind = ""
    if "v7" in kind and Bn >= 2 and Bn % 2 == 0:
        return 2
    return 1  # v5e/v6e: collapse batch into one step (overhead-bound problem)


def transformer_encoder_layer(x, params):
    (wq, wk, wv, bq, bk, bv, wo, bo, w1, b1, w2, b2, g1, be1, g2, be2) = params
    Bn, L, D = x.shape
    assert L == D == D_MODEL, "module requires seq_len == d_model (key = x.transpose(1,2))"

    # ---- host-side weight prep: pre-transpose, fuse Q|V, lane-shaped biases ----
    r = lambda a: a.reshape(1, -1)
    prepped = (
        jnp.concatenate([wq, wv], axis=0).T,   # wqvT  (D, 2D)
        r(jnp.concatenate([bq, bv])),          # bqv   (1, 2D)
        wk.T, r(bk),                           # wkT, bk
        wo.T, r(bo),                           # woT, bo
        w1.T, r(b1),                           # w1T, b1
        w2.T, r(b2),                           # w2T, b2
        r(g1), r(be1), r(g2), r(be2),
    )

    gb = _batch_grid(Bn)
    bb = Bn // gb

    def full(a):
        return pl.BlockSpec(a.shape, lambda i: (0,) * a.ndim)

    in_specs = [pl.BlockSpec((bb, L, D), lambda i: (i, 0, 0))] + [full(a) for a in prepped]
    out_spec = pl.BlockSpec((bb, L, D), lambda i: (i, 0, 0))

    return pl.pallas_call(
        _make_kernel(bb),
        out_shape=jax.ShapeDtypeStruct((Bn, L, D), jnp.float32),
        grid_spec=pltpu.PrefetchScalarGridSpec(
            num_scalar_prefetch=0,
            grid=(gb,),
            in_specs=in_specs,
            out_specs=out_spec,
        ),
        compiler_params=pltpu.CompilerParams(dimension_semantics=("parallel",)),
    )(x, *prepped)


# ---------------- pure-JAX reference mirroring PyTorch semantics ----------------
def reference(x, params):
    (wq, wk, wv, bq, bk, bv, wo, bo, w1, b1, w2, b2, g1, be1, g2, be2) = params
    Bn, L, D = x.shape

    def ln(t, g, b):
        mu = jnp.mean(t, axis=-1, keepdims=True)
        var = jnp.mean((t - mu) ** 2, axis=-1, keepdims=True)
        return (t - mu) / jnp.sqrt(var + LN_EPS) * g + b

    q = x @ wq.T + bq
    k = jnp.swapaxes(x, 1, 2) @ wk.T + bk
    v = x @ wv.T + bv
    split = lambda t: t.reshape(Bn, -1, NHEAD, HEAD_DIM).transpose(0, 2, 1, 3)
    qh, kh, vh = split(q), split(k), split(v)
    s = jnp.einsum("bhqd,bhkd->bhqk", qh, kh) / math.sqrt(HEAD_DIM)
    p = jax.nn.softmax(s, axis=-1)
    o = jnp.einsum("bhqk,bhkd->bhqd", p, vh).transpose(0, 2, 1, 3).reshape(Bn, L, D)
    attn = o @ wo.T + bo
    y1 = ln(x + attn, g1, be1)
    ff = jnp.maximum(y1 @ w1.T + b1, 0.0) @ w2.T + b2
    return ln(y1 + ff, g2, be2)


def make_params(key):
    ks = jax.random.split(key, 8)
    scale = 0.05
    # in_proj_weight is a stacked (3*D, D) tensor in PyTorch; build it then split.
    in_proj_w = scale * jax.random.normal(ks[0], (3 * D_MODEL, D_MODEL), jnp.float32)
    in_proj_b = scale * jax.random.normal(ks[1], (3 * D_MODEL,), jnp.float32)
    wq, wk, wv = jnp.split(in_proj_w, 3, axis=0)
    bq, bk, bv = jnp.split(in_proj_b, 3, axis=0)
    wo = scale * jax.random.normal(ks[2], (D_MODEL, D_MODEL), jnp.float32)
    bo = scale * jax.random.normal(ks[3], (D_MODEL,), jnp.float32)
    w1 = scale * jax.random.normal(ks[4], (DIM_FF, D_MODEL), jnp.float32)
    b1 = scale * jax.random.normal(ks[5], (DIM_FF,), jnp.float32)
    w2 = scale * jax.random.normal(ks[6], (D_MODEL, DIM_FF), jnp.float32)
    b2 = scale * jax.random.normal(ks[7], (D_MODEL,), jnp.float32)
    g1 = jnp.ones((D_MODEL,), jnp.float32)
    be1 = jnp.zeros((D_MODEL,), jnp.float32)
    g2 = jnp.ones((D_MODEL,), jnp.float32)
    be2 = jnp.zeros((D_MODEL,), jnp.float32)
    return (wq, wk, wv, bq, bk, bv, wo, bo, w1, b1, w2, b2, g1, be1, g2, be2)


if __name__ == "__main__":
    key = jax.random.PRNGKey(0)
    kx, kp = jax.random.split(key)
    x = jax.random.normal(kx, (B, SEQ, D_MODEL), jnp.float32)
    params = make_params(kp)

    out = transformer_encoder_layer(x, params)
    out = jax.block_until_ready(out)

    ref = reference(x, params)
    assert out.shape == (B, SEQ, D_MODEL)
    assert jnp.allclose(out, ref, atol=1e-4, rtol=1e-4), "mismatch vs reference"
    print("KERNEL_OK")
</pallas_src>

<mosaic_0001>
module attributes {stable_mosaic.version = 11 : i64} {
  func.func @kernel(%arg0: i32, %arg1: memref<2x32x32xf32, #tpu.memory_space<vmem>>, %arg2: memref<32x64xf32, #tpu.memory_space<vmem>>, %arg3: memref<1x64xf32, #tpu.memory_space<vmem>>, %arg4: memref<32x32xf32, #tpu.memory_space<vmem>>, %arg5: memref<1x32xf32, #tpu.memory_space<vmem>>, %arg6: memref<32x32xf32, #tpu.memory_space<vmem>>, %arg7: memref<1x32xf32, #tpu.memory_space<vmem>>, %arg8: memref<32x64xf32, #tpu.memory_space<vmem>>, %arg9: memref<1x64xf32, #tpu.memory_space<vmem>>, %arg10: memref<64x32xf32, #tpu.memory_space<vmem>>, %arg11: memref<1x32xf32, #tpu.memory_space<vmem>>, %arg12: memref<1x32xf32, #tpu.memory_space<vmem>>, %arg13: memref<1x32xf32, #tpu.memory_space<vmem>>, %arg14: memref<1x32xf32, #tpu.memory_space<vmem>>, %arg15: memref<1x32xf32, #tpu.memory_space<vmem>>, %arg16: memref<2x32x32xf32, #tpu.memory_space<vmem>>) attributes {dimension_semantics = [#tpu.dimension_semantics<parallel>], iteration_bounds = array<i64: 1>, scalar_prefetch = 0 : i64, scratch_operands = 0 : i64, tpu.core_type = #tpu.core_type<tc>, window_params = [{transform_indices = @transform_0, window_bounds = array<i64: 2, 32, 32>}, {pipeline_mode = #tpu.pipeline_mode<synchronous>, transform_indices = @transform_1, window_bounds = array<i64: 32, 64>}, {pipeline_mode = #tpu.pipeline_mode<synchronous>, transform_indices = @transform_2, window_bounds = array<i64: 1, 64>}, {pipeline_mode = #tpu.pipeline_mode<synchronous>, transform_indices = @transform_3, window_bounds = array<i64: 32, 32>}, {pipeline_mode = #tpu.pipeline_mode<synchronous>, transform_indices = @transform_4, window_bounds = array<i64: 1, 32>}, {pipeline_mode = #tpu.pipeline_mode<synchronous>, transform_indices = @transform_5, window_bounds = array<i64: 32, 32>}, {pipeline_mode = #tpu.pipeline_mode<synchronous>, transform_indices = @transform_6, window_bounds = array<i64: 1, 32>}, {pipeline_mode = #tpu.pipeline_mode<synchronous>, transform_indices = @transform_7, window_bounds = array<i64: 32, 64>}, {pipeline_mode = #tpu.pipeline_mode<synchronous>, transform_indices = @transform_8, window_bounds = array<i64: 1, 64>}, {pipeline_mode = #tpu.pipeline_mode<synchronous>, transform_indices = @transform_9, window_bounds = array<i64: 64, 32>}, {pipeline_mode = #tpu.pipeline_mode<synchronous>, transform_indices = @transform_10, window_bounds = array<i64: 1, 32>}, {pipeline_mode = #tpu.pipeline_mode<synchronous>, transform_indices = @transform_11, window_bounds = array<i64: 1, 32>}, {pipeline_mode = #tpu.pipeline_mode<synchronous>, transform_indices = @transform_12, window_bounds = array<i64: 1, 32>}, {pipeline_mode = #tpu.pipeline_mode<synchronous>, transform_indices = @transform_13, window_bounds = array<i64: 1, 32>}, {pipeline_mode = #tpu.pipeline_mode<synchronous>, transform_indices = @transform_14, window_bounds = array<i64: 1, 32>}, {transform_indices = @transform_15, window_bounds = array<i64: 2, 32, 32>}]} {
    %c0 = arith.constant 0 : index
    %c0_0 = arith.constant 0 : index
    %c0_1 = arith.constant 0 : index
    %0 = vector.load %arg1[%c0, %c0_0, %c0_1] : memref<2x32x32xf32, #tpu.memory_space<vmem>>, vector<2x32x32xf32>
    %1 = vector.shape_cast %0 : vector<2x32x32xf32> to vector<64x32xf32>
    %c0_2 = arith.constant 0 : index
    %c0_3 = arith.constant 0 : index
    %2 = vector.load %arg2[%c0_2, %c0_3] : memref<32x64xf32, #tpu.memory_space<vmem>>, vector<32x64xf32>
    %cst = arith.constant dense<0.000000e+00> : vector<64x64xf32>
    %3 = tpu.matmul %1, %2, %cst {dimension_numbers = #tpu.dot_dimension_numbers<[1], [0], [0], [1], [0, 0, 1, 1], [], []>} : vector<64x32xf32>, vector<32x64xf32>, vector<64x64xf32> -> vector<64x64xf32>
    %c0_4 = arith.constant 0 : index
    %c0_5 = arith.constant 0 : index
    %4 = vector.load %arg3[%c0_4, %c0_5] : memref<1x64xf32, #tpu.memory_space<vmem>>, vector<1x64xf32>
    %5 = vector.broadcast %4 : vector<1x64xf32> to vector<64x64xf32>
    %6 = arith.addf %3, %5 : vector<64x64xf32>
    %c0_6 = arith.constant 0 : index
    %c0_7 = arith.constant 0 : index
    %7 = vector.load %arg4[%c0_6, %c0_7] : memref<32x32xf32, #tpu.memory_space<vmem>>, vector<32x32xf32>
    %c0_8 = arith.constant 0 : index
    %c0_9 = arith.constant 0 : index
    %8 = vector.load %arg5[%c0_8, %c0_9] : memref<1x32xf32, #tpu.memory_space<vmem>>, vector<1x32xf32>
    %c0_10 = arith.constant 0 : index
    %c0_11 = arith.constant 0 : index
    %9 = vector.load %arg6[%c0_10, %c0_11] : memref<32x32xf32, #tpu.memory_space<vmem>>, vector<32x32xf32>
    %10 = vector.extract_strided_slice %1 {offsets = [0, 0], sizes = [32, 32], strides = [1, 1]} : vector<64x32xf32> to vector<32x32xf32>
    %11 = tpu.transpose %10, [1, 0] : vector<32x32xf32> -> vector<32x32xf32>
    %cst_12 = arith.constant dense<0.000000e+00> : vector<32x32xf32>
    %12 = tpu.matmul %11, %7, %cst_12 {dimension_numbers = #tpu.dot_dimension_numbers<[1], [0], [0], [1], [0, 0, 1, 1], [], []>} : vector<32x32xf32>, vector<32x32xf32>, vector<32x32xf32> -> vector<32x32xf32>
    %13 = vector.broadcast %8 : vector<1x32xf32> to vector<32x32xf32>
    %14 = arith.addf %12, %13 : vector<32x32xf32>
    %cst_13 = arith.constant 0.000000e+00 : f32
    %15 = vector.broadcast %cst_13 : f32 to vector<32x32xf32>
    %16 = vector.extract_strided_slice %6 {offsets = [0, 0], sizes = [32, 8], strides = [1, 1]} : vector<64x64xf32> to vector<32x8xf32>
    %17 = vector.extract_strided_slice %6 {offsets = [0, 32], sizes = [32, 8], strides = [1, 1]} : vector<64x64xf32> to vector<32x8xf32>
    %18 = vector.extract_strided_slice %14 {offsets = [0, 0], sizes = [32, 8], strides = [1, 1]} : vector<32x32xf32> to vector<32x8xf32>
    %cst_14 = arith.constant dense<0.000000e+00> : vector<32x32xf32>
    %19 = tpu.matmul %16, %18, %cst_14 {dimension_numbers = #tpu.dot_dimension_numbers<[1], [1], [0], [0], [0, 0, 1, 0], [], []>} : vector<32x8xf32>, vector<32x8xf32>, vector<32x32xf32> -> vector<32x32xf32>
    %cst_15 = arith.constant 0.353553385 : f32
    %20 = vector.broadcast %cst_15 : f32 to vector<32x32xf32>
    %21 = arith.mulf %19, %20 : vector<32x32xf32>
    %cst_16 = arith.constant dense<0xFF800000> : vector<32xf32>
    %22 = vector.multi_reduction <maximumf>, %21, %cst_16 [1] : vector<32x32xf32> to vector<32xf32>
    %23 = vector.shape_cast %22 : vector<32xf32> to vector<32x1xf32>
    %24 = vector.broadcast %23 : vector<32x1xf32> to vector<32x32xf32>
    %25 = arith.subf %21, %24 : vector<32x32xf32>
    %26 = math.exp %25 : vector<32x32xf32>
    %cst_17 = arith.constant dense<0.000000e+00> : vector<32xf32>
    %27 = vector.multi_reduction <add>, %26, %cst_17 [1] : vector<32x32xf32> to vector<32xf32>
    %28 = vector.shape_cast %27 : vector<32xf32> to vector<32x1xf32>
    %29 = tpu.reciprocal %28 : vector<32x1xf32> -> vector<32x1xf32>
    %30 = vector.broadcast %29 : vector<32x1xf32> to vector<32x32xf32>
    %31 = arith.mulf %26, %30 : vector<32x32xf32>
    %cst_18 = arith.constant dense<0.000000e+00> : vector<32x8xf32>
    %32 = tpu.matmul %31, %17, %cst_18 {dimension_numbers = #tpu.dot_dimension_numbers<[1], [0], [0], [1], [0, 0, 1, 1], [], []>} : vector<32x32xf32>, vector<32x8xf32>, vector<32x8xf32> -> vector<32x8xf32>
    %33 = vector.extract_strided_slice %9 {offsets = [0, 0], sizes = [8, 32], strides = [1, 1]} : vector<32x32xf32> to vector<8x32xf32>
    %cst_19 = arith.constant dense<0.000000e+00> : vector<32x32xf32>
    %34 = tpu.matmul %32, %33, %cst_19 {dimension_numbers = #tpu.dot_dimension_numbers<[1], [0], [0], [1], [0, 0, 1, 1], [], []>} : vector<32x8xf32>, vector<8x32xf32>, vector<32x32xf32> -> vector<32x32xf32>
    %35 = arith.addf %15, %34 : vector<32x32xf32>
    %36 = vector.extract_strided_slice %6 {offsets = [0, 8], sizes = [32, 8], strides = [1, 1]} : vector<64x64xf32> to vector<32x8xf32>
    %37 = vector.extract_strided_slice %6 {offsets = [0, 40], sizes = [32, 8], strides = [1, 1]} : vector<64x64xf32> to vector<32x8xf32>
    %38 = vector.extract_strided_slice %14 {offsets = [0, 8], sizes = [32, 8], strides = [1, 1]} : vector<32x32xf32> to vector<32x8xf32>
    %cst_20 = arith.constant dense<0.000000e+00> : vector<32x32xf32>
    %39 = tpu.matmul %36, %38, %cst_20 {dimension_numbers = #tpu.dot_dimension_numbers<[1], [1], [0], [0], [0, 0, 1, 0], [], []>} : vector<32x8xf32>, vector<32x8xf32>, vector<32x32xf32> -> vector<32x32xf32>
    %cst_21 = arith.constant 0.353553385 : f32
    %40 = vector.broadcast %cst_21 : f32 to vector<32x32xf32>
    %41 = arith.mulf %39, %40 : vector<32x32xf32>
    %cst_22 = arith.constant dense<0xFF800000> : vector<32xf32>
    %42 = vector.multi_reduction <maximumf>, %41, %cst_22 [1] : vector<32x32xf32> to vector<32xf32>
    %43 = vector.shape_cast %42 : vector<32xf32> to vector<32x1xf32>
    %44 = vector.broadcast %43 : vector<32x1xf32> to vector<32x32xf32>
    %45 = arith.subf %41, %44 : vector<32x32xf32>
    %46 = math.exp %45 : vector<32x32xf32>
    %cst_23 = arith.constant dense<0.000000e+00> : vector<32xf32>
    %47 = vector.multi_reduction <add>, %46, %cst_23 [1] : vector<32x32xf32> to vector<32xf32>
    %48 = vector.shape_cast %47 : vector<32xf32> to vector<32x1xf32>
    %49 = tpu.reciprocal %48 : vector<32x1xf32> -> vector<32x1xf32>
    %50 = vector.broadcast %49 : vector<32x1xf32> to vector<32x32xf32>
    %51 = arith.mulf %46, %50 : vector<32x32xf32>
    %cst_24 = arith.constant dense<0.000000e+00> : vector<32x8xf32>
    %52 = tpu.matmul %51, %37, %cst_24 {dimension_numbers = #tpu.dot_dimension_numbers<[1], [0], [0], [1], [0, 0, 1, 1], [], []>} : vector<32x32xf32>, vector<32x8xf32>, vector<32x8xf32> -> vector<32x8xf32>
    %53 = vector.extract_strided_slice %9 {offsets = [8, 0], sizes = [8, 32], strides = [1, 1]} : vector<32x32xf32> to vector<8x32xf32>
    %cst_25 = arith.constant dense<0.000000e+00> : vector<32x32xf32>
    %54 = tpu.matmul %52, %53, %cst_25 {dimension_numbers = #tpu.dot_dimension_numbers<[1], [0], [0], [1], [0, 0, 1, 1], [], []>} : vector<32x8xf32>, vector<8x32xf32>, vector<32x32xf32> -> vector<32x32xf32>
    %55 = arith.addf %35, %54 : vector<32x32xf32>
    %56 = vector.extract_strided_slice %6 {offsets = [0, 16], sizes = [32, 8], strides = [1, 1]} : vector<64x64xf32> to vector<32x8xf32>
    %57 = vector.extract_strided_slice %6 {offsets = [0, 48], sizes = [32, 8], strides = [1, 1]} : vector<64x64xf32> to vector<32x8xf32>
    %58 = vector.extract_strided_slice %14 {offsets = [0, 16], sizes = [32, 8], strides = [1, 1]} : vector<32x32xf32> to vector<32x8xf32>
    %cst_26 = arith.constant dense<0.000000e+00> : vector<32x32xf32>
    %59 = tpu.matmul %56, %58, %cst_26 {dimension_numbers = #tpu.dot_dimension_numbers<[1], [1], [0], [0], [0, 0, 1, 0], [], []>} : vector<32x8xf32>, vector<32x8xf32>, vector<32x32xf32> -> vector<32x32xf32>
    %cst_27 = arith.constant 0.353553385 : f32
    %60 = vector.broadcast %cst_27 : f32 to vector<32x32xf32>
    %61 = arith.mulf %59, %60 : vector<32x32xf32>
    %cst_28 = arith.constant dense<0xFF800000> : vector<32xf32>
    %62 = vector.multi_reduction <maximumf>, %61, %cst_28 [1] : vector<32x32xf32> to vector<32xf32>
    %63 = vector.shape_cast %62 : vector<32xf32> to vector<32x1xf32>
    %64 = vector.broadcast %63 : vector<32x1xf32> to vector<32x32xf32>
    %65 = arith.subf %61, %64 : vector<32x32xf32>
    %66 = math.exp %65 : vector<32x32xf32>
    %cst_29 = arith.constant dense<0.000000e+00> : vector<32xf32>
    %67 = vector.multi_reduction <add>, %66, %cst_29 [1] : vector<32x32xf32> to vector<32xf32>
    %68 = vector.shape_cast %67 : vector<32xf32> to vector<32x1xf32>
    %69 = tpu.reciprocal %68 : vector<32x1xf32> -> vector<32x1xf32>
    %70 = vector.broadcast %69 : vector<32x1xf32> to vector<32x32xf32>
    %71 = arith.mulf %66, %70 : vector<32x32xf32>
    %cst_30 = arith.constant dense<0.000000e+00> : vector<32x8xf32>
    %72 = tpu.matmul %71, %57, %cst_30 {dimension_numbers = #tpu.dot_dimension_numbers<[1], [0], [0], [1], [0, 0, 1, 1], [], []>} : vector<32x32xf32>, vector<32x8xf32>, vector<32x8xf32> -> vector<32x8xf32>
    %73 = vector.extract_strided_slice %9 {offsets = [16, 0], sizes = [8, 32], strides = [1, 1]} : vector<32x32xf32> to vector<8x32xf32>
    %cst_31 = arith.constant dense<0.000000e+00> : vector<32x32xf32>
    %74 = tpu.matmul %72, %73, %cst_31 {dimension_numbers = #tpu.dot_dimension_numbers<[1], [0], [0], [1], [0, 0, 1, 1], [], []>} : vector<32x8xf32>, vector<8x32xf32>, vector<32x32xf32> -> vector<32x32xf32>
    %75 = arith.addf %55, %74 : vector<32x32xf32>
    %76 = vector.extract_strided_slice %6 {offsets = [0, 24], sizes = [32, 8], strides = [1, 1]} : vector<64x64xf32> to vector<32x8xf32>
    %77 = vector.extract_strided_slice %6 {offsets = [0, 56], sizes = [32, 8], strides = [1, 1]} : vector<64x64xf32> to vector<32x8xf32>
    %78 = vector.extract_strided_slice %14 {offsets = [0, 24], sizes = [32, 8], strides = [1, 1]} : vector<32x32xf32> to vector<32x8xf32>
    %cst_32 = arith.constant dense<0.000000e+00> : vector<32x32xf32>
    %79 = tpu.matmul %76, %78, %cst_32 {dimension_numbers = #tpu.dot_dimension_numbers<[1], [1], [0], [0], [0, 0, 1, 0], [], []>} : vector<32x8xf32>, vector<32x8xf32>, vector<32x32xf32> -> vector<32x32xf32>
    %cst_33 = arith.constant 0.353553385 : f32
    %80 = vector.broadcast %cst_33 : f32 to vector<32x32xf32>
    %81 = arith.mulf %79, %80 : vector<32x32xf32>
    %cst_34 = arith.constant dense<0xFF800000> : vector<32xf32>
    %82 = vector.multi_reduction <maximumf>, %81, %cst_34 [1] : vector<32x32xf32> to vector<32xf32>
    %83 = vector.shape_cast %82 : vector<32xf32> to vector<32x1xf32>
    %84 = vector.broadcast %83 : vector<32x1xf32> to vector<32x32xf32>
    %85 = arith.subf %81, %84 : vector<32x32xf32>
    %86 = math.exp %85 : vector<32x32xf32>
    %cst_35 = arith.constant dense<0.000000e+00> : vector<32xf32>
    %87 = vector.multi_reduction <add>, %86, %cst_35 [1] : vector<32x32xf32> to vector<32xf32>
    %88 = vector.shape_cast %87 : vector<32xf32> to vector<32x1xf32>
    %89 = tpu.reciprocal %88 : vector<32x1xf32> -> vector<32x1xf32>
    %90 = vector.broadcast %89 : vector<32x1xf32> to vector<32x32xf32>
    %91 = arith.mulf %86, %90 : vector<32x32xf32>
    %cst_36 = arith.constant dense<0.000000e+00> : vector<32x8xf32>
    %92 = tpu.matmul %91, %77, %cst_36 {dimension_numbers = #tpu.dot_dimension_numbers<[1], [0], [0], [1], [0, 0, 1, 1], [], []>} : vector<32x32xf32>, vector<32x8xf32>, vector<32x8xf32> -> vector<32x8xf32>
    %93 = vector.extract_strided_slice %9 {offsets = [24, 0], sizes = [8, 32], strides = [1, 1]} : vector<32x32xf32> to vector<8x32xf32>
    %cst_37 = arith.constant dense<0.000000e+00> : vector<32x32xf32>
    %94 = tpu.matmul %92, %93, %cst_37 {dimension_numbers = #tpu.dot_dimension_numbers<[1], [0], [0], [1], [0, 0, 1, 1], [], []>} : vector<32x8xf32>, vector<8x32xf32>, vector<32x32xf32> -> vector<32x32xf32>
    %95 = arith.addf %75, %94 : vector<32x32xf32>
    %96 = vector.extract_strided_slice %1 {offsets = [32, 0], sizes = [32, 32], strides = [1, 1]} : vector<64x32xf32> to vector<32x32xf32>
    %97 = tpu.transpose %96, [1, 0] : vector<32x32xf32> -> vector<32x32xf32>
    %cst_38 = arith.constant dense<0.000000e+00> : vector<32x32xf32>
    %98 = tpu.matmul %97, %7, %cst_38 {dimension_numbers = #tpu.dot_dimension_numbers<[1], [0], [0], [1], [0, 0, 1, 1], [], []>} : vector<32x32xf32>, vector<32x32xf32>, vector<32x32xf32> -> vector<32x32xf32>
    %99 = vector.broadcast %8 : vector<1x32xf32> to vector<32x32xf32>
    %100 = arith.addf %98, %99 : vector<32x32xf32>
    %cst_39 = arith.constant 0.000000e+00 : f32
    %101 = vector.broadcast %cst_39 : f32 to vector<32x32xf32>
    %102 = vector.extract_strided_slice %6 {offsets = [32, 0], sizes = [32, 8], strides = [1, 1]} : vector<64x64xf32> to vector<32x8xf32>
    %103 = vector.extract_strided_slice %6 {offsets = [32, 32], sizes = [32, 8], strides = [1, 1]} : vector<64x64xf32> to vector<32x8xf32>
    %104 = vector.extract_strided_slice %100 {offsets = [0, 0], sizes = [32, 8], strides = [1, 1]} : vector<32x32xf32> to vector<32x8xf32>
    %cst_40 = arith.constant dense<0.000000e+00> : vector<32x32xf32>
    %105 = tpu.matmul %102, %104, %cst_40 {dimension_numbers = #tpu.dot_dimension_numbers<[1], [1], [0], [0], [0, 0, 1, 0], [], []>} : vector<32x8xf32>, vector<32x8xf32>, vector<32x32xf32> -> vector<32x32xf32>
    %cst_41 = arith.constant 0.353553385 : f32
    %106 = vector.broadcast %cst_41 : f32 to vector<32x32xf32>
    %107 = arith.mulf %105, %106 : vector<32x32xf32>
    %cst_42 = arith.constant dense<0xFF800000> : vector<32xf32>
    %108 = vector.multi_reduction <maximumf>, %107, %cst_42 [1] : vector<32x32xf32> to vector<32xf32>
    %109 = vector.shape_cast %108 : vector<32xf32> to vector<32x1xf32>
    %110 = vector.broadcast %109 : vector<32x1xf32> to vector<32x32xf32>
    %111 = arith.subf %107, %110 : vector<32x32xf32>
    %112 = math.exp %111 : vector<32x32xf32>
    %cst_43 = arith.constant dense<0.000000e+00> : vector<32xf32>
    %113 = vector.multi_reduction <add>, %112, %cst_43 [1] : vector<32x32xf32> to vector<32xf32>
    %114 = vector.shape_cast %113 : vector<32xf32> to vector<32x1xf32>
    %115 = tpu.reciprocal %114 : vector<32x1xf32> -> vector<32x1xf32>
    %116 = vector.broadcast %115 : vector<32x1xf32> to vector<32x32xf32>
    %117 = arith.mulf %112, %116 : vector<32x32xf32>
    %cst_44 = arith.constant dense<0.000000e+00> : vector<32x8xf32>
    %118 = tpu.matmul %117, %103, %cst_44 {dimension_numbers = #tpu.dot_dimension_numbers<[1], [0], [0], [1], [0, 0, 1, 1], [], []>} : vector<32x32xf32>, vector<32x8xf32>, vector<32x8xf32> -> vector<32x8xf32>
    %119 = vector.extract_strided_slice %9 {offsets = [0, 0], sizes = [8, 32], strides = [1, 1]} : vector<32x32xf32> to vector<8x32xf32>
    %cst_45 = arith.constant dense<0.000000e+00> : vector<32x32xf32>
    %120 = tpu.matmul %118, %119, %cst_45 {dimension_numbers = #tpu.dot_dimension_numbers<[1], [0], [0], [1], [0, 0, 1, 1], [], []>} : vector<32x8xf32>, vector<8x32xf32>, vector<32x32xf32> -> vector<32x32xf32>
    %121 = arith.addf %101, %120 : vector<32x32xf32>
    %122 = vector.extract_strided_slice %6 {offsets = [32, 8], sizes = [32, 8], strides = [1, 1]} : vector<64x64xf32> to vector<32x8xf32>
    %123 = vector.extract_strided_slice %6 {offsets = [32, 40], sizes = [32, 8], strides = [1, 1]} : vector<64x64xf32> to vector<32x8xf32>
    %124 = vector.extract_strided_slice %100 {offsets = [0, 8], sizes = [32, 8], strides = [1, 1]} : vector<32x32xf32> to vector<32x8xf32>
    %cst_46 = arith.constant dense<0.000000e+00> : vector<32x32xf32>
    %125 = tpu.matmul %122, %124, %cst_46 {dimension_numbers = #tpu.dot_dimension_numbers<[1], [1], [0], [0], [0, 0, 1, 0], [], []>} : vector<32x8xf32>, vector<32x8xf32>, vector<32x32xf32> -> vector<32x32xf32>
    %cst_47 = arith.constant 0.353553385 : f32
    %126 = vector.broadcast %cst_47 : f32 to vector<32x32xf32>
    %127 = arith.mulf %125, %126 : vector<32x32xf32>
    %cst_48 = arith.constant dense<0xFF800000> : vector<32xf32>
    %128 = vector.multi_reduction <maximumf>, %127, %cst_48 [1] : vector<32x32xf32> to vector<32xf32>
    %129 = vector.shape_cast %128 : vector<32xf32> to vector<32x1xf32>
    %130 = vector.broadcast %129 : vector<32x1xf32> to vector<32x32xf32>
    %131 = arith.subf %127, %130 : vector<32x32xf32>
    %132 = math.exp %131 : vector<32x32xf32>
    %cst_49 = arith.constant dense<0.000000e+00> : vector<32xf32>
    %133 = vector.multi_reduction <add>, %132, %cst_49 [1] : vector<32x32xf32> to vector<32xf32>
    %134 = vector.shape_cast %133 : vector<32xf32> to vector<32x1xf32>
    %135 = tpu.reciprocal %134 : vector<32x1xf32> -> vector<32x1xf32>
    %136 = vector.broadcast %135 : vector<32x1xf32> to vector<32x32xf32>
    %137 = arith.mulf %132, %136 : vector<32x32xf32>
    %cst_50 = arith.constant dense<0.000000e+00> : vector<32x8xf32>
    %138 = tpu.matmul %137, %123, %cst_50 {dimension_numbers = #tpu.dot_dimension_numbers<[1], [0], [0], [1], [0, 0, 1, 1], [], []>} : vector<32x32xf32>, vector<32x8xf32>, vector<32x8xf32> -> vector<32x8xf32>
    %139 = vector.extract_strided_slice %9 {offsets = [8, 0], sizes = [8, 32], strides = [1, 1]} : vector<32x32xf32> to vector<8x32xf32>
    %cst_51 = arith.constant dense<0.000000e+00> : vector<32x32xf32>
    %140 = tpu.matmul %138, %139, %cst_51 {dimension_numbers = #tpu.dot_dimension_numbers<[1], [0], [0], [1], [0, 0, 1, 1], [], []>} : vector<32x8xf32>, vector<8x32xf32>, vector<32x32xf32> -> vector<32x32xf32>
    %141 = arith.addf %121, %140 : vector<32x32xf32>
    %142 = vector.extract_strided_slice %6 {offsets = [32, 16], sizes = [32, 8], strides = [1, 1]} : vector<64x64xf32> to vector<32x8xf32>
    %143 = vector.extract_strided_slice %6 {offsets = [32, 48], sizes = [32, 8], strides = [1, 1]} : vector<64x64xf32> to vector<32x8xf32>
    %144 = vector.extract_strided_slice %100 {offsets = [0, 16], sizes = [32, 8], strides = [1, 1]} : vector<32x32xf32> to vector<32x8xf32>
    %cst_52 = arith.constant dense<0.000000e+00> : vector<32x32xf32>
    %145 = tpu.matmul %142, %144, %cst_52 {dimension_numbers = #tpu.dot_dimension_numbers<[1], [1], [0], [0], [0, 0, 1, 0], [], []>} : vector<32x8xf32>, vector<32x8xf32>, vector<32x32xf32> -> vector<32x32xf32>
    %cst_53 = arith.constant 0.353553385 : f32
    %146 = vector.broadcast %cst_53 : f32 to vector<32x32xf32>
    %147 = arith.mulf %145, %146 : vector<32x32xf32>
    %cst_54 = arith.constant dense<0xFF800000> : vector<32xf32>
    %148 = vector.multi_reduction <maximumf>, %147, %cst_54 [1] : vector<32x32xf32> to vector<32xf32>
    %149 = vector.shape_cast %148 : vector<32xf32> to vector<32x1xf32>
    %150 = vector.broadcast %149 : vector<32x1xf32> to vector<32x32xf32>
    %151 = arith.subf %147, %150 : vector<32x32xf32>
    %152 = math.exp %151 : vector<32x32xf32>
    %cst_55 = arith.constant dense<0.000000e+00> : vector<32xf32>
    %153 = vector.multi_reduction <add>, %152, %cst_55 [1] : vector<32x32xf32> to vector<32xf32>
    %154 = vector.shape_cast %153 : vector<32xf32> to vector<32x1xf32>
    %155 = tpu.reciprocal %154 : vector<32x1xf32> -> vector<32x1xf32>
    %156 = vector.broadcast %155 : vector<32x1xf32> to vector<32x32xf32>
    %157 = arith.mulf %152, %156 : vector<32x32xf32>
    %cst_56 = arith.constant dense<0.000000e+00> : vector<32x8xf32>
    %158 = tpu.matmul %157, %143, %cst_56 {dimension_numbers = #tpu.dot_dimension_numbers<[1], [0], [0], [1], [0, 0, 1, 1], [], []>} : vector<32x32xf32>, vector<32x8xf32>, vector<32x8xf32> -> vector<32x8xf32>
    %159 = vector.extract_strided_slice %9 {offsets = [16, 0], sizes = [8, 32], strides = [1, 1]} : vector<32x32xf32> to vector<8x32xf32>
    %cst_57 = arith.constant dense<0.000000e+00> : vector<32x32xf32>
    %160 = tpu.matmul %158, %159, %cst_57 {dimension_numbers = #tpu.dot_dimension_numbers<[1], [0], [0], [1], [0, 0, 1, 1], [], []>} : vector<32x8xf32>, vector<8x32xf32>, vector<32x32xf32> -> vector<32x32xf32>
    %161 = arith.addf %141, %160 : vector<32x32xf32>
    %162 = vector.extract_strided_slice %6 {offsets = [32, 24], sizes = [32, 8], strides = [1, 1]} : vector<64x64xf32> to vector<32x8xf32>
    %163 = vector.extract_strided_slice %6 {offsets = [32, 56], sizes = [32, 8], strides = [1, 1]} : vector<64x64xf32> to vector<32x8xf32>
    %164 = vector.extract_strided_slice %100 {offsets = [0, 24], sizes = [32, 8], strides = [1, 1]} : vector<32x32xf32> to vector<32x8xf32>
    %cst_58 = arith.constant dense<0.000000e+00> : vector<32x32xf32>
    %165 = tpu.matmul %162, %164, %cst_58 {dimension_numbers = #tpu.dot_dimension_numbers<[1], [1], [0], [0], [0, 0, 1, 0], [], []>} : vector<32x8xf32>, vector<32x8xf32>, vector<32x32xf32> -> vector<32x32xf32>
    %cst_59 = arith.constant 0.353553385 : f32
    %166 = vector.broadcast %cst_59 : f32 to vector<32x32xf32>
    %167 = arith.mulf %165, %166 : vector<32x32xf32>
    %cst_60 = arith.constant dense<0xFF800000> : vector<32xf32>
    %168 = vector.multi_reduction <maximumf>, %167, %cst_60 [1] : vector<32x32xf32> to vector<32xf32>
    %169 = vector.shape_cast %168 : vector<32xf32> to vector<32x1xf32>
    %170 = vector.broadcast %169 : vector<32x1xf32> to vector<32x32xf32>
    %171 = arith.subf %167, %170 : vector<32x32xf32>
    %172 = math.exp %171 : vector<32x32xf32>
    %cst_61 = arith.constant dense<0.000000e+00> : vector<32xf32>
    %173 = vector.multi_reduction <add>, %172, %cst_61 [1] : vector<32x32xf32> to vector<32xf32>
    %174 = vector.shape_cast %173 : vector<32xf32> to vector<32x1xf32>
    %175 = tpu.reciprocal %174 : vector<32x1xf32> -> vector<32x1xf32>
    %176 = vector.broadcast %175 : vector<32x1xf32> to vector<32x32xf32>
    %177 = arith.mulf %172, %176 : vector<32x32xf32>
    %cst_62 = arith.constant dense<0.000000e+00> : vector<32x8xf32>
    %178 = tpu.matmul %177, %163, %cst_62 {dimension_numbers = #tpu.dot_dimension_numbers<[1], [0], [0], [1], [0, 0, 1, 1], [], []>} : vector<32x32xf32>, vector<32x8xf32>, vector<32x8xf32> -> vector<32x8xf32>
    %179 = vector.extract_strided_slice %9 {offsets = [24, 0], sizes = [8, 32], strides = [1, 1]} : vector<32x32xf32> to vector<8x32xf32>
    %cst_63 = arith.constant dense<0.000000e+00> : vector<32x32xf32>
    %180 = tpu.matmul %178, %179, %cst_63 {dimension_numbers = #tpu.dot_dimension_numbers<[1], [0], [0], [1], [0, 0, 1, 1], [], []>} : vector<32x8xf32>, vector<8x32xf32>, vector<32x32xf32> -> vector<32x32xf32>
    %181 = arith.addf %161, %180 : vector<32x32xf32>
    %182 = tpu.concatenate %95, %181 in 0 : vector<32x32xf32>, vector<32x32xf32> -> vector<64x32xf32>
    %c0_64 = arith.constant 0 : index
    %c0_65 = arith.constant 0 : index
    %183 = vector.load %arg7[%c0_64, %c0_65] : memref<1x32xf32, #tpu.memory_space<vmem>>, vector<1x32xf32>
    %184 = vector.broadcast %183 : vector<1x32xf32> to vector<64x32xf32>
    %185 = arith.addf %182, %184 : vector<64x32xf32>
    %186 = arith.addf %1, %185 : vector<64x32xf32>
    %cst_66 = arith.constant dense<0.000000e+00> : vector<64xf32>
    %187 = vector.multi_reduction <add>, %186, %cst_66 [1] : vector<64x32xf32> to vector<64xf32>
    %188 = vector.shape_cast %187 : vector<64xf32> to vector<64x1xf32>
    %cst_67 = arith.constant 3.200000e+01 : f32
    %189 = vector.broadcast %cst_67 : f32 to vector<64x1xf32>
    %190 = arith.divf %188, %189 : vector<64x1xf32>
    %191 = vector.broadcast %190 : vector<64x1xf32> to vector<64x32xf32>
    %192 = arith.subf %186, %191 : vector<64x32xf32>
    %193 = arith.mulf %192, %192 : vector<64x32xf32>
    %cst_68 = arith.constant dense<0.000000e+00> : vector<64xf32>
    %194 = vector.multi_reduction <add>, %193, %cst_68 [1] : vector<64x32xf32> to vector<64xf32>
    %195 = vector.shape_cast %194 : vector<64xf32> to vector<64x1xf32>
    %cst_69 = arith.constant 3.200000e+01 : f32
    %196 = vector.broadcast %cst_69 : f32 to vector<64x1xf32>
    %197 = arith.divf %195, %196 : vector<64x1xf32>
    %198 = vector.broadcast %190 : vector<64x1xf32> to vector<64x32xf32>
    %199 = arith.subf %186, %198 : vector<64x32xf32>
    %cst_70 = arith.constant 9.99999974E-6 : f32
    %200 = vector.broadcast %cst_70 : f32 to vector<64x1xf32>
    %201 = arith.addf %197, %200 : vector<64x1xf32>
    %202 = math.rsqrt %201 : vector<64x1xf32>
    %203 = vector.broadcast %202 : vector<64x1xf32> to vector<64x32xf32>
    %204 = arith.mulf %199, %203 : vector<64x32xf32>
    %c0_71 = arith.constant 0 : index
    %c0_72 = arith.constant 0 : index
    %205 = vector.load %arg12[%c0_71, %c0_72] : memref<1x32xf32, #tpu.memory_space<vmem>>, vector<1x32xf32>
    %206 = vector.broadcast %205 : vector<1x32xf32> to vector<64x32xf32>
    %207 = arith.mulf %204, %206 : vector<64x32xf32>
    %c0_73 = arith.constant 0 : index
    %c0_74 = arith.constant 0 : index
    %208 = vector.load %arg13[%c0_73, %c0_74] : memref<1x32xf32, #tpu.memory_space<vmem>>, vector<1x32xf32>
    %209 = vector.broadcast %208 : vector<1x32xf32> to vector<64x32xf32>
    %210 = arith.addf %207, %209 : vector<64x32xf32>
    %c0_75 = arith.constant 0 : index
    %c0_76 = arith.constant 0 : index
    %211 = vector.load %arg8[%c0_75, %c0_76] : memref<32x64xf32, #tpu.memory_space<vmem>>, vector<32x64xf32>
    %cst_77 = arith.constant dense<0.000000e+00> : vector<64x64xf32>
    %212 = tpu.matmul %210, %211, %cst_77 {dimension_numbers = #tpu.dot_dimension_numbers<[1], [0], [0], [1], [0, 0, 1, 1], [], []>} : vector<64x32xf32>, vector<32x64xf32>, vector<64x64xf32> -> vector<64x64xf32>
    %c0_78 = arith.constant 0 : index
    %c0_79 = arith.constant 0 : index
    %213 = vector.load %arg9[%c0_78, %c0_79] : memref<1x64xf32, #tpu.memory_space<vmem>>, vector<1x64xf32>
    %214 = vector.broadcast %213 : vector<1x64xf32> to vector<64x64xf32>
    %215 = arith.addf %212, %214 : vector<64x64xf32>
    %cst_80 = arith.constant 0.000000e+00 : f32
    %216 = vector.broadcast %cst_80 : f32 to vector<64x64xf32>
    %217 = arith.maximumf %215, %216 : vector<64x64xf32>
    %c0_81 = arith.constant 0 : index
    %c0_82 = arith.constant 0 : index
    %218 = vector.load %arg10[%c0_81, %c0_82] : memref<64x32xf32, #tpu.memory_space<vmem>>, vector<64x32xf32>
    %cst_83 = arith.constant dense<0.000000e+00> : vector<64x32xf32>
    %219 = tpu.matmul %217, %218, %cst_83 {dimension_numbers = #tpu.dot_dimension_numbers<[1], [0], [0], [1], [0, 0, 1, 1], [], []>} : vector<64x64xf32>, vector<64x32xf32>, vector<64x32xf32> -> vector<64x32xf32>
    %c0_84 = arith.constant 0 : index
    %c0_85 = arith.constant 0 : index
    %220 = vector.load %arg11[%c0_84, %c0_85] : memref<1x32xf32, #tpu.memory_space<vmem>>, vector<1x32xf32>
    %221 = vector.broadcast %220 : vector<1x32xf32> to vector<64x32xf32>
    %222 = arith.addf %219, %221 : vector<64x32xf32>
    %223 = arith.addf %210, %222 : vector<64x32xf32>
    %cst_86 = arith.constant dense<0.000000e+00> : vector<64xf32>
    %224 = vector.multi_reduction <add>, %223, %cst_86 [1] : vector<64x32xf32> to vector<64xf32>
    %225 = vector.shape_cast %224 : vector<64xf32> to vector<64x1xf32>
    %cst_87 = arith.constant 3.200000e+01 : f32
    %226 = vector.broadcast %cst_87 : f32 to vector<64x1xf32>
    %227 = arith.divf %225, %226 : vector<64x1xf32>
    %228 = vector.broadcast %227 : vector<64x1xf32> to vector<64x32xf32>
    %229 = arith.subf %223, %228 : vector<64x32xf32>
    %230 = arith.mulf %229, %229 : vector<64x32xf32>
    %cst_88 = arith.constant dense<0.000000e+00> : vector<64xf32>
    %231 = vector.multi_reduction <add>, %230, %cst_88 [1] : vector<64x32xf32> to vector<64xf32>
    %232 = vector.shape_cast %231 : vector<64xf32> to vector<64x1xf32>
    %cst_89 = arith.constant 3.200000e+01 : f32
    %233 = vector.broadcast %cst_89 : f32 to vector<64x1xf32>
    %234 = arith.divf %232, %233 : vector<64x1xf32>
    %235 = vector.broadcast %227 : vector<64x1xf32> to vector<64x32xf32>
    %236 = arith.subf %223, %235 : vector<64x32xf32>
    %cst_90 = arith.constant 9.99999974E-6 : f32
    %237 = vector.broadcast %cst_90 : f32 to vector<64x1xf32>
    %238 = arith.addf %234, %237 : vector<64x1xf32>
    %239 = math.rsqrt %238 : vector<64x1xf32>
    %240 = vector.broadcast %239 : vector<64x1xf32> to vector<64x32xf32>
    %241 = arith.mulf %236, %240 : vector<64x32xf32>
    %c0_91 = arith.constant 0 : index
    %c0_92 = arith.constant 0 : index
    %242 = vector.load %arg14[%c0_91, %c0_92] : memref<1x32xf32, #tpu.memory_space<vmem>>, vector<1x32xf32>
    %243 = vector.broadcast %242 : vector<1x32xf32> to vector<64x32xf32>
    %244 = arith.mulf %241, %243 : vector<64x32xf32>
    %c0_93 = arith.constant 0 : index
    %c0_94 = arith.constant 0 : index
    %245 = vector.load %arg15[%c0_93, %c0_94] : memref<1x32xf32, #tpu.memory_space<vmem>>, vector<1x32xf32>
    %246 = vector.broadcast %245 : vector<1x32xf32> to vector<64x32xf32>
    %247 = arith.addf %244, %246 : vector<64x32xf32>
    %248 = vector.shape_cast %247 : vector<64x32xf32> to vector<2x32x32xf32>
    %c0_95 = arith.constant 0 : index
    %c0_96 = arith.constant 0 : index
    %c0_97 = arith.constant 0 : index
    %249 = vector.load %arg16[%c0_95, %c0_96, %c0_97] : memref<2x32x32xf32, #tpu.memory_space<vmem>>, vector<2x32x32xf32>
    tpu.vector_store %arg16[%c0_95, %c0_96, %c0_97], %248 {strides = array<i32>} : memref<2x32x32xf32, #tpu.memory_space<vmem>>, vector<2x32x32xf32>,
    return
  }
  func.func @transform_0(%arg0: i32) -> (i32, i32, i32) {
    %c0_i32 = arith.constant 0 : i32
    %c0_i32_0 = arith.constant 0 : i32
    %c0_i32_1 = arith.constant 0 : i32
    return %arg0, %c0_i32, %c0_i32_0 : i32, i32, i32
  }
  func.func @transform_1(%arg0: i32) -> (i32, i32) {
    %c0_i32 = arith.constant 0 : i32
    %c0_i32_0 = arith.constant 0 : i32
    %c0_i32_1 = arith.constant 0 : i32
    return %c0_i32, %c0_i32_0 : i32, i32
  }
  func.func @transform_2(%arg0: i32) -> (i32, i32) {
    %c0_i32 = arith.constant 0 : i32
    %c0_i32_0 = arith.constant 0 : i32
    %c0_i32_1 = arith.constant 0 : i32
    return %c0_i32, %c0_i32_0 : i32, i32
  }
  func.func @transform_3(%arg0: i32) -> (i32, i32) {
    %c0_i32 = arith.constant 0 : i32
    %c0_i32_0 = arith.constant 0 : i32
    %c0_i32_1 = arith.constant 0 : i32
    return %c0_i32, %c0_i32_0 : i32, i32
  }
  func.func @transform_4(%arg0: i32) -> (i32, i32) {
    %c0_i32 = arith.constant 0 : i32
    %c0_i32_0 = arith.constant 0 : i32
    %c0_i32_1 = arith.constant 0 : i32
    return %c0_i32, %c0_i32_0 : i32, i32
  }
  func.func @transform_5(%arg0: i32) -> (i32, i32) {
    %c0_i32 = arith.constant 0 : i32
    %c0_i32_0 = arith.constant 0 : i32
    %c0_i32_1 = arith.constant 0 : i32
    return %c0_i32, %c0_i32_0 : i32, i32
  }
  func.func @transform_6(%arg0: i32) -> (i32, i32) {
    %c0_i32 = arith.constant 0 : i32
    %c0_i32_0 = arith.constant 0 : i32
    %c0_i32_1 = arith.constant 0 : i32
    return %c0_i32, %c0_i32_0 : i32, i32
  }
  func.func @transform_7(%arg0: i32) -> (i32, i32) {
    %c0_i32 = arith.constant 0 : i32
    %c0_i32_0 = arith.constant 0 : i32
    %c0_i32_1 = arith.constant 0 : i32
    return %c0_i32, %c0_i32_0 : i32, i32
  }
  func.func @transform_8(%arg0: i32) -> (i32, i32) {
    %c0_i32 = arith.constant 0 : i32
    %c0_i32_0 = arith.constant 0 : i32
    %c0_i32_1 = arith.constant 0 : i32
    return %c0_i32, %c0_i32_0 : i32, i32
  }
  func.func @transform_9(%arg0: i32) -> (i32, i32) {
    %c0_i32 = arith.constant 0 : i32
    %c0_i32_0 = arith.constant 0 : i32
    %c0_i32_1 = arith.constant 0 : i32
    return %c0_i32, %c0_i32_0 : i32, i32
  }
  func.func @transform_10(%arg0: i32) -> (i32, i32) {
    %c0_i32 = arith.constant 0 : i32
    %c0_i32_0 = arith.constant 0 : i32
    %c0_i32_1 = arith.constant 0 : i32
    return %c0_i32, %c0_i32_0 : i32, i32
  }
  func.func @transform_11(%arg0: i32) -> (i32, i32) {
    %c0_i32 = arith.constant 0 : i32
    %c0_i32_0 = arith.constant 0 : i32
    %c0_i32_1 = arith.constant 0 : i32
    return %c0_i32, %c0_i32_0 : i32, i32
  }
  func.func @transform_12(%arg0: i32) -> (i32, i32) {
    %c0_i32 = arith.constant 0 : i32
    %c0_i32_0 = arith.constant 0 : i32
    %c0_i32_1 = arith.constant 0 : i32
    return %c0_i32, %c0_i32_0 : i32, i32
  }
  func.func @transform_13(%arg0: i32) -> (i32, i32) {
    %c0_i32 = arith.constant 0 : i32
    %c0_i32_0 = arith.constant 0 : i32
    %c0_i32_1 = arith.constant 0 : i32
    return %c0_i32, %c0_i32_0 : i32, i32
  }
  func.func @transform_14(%arg0: i32) -> (i32, i32) {
    %c0_i32 = arith.constant 0 : i32
    %c0_i32_0 = arith.constant 0 : i32
    %c0_i32_1 = arith.constant 0 : i32
    return %c0_i32, %c0_i32_0 : i32, i32
  }
  func.func @transform_15(%arg0: i32) -> (i32, i32, i32) {
    %c0_i32 = arith.constant 0 : i32
    %c0_i32_0 = arith.constant 0 : i32
    %c0_i32_1 = arith.constant 0 : i32
    return %arg0, %c0_i32, %c0_i32_0 : i32, i32, i32
  }
}

</mosaic_0001>

<llo_original>
// kernel: tpu_custom_call.1
$region0: #{tpu_custom_call.1}
  #allocation0 [shape = 'u32[]', space=smem, size = 0x4, offset = 0x4, fixed_abs, tag = 'smem constant byte address 0x4 - core index']
  #allocation1 [shape = 'u32[144,128]{1,0:T(1,128)}', space=vmem, size = 0x12000, scoped, tag = 'internal scratch']
  %s0 = inlined_call_operand.vmem [shape: f32[2,32,32], index: 0, kind: input, shape index: {}]
  %s1 = inlined_call_operand.vmem [shape: f32[32,64], index: 1, kind: input, shape index: {}]
  %s2 = inlined_call_operand.vmem [shape: f32[1,64], index: 2, kind: input, shape index: {}]
  %s3 = inlined_call_operand.hbm [shape: f32[32,32], index: 3, kind: input, shape index: {}]
  %s4 = inlined_call_operand.vmem [shape: f32[1,32], index: 4, kind: input, shape index: {}]
  %s5 = inlined_call_operand.hbm [shape: f32[32,32], index: 5, kind: input, shape index: {}]
  %s6 = inlined_call_operand.hbm [shape: f32[1,32], index: 6, kind: input, shape index: {}]
  %s7 = inlined_call_operand.hbm [shape: f32[32,64], index: 7, kind: input, shape index: {}]
  %s8 = inlined_call_operand.hbm [shape: f32[1,64], index: 8, kind: input, shape index: {}]
  %s9 = inlined_call_operand.vmem [shape: f32[64,32], index: 9, kind: input, shape index: {}]
  %s10 = inlined_call_operand.vmem [shape: f32[1,32], index: 10, kind: input, shape index: {}]
  %s11 = inlined_call_operand.vmem [shape: f32[1,32], index: 11, kind: input, shape index: {}]
  %s12 = inlined_call_operand.vmem [shape: f32[1,32], index: 12, kind: input, shape index: {}]
  %s13 = inlined_call_operand.vmem [shape: f32[1,32], index: 13, kind: input, shape index: {}]
  %s14 = inlined_call_operand.vmem [shape: f32[1,32], index: 14, kind: input, shape index: {}]
  %s15 = inlined_call_operand.hbm [shape: f32[2,32,32], index: 15, kind: output, shape index: {}]
  %s16 = sld [smem:[#allocation0]]
  $region90: #{tpu_custom_call.1} parent=0
    _
  %s18 = ssub.s32 1, %s16
  %s19 = scalar_select 0, %s18, %s16
  $region1: #{tpu_custom_call.1} parent=0
    #allocation2 [shape = 'u8[16384]{0}', space=vmem, size = 0x4000, scoped, tag = 'input window, operand 3, single buffered']
    #allocation3 [shape = 's32[1]{0}', space=sflag, size = 0x4, scoped, tag = 'scoped memory for tpu_custom_call.1']
    #allocation4 [shape = 's32[1]{0}', space=sflag, size = 0x4, scoped, tag = 'scoped memory for tpu_custom_call.1']
    #allocation5 [shape = 'u8[16384]{0}', space=vmem, size = 0x4000, scoped, tag = 'input window, operand 5, single buffered']
    #allocation6 [shape = 's32[1]{0}', space=sflag, size = 0x4, scoped, tag = 'scoped memory for tpu_custom_call.1']
    #allocation7 [shape = 'u8[512]{0}', space=vmem, size = 0x400, scoped, tag = 'input window, operand 6, single buffered']
    #allocation8 [shape = 'u8[16384]{0}', space=vmem, size = 0x4000, scoped, tag = 'input window, operand 7, single buffered']
    #allocation9 [shape = 's32[1]{0}', space=sflag, size = 0x4, scoped, tag = 'scoped memory for tpu_custom_call.1']
    #allocation10 [shape = 'u8[512]{0}', space=vmem, size = 0x400, scoped, tag = 'input window, operand 8, single buffered']
    #allocation11 [shape = 'u8[32768]{0}', space=vmem, size = 0x8000, scoped, tag = 'output window, operand 0, single buffered']
    %20 = vsyncpa [#allocation3], 0
    %21 = vsyncpa [#allocation6], 0
    %22 = vsyncpa [#allocation9], 0
    %23 = vsyncpa [#allocation4], 0
    // Predicated region
    $region2: #{tpu_custom_call.1} parent=1 // pred_check
      _
    $region3: #{tpu_custom_call.1} parent=1 // pred_check_branch
      %25 = sbr.rel (0) target = $region5
    $region4: #{tpu_custom_call.1} parent=1 // pred_region
      _
    $region5: #{tpu_custom_call.1} parent=1 // pred_fallthru
      _
    // Predicated region
    $region6: #{tpu_custom_call.1} parent=1 // pred_check
      _
    $region7: #{tpu_custom_call.1} parent=1 // pred_check_branch
      %27 = sbr.rel (0) target = $region9
    $region8: #{tpu_custom_call.1} parent=1 // pred_region
      _
    $region9: #{tpu_custom_call.1} parent=1 // pred_fallthru
      _
    // Predicated region
    $region10: #{tpu_custom_call.1} parent=1 // pred_check
      _
    $region11: #{tpu_custom_call.1} parent=1 // pred_check_branch
      %29 = sbr.rel (0) target = $region13
    $region12: #{tpu_custom_call.1} parent=1 // pred_region
      _
    $region13: #{tpu_custom_call.1} parent=1 // pred_fallthru
      _
    // Predicated region
    $region14: #{tpu_custom_call.1} parent=1 // pred_check
      _
    $region15: #{tpu_custom_call.1} parent=1 // pred_check_branch
      %31 = sbr.rel (0) target = $region17
    $region16: #{tpu_custom_call.1} parent=1 // pred_region
      %s33 = ssub.s32 512, 512
      %34 = vsyncadd [#allocation3], %s33
      %s35 = sshll.u32 [#allocation2], 4
      %s36 = int_to_ptr.vmem [resolvable:$true] %s35
      %41 = dma.hbm_to_vmem [thread:$0]  %s3, 512, %s36, [#allocation3], 128, 128, 8
    $region17: #{tpu_custom_call.1} parent=1 // pred_fallthru
      _
    // Predicated region
    $region18: #{tpu_custom_call.1} parent=1 // pred_check
      _
    $region19: #{tpu_custom_call.1} parent=1 // pred_check_branch
      %43 = sbr.rel (0) target = $region21
    $region20: #{tpu_custom_call.1} parent=1 // pred_region
      _
    $region21: #{tpu_custom_call.1} parent=1 // pred_fallthru
      _
    // Predicated region
    $region22: #{tpu_custom_call.1} parent=1 // pred_check
      _
    $region23: #{tpu_custom_call.1} parent=1 // pred_check_branch
      %45 = sbr.rel (0) target = $region25
    $region24: #{tpu_custom_call.1} parent=1 // pred_region
      %s47 = ssub.s32 512, 512
      %48 = vsyncadd [#allocation6], %s47
      %s49 = sshll.u32 [#allocation5], 4
      %s50 = int_to_ptr.vmem [resolvable:$true] %s49
      %55 = dma.hbm_to_vmem [thread:$0]  %s5, 512, %s50, [#allocation6], 128, 128, 8
    $region25: #{tpu_custom_call.1} parent=1 // pred_fallthru
      _
    // Predicated region
    $region26: #{tpu_custom_call.1} parent=1 // pred_check
      _
    $region27: #{tpu_custom_call.1} parent=1 // pred_check_branch
      %57 = sbr.rel (0) target = $region29
    $region28: #{tpu_custom_call.1} parent=1 // pred_region
      %s59 = ssub.s32 16, 16
      %60 = vsyncadd [#allocation6], %s59
      %s62 = sshll.u32 [#allocation7], 4
      %s63 = int_to_ptr.vmem [resolvable:$true] %s62
      %65 = dma.hbm_to_vmem [thread:$0]  %s6, 16, %s63, [#allocation6]
    $region29: #{tpu_custom_call.1} parent=1 // pred_fallthru
      _
    // Predicated region
    $region30: #{tpu_custom_call.1} parent=1 // pred_check
      _
    $region31: #{tpu_custom_call.1} parent=1 // pred_check_branch
      %67 = sbr.rel (0) target = $region33
    $region32: #{tpu_custom_call.1} parent=1 // pred_region
      %s69 = ssub.s32 512, 512
      %70 = vsyncadd [#allocation9], %s69
      %s71 = sshll.u32 [#allocation8], 4
      %s72 = int_to_ptr.vmem [resolvable:$true] %s71
      %77 = dma.hbm_to_vmem [thread:$0]  %s7, 512, %s72, [#allocation9], 128, 128, 8
    $region33: #{tpu_custom_call.1} parent=1 // pred_fallthru
      _
    // Predicated region
    $region34: #{tpu_custom_call.1} parent=1 // pred_check
      _
    $region35: #{tpu_custom_call.1} parent=1 // pred_check_branch
      %79 = sbr.rel (0) target = $region37
    $region36: #{tpu_custom_call.1} parent=1 // pred_region
      %s81 = ssub.s32 16, 16
      %82 = vsyncadd [#allocation9], %s81
      %s84 = sshll.u32 [#allocation10], 4
      %s85 = int_to_ptr.vmem [resolvable:$true] %s84
      %87 = dma.hbm_to_vmem [thread:$0]  %s8, 16, %s85, [#allocation9]
    $region37: #{tpu_custom_call.1} parent=1 // pred_fallthru
      _
    // Predicated region
    $region38: #{tpu_custom_call.1} parent=1 // pred_check
      _
    $region39: #{tpu_custom_call.1} parent=1 // pred_check_branch
      %89 = sbr.rel (0) target = $region41
    $region40: #{tpu_custom_call.1} parent=1 // pred_region
      _
    $region41: #{tpu_custom_call.1} parent=1 // pred_fallthru
      _
    // Predicated region
    $region42: #{tpu_custom_call.1} parent=1 // pred_check
      _
    $region43: #{tpu_custom_call.1} parent=1 // pred_check_branch
      %91 = sbr.rel (0) target = $region45
    $region44: #{tpu_custom_call.1} parent=1 // pred_region
      _
    $region45: #{tpu_custom_call.1} parent=1 // pred_fallthru
      _
    // Predicated region
    $region46: #{tpu_custom_call.1} parent=1 // pred_check
      _
    $region47: #{tpu_custom_call.1} parent=1 // pred_check_branch
      %93 = sbr.rel (0) target = $region49
    $region48: #{tpu_custom_call.1} parent=1 // pred_region
      _
    $region49: #{tpu_custom_call.1} parent=1 // pred_fallthru
      _
    // Predicated region
    $region50: #{tpu_custom_call.1} parent=1 // pred_check
      _
    $region51: #{tpu_custom_call.1} parent=1 // pred_check_branch
      %95 = sbr.rel (0) target = $region53
    $region52: #{tpu_custom_call.1} parent=1 // pred_region
      _
    $region53: #{tpu_custom_call.1} parent=1 // pred_fallthru
      _
    // Predicated region
    $region54: #{tpu_custom_call.1} parent=1 // pred_check
      _
    $region55: #{tpu_custom_call.1} parent=1 // pred_check_branch
      %97 = sbr.rel (0) target = $region57
    $region56: #{tpu_custom_call.1} parent=1 // pred_region
      _
    $region57: #{tpu_custom_call.1} parent=1 // pred_fallthru
      _
    // Predicated region
    $region58: #{tpu_custom_call.1} parent=1 // pred_check
      _
    $region59: #{tpu_custom_call.1} parent=1 // pred_check_branch
      %99 = sbr.rel (0) target = $region61
    $region60: #{tpu_custom_call.1} parent=1 // pred_region
      _
    $region61: #{tpu_custom_call.1} parent=1 // pred_fallthru
      _
    // Predicated region
    $region62: #{tpu_custom_call.1} parent=1 // pred_check
      _
    $region63: #{tpu_custom_call.1} parent=1 // pred_check_branch
      %101 = sbr.rel (0) target = $region65
    $region64: #{tpu_custom_call.1} parent=1 // pred_region
      %102 = dma.done [#allocation3], 512
    $region65: #{tpu_custom_call.1} parent=1 // pred_fallthru
      _
    // Predicated region
    $region66: #{tpu_custom_call.1} parent=1 // pred_check
      _
    $region67: #{tpu_custom_call.1} parent=1 // pred_check_branch
      %104 = sbr.rel (0) target = $region69
    $region68: #{tpu_custom_call.1} parent=1 // pred_region
      %105 = dma.done [#allocation6], 512
    $region69: #{tpu_custom_call.1} parent=1 // pred_fallthru
      _
    // Predicated region
    $region70: #{tpu_custom_call.1} parent=1 // pred_check
      _
    $region71: #{tpu_custom_call.1} parent=1 // pred_check_branch
      %107 = sbr.rel (0) target = $region73
    $region72: #{tpu_custom_call.1} parent=1 // pred_region
      %108 = dma.done [#allocation6], 16
    $region73: #{tpu_custom_call.1} parent=1 // pred_fallthru
      _
    // Predicated region
    $region74: #{tpu_custom_call.1} parent=1 // pred_check
      _
    $region75: #{tpu_custom_call.1} parent=1 // pred_check_branch
      %110 = sbr.rel (0) target = $region77
    $region76: #{tpu_custom_call.1} parent=1 // pred_region
      %111 = dma.done [#allocation9], 512
    $region77: #{tpu_custom_call.1} parent=1 // pred_fallthru
      _
    // Predicated region
    $region78: #{tpu_custom_call.1} parent=1 // pred_check
      _
    $region79: #{tpu_custom_call.1} parent=1 // pred_check_branch
      %113 = sbr.rel (0) target = $region81
    $region80: #{tpu_custom_call.1} parent=1 // pred_region
      %114 = dma.done [#allocation9], 16
    $region81: #{tpu_custom_call.1} parent=1 // pred_fallthru
      _
    %v115 = vld [vmem:[%s0] sm:$0xff]
    %v116 = vld [vmem:[%s0 + $0x8] sm:$0xff]
    %v117 = vld [vmem:[%s0 + $0x10] sm:$0xff]
    %v118 = vld [vmem:[%s0 + $0x18] sm:$0xff]
    %v119 = vld [vmem:[%s0 + $0x20] sm:$0xff]
    %v120 = vld [vmem:[%s0 + $0x28] sm:$0xff]
    %v121 = vld [vmem:[%s0 + $0x30] sm:$0xff]
    %v122 = vld [vmem:[%s0 + $0x38] sm:$0xff]
    %v123 = vld [vmem:[%s1] sm:$0xff]
    %v124 = vld [vmem:[%s1 + $0x8] sm:$0xff]
    %v125 = vld [vmem:[%s1 + $0x10] sm:$0xff]
    %v126 = vld [vmem:[%s1 + $0x18] sm:$0xff]
    %v127 = vld [vmem:[%s2] sm:$0x1]
    %v129 = vlaneseq
    %v130 = vshrl.u32 %v129, 7
    %v131 = vsub.s32 0, %v130
    %v132 = vrot.slane %v127, %v131
    %vm134 = vcmask 261120
    %v136 = vsel %vm134, %v115, 0
    %v139 = vsel %vm134, %v116, 0
    %v142 = vsel %vm134, %v117, 0
    %v145 = vsel %vm134, %v118, 0
    %v148 = vsel %vm134, %v119, 0
    %v151 = vsel %vm134, %v120, 0
    %v154 = vsel %vm134, %v121, 0
    %v157 = vsel %vm134, %v122, 0
    %159 = vmatprep.subr.mxu0 0.0
    %160 = vmatpush1.msra.mxu0 %v123
    %161 = vmatprep.subr.mxu0 0.0
    %162 = vmatpush1.msra.mxu0 %v124
    %163 = vmatprep.subr.mxu0 0.0
    %164 = vmatpush1.msra.mxu0 %v125
    %165 = vmatprep.subr.mxu0 0.0
    %166 = vmatpush1.msra.mxu0 %v126
    %167 = vmatprep.subr.mxu0 0.0
    %168 = vmatpush1.msra.mxu0 0.0
    %169 = vmatprep.subr.mxu0 0.0
    %170 = vmatpush1.msra.mxu0 0.0
    %171 = vmatprep.subr.mxu0 0.0
    %172 = vmatpush1.msra.mxu0 0.0
    %173 = vmatprep.subr.mxu0 0.0
    %174 = vmatpush1.msra.mxu0 0.0
    %175 = vmatprep.subr.mxu0 0.0
    %176 = vmatpush1.msra.mxu0 0.0
    %177 = vmatprep.subr.mxu0 0.0
    %178 = vmatpush1.msra.mxu0 0.0
    %179 = vmatprep.subr.mxu0 0.0
    %180 = vmatpush1.msra.mxu0 0.0
    %181 = vmatprep.subr.mxu0 0.0
    %182 = vmatpush1.msra.mxu0 0.0
    %183 = vmatprep.subr.mxu0 0.0
    %184 = vmatpush1.msra.mxu0 0.0
    %185 = vmatprep.subr.mxu0 0.0
    %186 = vmatpush1.msra.mxu0 0.0
    %187 = vmatprep.subr.mxu0 0.0
    %188 = vmatpush1.msra.mxu0 0.0
    %189 = vmatprep.subr.mxu0 0.0
    %190 = vmatpush1.msra.mxu0 0.0
    %191 = vmatprep.subr.mxu0 0.0
    %192 = vmatpush1.msra.mxu0 0.0
    %193 = vmatprep.subr.mxu0 0.0
    %194 = vmatpush1.msra.mxu0 0.0
    %195 = vmatprep.subr.mxu0 0.0
    %196 = vmatpush1.msra.mxu0 0.0
    %197 = vmatprep.subr.mxu0 0.0
    %198 = vmatpush1.msra.mxu0 0.0
    %199 = vmatprep.subr.mxu0 0.0
    %200 = vmatpush1.msra.mxu0 0.0
    %201 = vmatprep.subr.mxu0 0.0
    %202 = vmatpush1.msra.mxu0 0.0
    %203 = vmatprep.subr.mxu0 0.0
    %204 = vmatpush1.msra.mxu0 0.0
    %205 = vmatprep.subr.mxu0 0.0
    %206 = vmatpush1.msra.mxu0 0.0
    %207 = vmatprep.subr.mxu0 0.0
    %208 = vmatpush1.msra.mxu0 0.0
    %209 = vmatprep.subr.mxu0 0.0
    %210 = vmatpush1.msra.mxu0 0.0
    %211 = vmatprep.subr.mxu0 0.0
    %212 = vmatpush1.msra.mxu0 0.0
    %213 = vmatprep.subr.mxu0 0.0
    %214 = vmatpush1.msra.mxu0 0.0
    %215 = vmatprep.subr.mxu0 0.0
    %216 = vmatpush1.msra.mxu0 0.0
    %217 = vmatprep.subr.mxu0 0.0
    %218 = vmatpush1.msra.mxu0 0.0
    %219 = vmatprep.subr.mxu0 0.0
    %220 = vmatpush1.msra.mxu0 0.0
    %221 = vmatprep.subr.mxu0 0.0
    %222 = vmatpush1.msra.mxu0 0.0
    %223 = vmatprep.mubr.f32.mxu0 0.0
    %224 = vmatmul.mubr.f32.gmra.mrb[0].mxu0 %v136
    %v225 = vpop.f32.mrb[0].mxu0
    %v226 = vadd.f32 %v132, %v225
    %v227 = vpop.f32.mrb[0].mxu0
    %228 = vmatprep.mubr.f32.mxu0 0.0
    %229 = vmatmul.mubr.f32.gmra.mrb[0].mxu0 %v139
    %v230 = vpop.f32.mrb[0].mxu0
    %v231 = vadd.f32 %v132, %v230
    %v232 = vpop.f32.mrb[0].mxu0
    %233 = vmatprep.mubr.f32.mxu0 0.0
    %234 = vmatmul.mubr.f32.gmra.mrb[0].mxu0 %v142
    %v235 = vpop.f32.mrb[0].mxu0
    %v236 = vadd.f32 %v132, %v235
    %v237 = vpop.f32.mrb[0].mxu0
    %238 = vmatprep.mubr.f32.mxu0 0.0
    %239 = vmatmul.mubr.f32.gmra.mrb[0].mxu0 %v145
    %v240 = vpop.f32.mrb[0].mxu0
    %v241 = vadd.f32 %v132, %v240
    %v242 = vpop.f32.mrb[0].mxu0
    %243 = vmatprep.mubr.f32.mxu0 0.0
    %244 = vmatmul.mubr.f32.gmra.mrb[0].mxu0 %v148
    %v245 = vpop.f32.mrb[0].mxu0
    %v246 = vadd.f32 %v132, %v245
    %v247 = vpop.f32.mrb[0].mxu0
    %248 = vmatprep.mubr.f32.mxu0 0.0
    %249 = vmatmul.mubr.f32.gmra.mrb[0].mxu0 %v151
    %v250 = vpop.f32.mrb[0].mxu0
    %v251 = vadd.f32 %v132, %v250
    %v252 = vpop.f32.mrb[0].mxu0
    %253 = vmatprep.mubr.f32.mxu0 0.0
    %254 = vmatmul.mubr.f32.gmra.mrb[0].mxu0 %v154
    %v255 = vpop.f32.mrb[0].mxu0
    %v256 = vadd.f32 %v132, %v255
    %v257 = vpop.f32.mrb[0].mxu0
    %258 = vmatprep.mubr.f32.mxu0 0.0
    %259 = vmatmul.mubr.f32.gmra.mrb[0].mxu0 %v157
    %v260 = vpop.f32.mrb[0].mxu0
    %v261 = vadd.f32 %v132, %v260
    %v262 = vpop.f32.mrb[0].mxu0
    %263 = vdwg.mxu0
    %v264 = vld [vmem:[#allocation2] sm:$0xff]
    %v265 = vld [vmem:[#allocation2 + $0x8] sm:$0xff]
    %v266 = vld [vmem:[#allocation2 + $0x10] sm:$0xff]
    %v267 = vld [vmem:[#allocation2 + $0x18] sm:$0xff]
    %v268 = vld [vmem:[%s4] sm:$0x1]
    %v269 = vld [vmem:[#allocation5] sm:$0xff]
    %v270 = vld [vmem:[#allocation5 + $0x8] sm:$0xff]
    %v271 = vld [vmem:[#allocation5 + $0x10] sm:$0xff]
    %v272 = vld [vmem:[#allocation5 + $0x18] sm:$0xff]
    %273 = vxpose.xlu0.b32.start [1/16] %v115, 128
    %274 = vxpose.xlu0.b32.cont [2/16] %v116, 128
    %275 = vxpose.xlu0.b32.cont [3/16] %v117, 128
    %276 = vxpose.xlu0.b32.cont [4/16] %v118, 128
    %277 = vxpose.xlu0.b32.cont [5/16] 0.0, 128
    %278 = vxpose.xlu0.b32.cont [6/16] 0.0, 128
    %279 = vxpose.xlu0.b32.cont [7/16] 0.0, 128
    %280 = vxpose.xlu0.b32.cont [8/16] 0.0, 128
    %281 = vxpose.xlu0.b32.cont [9/16] 0.0, 128
    %282 = vxpose.xlu0.b32.cont [10/16] 0.0, 128
    %283 = vxpose.xlu0.b32.cont [11/16] 0.0, 128
    %284 = vxpose.xlu0.b32.cont [12/16] 0.0, 128
    %285 = vxpose.xlu0.b32.cont [13/16] 0.0, 128
    %286 = vxpose.xlu0.b32.cont [14/16] 0.0, 128
    %287 = vxpose.xlu0.b32.cont [15/16] 0.0, 128
    %288 = vxpose.xlu0.b32.end [16/16] 0.0, 128
    %v289 = vpop.trf.xlu0
    %v290 = vpop.trf.xlu0
    %v291 = vpop.trf.xlu0
    %v292 = vpop.trf.xlu0
    %v293 = vpop.trf.xlu0
    %v294 = vpop.trf.xlu0
    %v295 = vpop.trf.xlu0
    %v296 = vpop.trf.xlu0
    %v297 = vpop.trf.xlu0
    %v298 = vpop.trf.xlu0
    %v299 = vpop.trf.xlu0
    %v300 = vpop.trf.xlu0
    %v301 = vpop.trf.xlu0
    %v302 = vpop.trf.xlu0
    %v303 = vpop.trf.xlu0
    %v304 = vpop.trf.xlu0
    %v306 = vlaneseq
    %v307 = vshrl.u32 %v306, 7
    %v308 = vsub.s32 0, %v307
    %v309 = vrot.slane %v268, %v308
    %v312 = vsel %vm134, %v289, 0
    %v315 = vsel %vm134, %v290, 0
    %v318 = vsel %vm134, %v291, 0
    %v321 = vsel %vm134, %v292, 0
    %323 = vmatprep.subr.mxu0 0.0
    %324 = vmatpush1.msra.mxu0 %v264
    %325 = vmatprep.subr.mxu0 0.0
    %326 = vmatpush1.msra.mxu0 %v265
    %327 = vmatprep.subr.mxu0 0.0
    %328 = vmatpush1.msra.mxu0 %v266
    %329 = vmatprep.subr.mxu0 0.0
    %330 = vmatpush1.msra.mxu0 %v267
    %331 = vmatprep.subr.mxu0 0.0
    %332 = vmatpush1.msra.mxu0 0.0
    %333 = vmatprep.subr.mxu0 0.0
    %334 = vmatpush1.msra.mxu0 0.0
    %335 = vmatprep.subr.mxu0 0.0
    %336 = vmatpush1.msra.mxu0 0.0
    %337 = vmatprep.subr.mxu0 0.0
    %338 = vmatpush1.msra.mxu0 0.0
    %339 = vmatprep.subr.mxu0 0.0
    %340 = vmatpush1.msra.mxu0 0.0
    %341 = vmatprep.subr.mxu0 0.0
    %342 = vmatpush1.msra.mxu0 0.0
    %343 = vmatprep.subr.mxu0 0.0
    %344 = vmatpush1.msra.mxu0 0.0
    %345 = vmatprep.subr.mxu0 0.0
    %346 = vmatpush1.msra.mxu0 0.0
    %347 = vmatprep.subr.mxu0 0.0
    %348 = vmatpush1.msra.mxu0 0.0
    %349 = vmatprep.subr.mxu0 0.0
    %350 = vmatpush1.msra.mxu0 0.0
    %351 = vmatprep.subr.mxu0 0.0
    %352 = vmatpush1.msra.mxu0 0.0
    %353 = vmatprep.subr.mxu0 0.0
    %354 = vmatpush1.msra.mxu0 0.0
    %355 = vmatprep.subr.mxu0 0.0
    %356 = vmatpush1.msra.mxu0 0.0
    %357 = vmatprep.subr.mxu0 0.0
    %358 = vmatpush1.msra.mxu0 0.0
    %359 = vmatprep.subr.mxu0 0.0
    %360 = vmatpush1.msra.mxu0 0.0
    %361 = vmatprep.subr.mxu0 0.0
    %362 = vmatpush1.msra.mxu0 0.0
    %363 = vmatprep.subr.mxu0 0.0
    %364 = vmatpush1.msra.mxu0 0.0
    %365 = vmatprep.subr.mxu0 0.0
    %366 = vmatpush1.msra.mxu0 0.0
    %367 = vmatprep.subr.mxu0 0.0
    %368 = vmatpush1.msra.mxu0 0.0
    %369 = vmatprep.subr.mxu0 0.0
    %370 = vmatpush1.msra.mxu0 0.0
    %371 = vmatprep.subr.mxu0 0.0
    %372 = vmatpush1.msra.mxu0 0.0
    %373 = vmatprep.subr.mxu0 0.0
    %374 = vmatpush1.msra.mxu0 0.0
    %375 = vmatprep.subr.mxu0 0.0
    %376 = vmatpush1.msra.mxu0 0.0
    %377 = vmatprep.subr.mxu0 0.0
    %378 = vmatpush1.msra.mxu0 0.0
    %379 = vmatprep.subr.mxu0 0.0
    %380 = vmatpush1.msra.mxu0 0.0
    %381 = vmatprep.subr.mxu0 0.0
    %382 = vmatpush1.msra.mxu0 0.0
    %383 = vmatprep.subr.mxu0 0.0
    %384 = vmatpush1.msra.mxu0 0.0
    %385 = vmatprep.subr.mxu0 0.0
    %386 = vmatpush1.msra.mxu0 0.0
    %387 = vmatprep.mubr.f32.mxu0 0.0
    %388 = vmatmul.mubr.f32.gmra.mrb[0].mxu0 %v312
    %v389 = vpop.f32.mrb[0].mxu0
    %v390 = vadd.f32 %v309, %v389
    %v391 = vpop.f32.mrb[0].mxu0
    %392 = vmatprep.mubr.f32.mxu0 0.0
    %393 = vmatmul.mubr.f32.gmra.mrb[0].mxu0 %v315
    %v394 = vpop.f32.mrb[0].mxu0
    %v395 = vadd.f32 %v309, %v394
    %v396 = vpop.f32.mrb[0].mxu0
    %397 = vmatprep.mubr.f32.mxu0 0.0
    %398 = vmatmul.mubr.f32.gmra.mrb[0].mxu0 %v318
    %v399 = vpop.f32.mrb[0].mxu0
    %v400 = vadd.f32 %v309, %v399
    %v401 = vpop.f32.mrb[0].mxu0
    %402 = vmatprep.mubr.f32.mxu0 0.0
    %403 = vmatmul.mubr.f32.gmra.mrb[0].mxu0 %v321
    %v404 = vpop.f32.mrb[0].mxu0
    %v405 = vadd.f32 %v309, %v404
    %v406 = vpop.f32.mrb[0].mxu0
    %407 = vdwg.mxu0
    %vm408 = vcmask 64512
    %v410 = vsel %vm408, %v226, 0
    %v413 = vsel %vm408, %v231, 0
    %v416 = vsel %vm408, %v236, 0
    %v419 = vsel %vm408, %v241, 0
    %v422 = vsel %vm408, %v390, 0
    %v425 = vsel %vm408, %v395, 0
    %v428 = vsel %vm408, %v400, 0
    %v431 = vsel %vm408, %v405, 0
    %433 = vmatprep.subr.mxu0 0.0
    %434 = vmatpush1.xpose.msra.mxu0 %v422
    %435 = vmatprep.subr.mxu0 0.0
    %436 = vmatpush1.xpose.msra.mxu0 %v425
    %437 = vmatprep.subr.mxu0 0.0
    %438 = vmatpush1.xpose.msra.mxu0 %v428
    %439 = vmatprep.subr.mxu0 0.0
    %440 = vmatpush1.xpose.msra.mxu0 %v431
    %441 = vmatprep.subr.mxu0 0.0
    %442 = vmatpush1.xpose.msra.mxu0 0.0
    %443 = vmatprep.subr.mxu0 0.0
    %444 = vmatpush1.xpose.msra.mxu0 0.0
    %445 = vmatprep.subr.mxu0 0.0
    %446 = vmatpush1.xpose.msra.mxu0 0.0
    %447 = vmatprep.subr.mxu0 0.0
    %448 = vmatpush1.xpose.msra.mxu0 0.0
    %449 = vmatprep.subr.mxu0 0.0
    %450 = vmatpush1.xpose.msra.mxu0 0.0
    %451 = vmatprep.subr.mxu0 0.0
    %452 = vmatpush1.xpose.msra.mxu0 0.0
    %453 = vmatprep.subr.mxu0 0.0
    %454 = vmatpush1.xpose.msra.mxu0 0.0
    %455 = vmatprep.subr.mxu0 0.0
    %456 = vmatpush1.xpose.msra.mxu0 0.0
    %457 = vmatprep.subr.mxu0 0.0
    %458 = vmatpush1.xpose.msra.mxu0 0.0
    %459 = vmatprep.subr.mxu0 0.0
    %460 = vmatpush1.xpose.msra.mxu0 0.0
    %461 = vmatprep.subr.mxu0 0.0
    %462 = vmatpush1.xpose.msra.mxu0 0.0
    %463 = vmatprep.subr.mxu0 0.0
    %464 = vmatpush1.xpose.msra.mxu0 0.0
    %465 = vmatprep.subr.mxu0 0.0
    %466 = vmatpush1.xpose.msra.mxu0 0.0
    %467 = vmatprep.subr.mxu0 0.0
    %468 = vmatpush1.xpose.msra.mxu0 0.0
    %469 = vmatprep.subr.mxu0 0.0
    %470 = vmatpush1.xpose.msra.mxu0 0.0
    %471 = vmatprep.subr.mxu0 0.0
    %472 = vmatpush1.xpose.msra.mxu0 0.0
    %473 = vmatprep.subr.mxu0 0.0
    %474 = vmatpush1.xpose.msra.mxu0 0.0
    %475 = vmatprep.subr.mxu0 0.0
    %476 = vmatpush1.xpose.msra.mxu0 0.0
    %477 = vmatprep.subr.mxu0 0.0
    %478 = vmatpush1.xpose.msra.mxu0 0.0
    %479 = vmatprep.subr.mxu0 0.0
    %480 = vmatpush1.xpose.msra.mxu0 0.0
    %481 = vmatprep.subr.mxu0 0.0
    %482 = vmatpush1.xpose.msra.mxu0 0.0
    %483 = vmatprep.subr.mxu0 0.0
    %484 = vmatpush1.xpose.msra.mxu0 0.0
    %485 = vmatprep.subr.mxu0 0.0
    %486 = vmatpush1.xpose.msra.mxu0 0.0
    %487 = vmatprep.subr.mxu0 0.0
    %488 = vmatpush1.xpose.msra.mxu0 0.0
    %489 = vmatprep.subr.mxu0 0.0
    %490 = vmatpush1.xpose.msra.mxu0 0.0
    %491 = vmatprep.subr.mxu0 0.0
    %492 = vmatpush1.xpose.msra.mxu0 0.0
    %493 = vmatprep.subr.mxu0 0.0
    %494 = vmatpush1.xpose.msra.mxu0 0.0
    %495 = vmatprep.subr.mxu0 0.0
    %496 = vmatpush1.xpose.msra.mxu0 0.0
    %497 = vmatprep.mubr.f32.mxu0 0.0
    %498 = vmatmul.mubr.f32.gmra.mrb[0].mxu0 %v410
    %v499 = vpop.f32.mrb[0].mxu0
    %v500 = vadd.f32 0.0, %v499
    %v501 = vpop.f32.mrb[0].mxu0
    %502 = vmatprep.mubr.f32.mxu0 0.0
    %503 = vmatmul.mubr.f32.gmra.mrb[0].mxu0 %v413
    %v504 = vpop.f32.mrb[0].mxu0
    %v505 = vadd.f32 0.0, %v504
    %v506 = vpop.f32.mrb[0].mxu0
    %507 = vmatprep.mubr.f32.mxu0 0.0
    %508 = vmatmul.mubr.f32.gmra.mrb[0].mxu0 %v416
    %v509 = vpop.f32.mrb[0].mxu0
    %v510 = vadd.f32 0.0, %v509
    %v511 = vpop.f32.mrb[0].mxu0
    %512 = vmatprep.mubr.f32.mxu0 0.0
    %513 = vmatmul.mubr.f32.gmra.mrb[0].mxu0 %v419
    %v514 = vpop.f32.mrb[0].mxu0
    %v515 = vadd.f32 0.0, %v514
    %v516 = vpop.f32.mrb[0].mxu0
    %517 = vdwg.mxu0
    %v518 = vmul.f32 %v500, 0.35355338
    %v519 = vmul.f32 %v505, 0.35355338
    %v520 = vmul.f32 %v510, 0.35355338
    %v521 = vmul.f32 %v515, 0.35355338
    %v522 = vsel %vm134, %v518, -inf
    %523 = vmax.xlane.f32.xlu0 %v522
    %v524 = vpop.xlane.xlu0 %523
    %v525 = vsel %vm134, %v519, -inf
    %526 = vmax.xlane.f32.xlu0 %v525
    %v527 = vpop.xlane.xlu0 %526
    %v528 = vsel %vm134, %v520, -inf
    %529 = vmax.xlane.f32.xlu0 %v528
    %v530 = vpop.xlane.xlu0 %529
    %v531 = vsel %vm134, %v521, -inf
    %532 = vmax.xlane.f32.xlu0 %v531
    %v533 = vpop.xlane.xlu0 %532
    %v534 = vsub.f32 %v518, %v524
    %v535 = vsub.f32 %v519, %v527
    %v536 = vsub.f32 %v520, %v530
    %v537 = vsub.f32 %v521, %v533
    %v538 = vmul.f32 %v534, 1.442695
    %v539 = vpow.pop %v538
    %v540 = vmul.f32 %v535, 1.442695
    %v541 = vpow.pop %v540
    %v542 = vmul.f32 %v536, 1.442695
    %v543 = vpow.pop %v542
    %v544 = vmul.f32 %v537, 1.442695
    %v545 = vpow.pop %v544
    %v546 = vsel %vm134, %v539, 0.0
    %547 = vadd.xlane.f32.xlu0 %v546
    %v548 = vpop.xlane.xlu0 %547
    %v549 = vsel %vm134, %v541, 0.0
    %550 = vadd.xlane.f32.xlu0 %v549
    %v551 = vpop.xlane.xlu0 %550
    %v552 = vsel %vm134, %v543, 0.0
    %553 = vadd.xlane.f32.xlu0 %v552
    %v554 = vpop.xlane.xlu0 %553
    %v555 = vsel %vm134, %v545, 0.0
    %556 = vadd.xlane.f32.xlu0 %v555
    %v557 = vpop.xlane.xlu0 %556
    %v558 = vrcp.pop %v548
    %v559 = vrcp.pop %v551
    %v560 = vrcp.pop %v554
    %v561 = vrcp.pop %v557
    %v562 = vmul.f32 %v539, %v558
    %v563 = vmul.f32 %v541, %v559
    %v564 = vmul.f32 %v543, %v560
    %v565 = vmul.f32 %v545, %v561
    %566 = vrot.lane.b32.xlu0 %v226, 96
    %v567 = vpop.permute.xlu0 %566
    %568 = vrot.lane.b32.xlu0 %v231, 96
    %v569 = vpop.permute.xlu0 %568
    %570 = vrot.lane.b32.xlu0 %v236, 96
    %v571 = vpop.permute.xlu0 %570
    %572 = vrot.lane.b32.xlu0 %v241, 96
    %v573 = vpop.permute.xlu0 %572
    %v579 = vsel %vm134, %v562, 0
    %v582 = vsel %vm134, %v563, 0
    %v585 = vsel %vm134, %v564, 0
    %v588 = vsel %vm134, %v565, 0
    %590 = vmatprep.subr.mxu0 0.0
    %591 = vmatpush1.msra.mxu0 %v567
    %592 = vmatprep.subr.mxu0 0.0
    %593 = vmatpush1.msra.mxu0 %v569
    %594 = vmatprep.subr.mxu0 0.0
    %595 = vmatpush1.msra.mxu0 %v571
    %596 = vmatprep.subr.mxu0 0.0
    %597 = vmatpush1.msra.mxu0 %v573
    %598 = vmatprep.subr.mxu0 0.0
    %599 = vmatpush1.msra.mxu0 0.0
    %600 = vmatprep.subr.mxu0 0.0
    %601 = vmatpush1.msra.mxu0 0.0
    %602 = vmatprep.subr.mxu0 0.0
    %603 = vmatpush1.msra.mxu0 0.0
    %604 = vmatprep.subr.mxu0 0.0
    %605 = vmatpush1.msra.mxu0 0.0
    %606 = vmatprep.subr.mxu0 0.0
    %607 = vmatpush1.msra.mxu0 0.0
    %608 = vmatprep.subr.mxu0 0.0
    %609 = vmatpush1.msra.mxu0 0.0
    %610 = vmatprep.subr.mxu0 0.0
    %611 = vmatpush1.msra.mxu0 0.0
    %612 = vmatprep.subr.mxu0 0.0
    %613 = vmatpush1.msra.mxu0 0.0
    %614 = vmatprep.subr.mxu0 0.0
    %615 = vmatpush1.msra.mxu0 0.0
    %616 = vmatprep.subr.mxu0 0.0
    %617 = vmatpush1.msra.mxu0 0.0
    %618 = vmatprep.subr.mxu0 0.0
    %619 = vmatpush1.msra.mxu0 0.0
    %620 = vmatprep.subr.mxu0 0.0
    %621 = vmatpush1.msra.mxu0 0.0
    %622 = vmatprep.subr.mxu0 0.0
    %623 = vmatpush1.msra.mxu0 0.0
    %624 = vmatprep.subr.mxu0 0.0
    %625 = vmatpush1.msra.mxu0 0.0
    %626 = vmatprep.subr.mxu0 0.0
    %627 = vmatpush1.msra.mxu0 0.0
    %628 = vmatprep.subr.mxu0 0.0
    %629 = vmatpush1.msra.mxu0 0.0
    %630 = vmatprep.subr.mxu0 0.0
    %631 = vmatpush1.msra.mxu0 0.0
    %632 = vmatprep.subr.mxu0 0.0
    %633 = vmatpush1.msra.mxu0 0.0
    %634 = vmatprep.subr.mxu0 0.0
    %635 = vmatpush1.msra.mxu0 0.0
    %636 = vmatprep.subr.mxu0 0.0
    %637 = vmatpush1.msra.mxu0 0.0
    %638 = vmatprep.subr.mxu0 0.0
    %639 = vmatpush1.msra.mxu0 0.0
    %640 = vmatprep.subr.mxu0 0.0
    %641 = vmatpush1.msra.mxu0 0.0
    %642 = vmatprep.subr.mxu0 0.0
    %643 = vmatpush1.msra.mxu0 0.0
    %644 = vmatprep.subr.mxu0 0.0
    %645 = vmatpush1.msra.mxu0 0.0
    %646 = vmatprep.subr.mxu0 0.0
    %647 = vmatpush1.msra.mxu0 0.0
    %648 = vmatprep.subr.mxu0 0.0
    %649 = vmatpush1.msra.mxu0 0.0
    %650 = vmatprep.subr.mxu0 0.0
    %651 = vmatpush1.msra.mxu0 0.0
    %652 = vmatprep.subr.mxu0 0.0
    %653 = vmatpush1.msra.mxu0 0.0
    %654 = vmatprep.mubr.f32.mxu0 0.0
    %655 = vmatmul.mubr.f32.gmra.mrb[0].mxu0 %v579
    %v656 = vpop.f32.mrb[0].mxu0
    %v657 = vadd.f32 0.0, %v656
    %v658 = vpop.f32.mrb[0].mxu0
    %659 = vmatprep.mubr.f32.mxu0 0.0
    %660 = vmatmul.mubr.f32.gmra.mrb[0].mxu0 %v582
    %v661 = vpop.f32.mrb[0].mxu0
    %v662 = vadd.f32 0.0, %v661
    %v663 = vpop.f32.mrb[0].mxu0
    %664 = vmatprep.mubr.f32.mxu0 0.0
    %665 = vmatmul.mubr.f32.gmra.mrb[0].mxu0 %v585
    %v666 = vpop.f32.mrb[0].mxu0
    %v667 = vadd.f32 0.0, %v666
    %v668 = vpop.f32.mrb[0].mxu0
    %669 = vmatprep.mubr.f32.mxu0 0.0
    %670 = vmatmul.mubr.f32.gmra.mrb[0].mxu0 %v588
    %v671 = vpop.f32.mrb[0].mxu0
    %v672 = vadd.f32 0.0, %v671
    %v673 = vpop.f32.mrb[0].mxu0
    %674 = vdwg.mxu0
    %675 = vrot.lane.b32.xlu0 %v226, 120
    %v676 = vpop.permute.xlu0 %675
    %677 = vrot.lane.b32.xlu0 %v231, 120
    %v678 = vpop.permute.xlu0 %677
    %679 = vrot.lane.b32.xlu0 %v236, 120
    %v680 = vpop.permute.xlu0 %679
    %681 = vrot.lane.b32.xlu0 %v241, 120
    %v682 = vpop.permute.xlu0 %681
    %683 = vrot.lane.b32.xlu0 %v390, 120
    %v684 = vpop.permute.xlu0 %683
    %685 = vrot.lane.b32.xlu0 %v395, 120
    %v686 = vpop.permute.xlu0 %685
    %687 = vrot.lane.b32.xlu0 %v400, 120
    %v688 = vpop.permute.xlu0 %687
    %689 = vrot.lane.b32.xlu0 %v405, 120
    %v690 = vpop.permute.xlu0 %689
    %v691 = vsel %vm408, %v676, 0
    %v693 = vsel %vm408, %v678, 0
    %v695 = vsel %vm408, %v680, 0
    %v697 = vsel %vm408, %v682, 0
    %v699 = vsel %vm408, %v684, 0
    %v701 = vsel %vm408, %v686, 0
    %v703 = vsel %vm408, %v688, 0
    %v705 = vsel %vm408, %v690, 0
    %707 = vmatprep.subr.mxu0 0.0
    %708 = vmatpush1.xpose.msra.mxu0 %v699
    %709 = vmatprep.subr.mxu0 0.0
    %710 = vmatpush1.xpose.msra.mxu0 %v701
    %711 = vmatprep.subr.mxu0 0.0
    %712 = vmatpush1.xpose.msra.mxu0 %v703
    %713 = vmatprep.subr.mxu0 0.0
    %714 = vmatpush1.xpose.msra.mxu0 %v705
    %715 = vmatprep.subr.mxu0 0.0
    %716 = vmatpush1.xpose.msra.mxu0 0.0
    %717 = vmatprep.subr.mxu0 0.0
    %718 = vmatpush1.xpose.msra.mxu0 0.0
    %719 = vmatprep.subr.mxu0 0.0
    %720 = vmatpush1.xpose.msra.mxu0 0.0
    %721 = vmatprep.subr.mxu0 0.0
    %722 = vmatpush1.xpose.msra.mxu0 0.0
    %723 = vmatprep.subr.mxu0 0.0
    %724 = vmatpush1.xpose.msra.mxu0 0.0
    %725 = vmatprep.subr.mxu0 0.0
    %726 = vmatpush1.xpose.msra.mxu0 0.0
    %727 = vmatprep.subr.mxu0 0.0
    %728 = vmatpush1.xpose.msra.mxu0 0.0
    %729 = vmatprep.subr.mxu0 0.0
    %730 = vmatpush1.xpose.msra.mxu0 0.0
    %731 = vmatprep.subr.mxu0 0.0
    %732 = vmatpush1.xpose.msra.mxu0 0.0
    %733 = vmatprep.subr.mxu0 0.0
    %734 = vmatpush1.xpose.msra.mxu0 0.0
    %735 = vmatprep.subr.mxu0 0.0
    %736 = vmatpush1.xpose.msra.mxu0 0.0
    %737 = vmatprep.subr.mxu0 0.0
    %738 = vmatpush1.xpose.msra.mxu0 0.0
    %739 = vmatprep.subr.mxu0 0.0
    %740 = vmatpush1.xpose.msra.mxu0 0.0
    %741 = vmatprep.subr.mxu0 0.0
    %742 = vmatpush1.xpose.msra.mxu0 0.0
    %743 = vmatprep.subr.mxu0 0.0
    %744 = vmatpush1.xpose.msra.mxu0 0.0
    %745 = vmatprep.subr.mxu0 0.0
    %746 = vmatpush1.xpose.msra.mxu0 0.0
    %747 = vmatprep.subr.mxu0 0.0
    %748 = vmatpush1.xpose.msra.mxu0 0.0
    %749 = vmatprep.subr.mxu0 0.0
    %750 = vmatpush1.xpose.msra.mxu0 0.0
    %751 = vmatprep.subr.mxu0 0.0
    %752 = vmatpush1.xpose.msra.mxu0 0.0
    %753 = vmatprep.subr.mxu0 0.0
    %754 = vmatpush1.xpose.msra.mxu0 0.0
    %755 = vmatprep.subr.mxu0 0.0
    %756 = vmatpush1.xpose.msra.mxu0 0.0
    %757 = vmatprep.subr.mxu0 0.0
    %758 = vmatpush1.xpose.msra.mxu0 0.0
    %759 = vmatprep.subr.mxu0 0.0
    %760 = vmatpush1.xpose.msra.mxu0 0.0
    %761 = vmatprep.subr.mxu0 0.0
    %762 = vmatpush1.xpose.msra.mxu0 0.0
    %763 = vmatprep.subr.mxu0 0.0
    %764 = vmatpush1.xpose.msra.mxu0 0.0
    %765 = vmatprep.subr.mxu0 0.0
    %766 = vmatpush1.xpose.msra.mxu0 0.0
    %767 = vmatprep.subr.mxu0 0.0
    %768 = vmatpush1.xpose.msra.mxu0 0.0
    %769 = vmatprep.subr.mxu0 0.0
    %770 = vmatpush1.xpose.msra.mxu0 0.0
    %771 = vmatprep.mubr.f32.mxu0 0.0
    %772 = vmatmul.mubr.f32.gmra.mrb[0].mxu0 %v691
    %v773 = vpop.f32.mrb[0].mxu0
    %v774 = vadd.f32 0.0, %v773
    %v775 = vpop.f32.mrb[0].mxu0
    %776 = vmatprep.mubr.f32.mxu0 0.0
    %777 = vmatmul.mubr.f32.gmra.mrb[0].mxu0 %v693
    %v778 = vpop.f32.mrb[0].mxu0
    %v779 = vadd.f32 0.0, %v778
    %v780 = vpop.f32.mrb[0].mxu0
    %781 = vmatprep.mubr.f32.mxu0 0.0
    %782 = vmatmul.mubr.f32.gmra.mrb[0].mxu0 %v695
    %v783 = vpop.f32.mrb[0].mxu0
    %v784 = vadd.f32 0.0, %v783
    %v785 = vpop.f32.mrb[0].mxu0
    %786 = vmatprep.mubr.f32.mxu0 0.0
    %787 = vmatmul.mubr.f32.gmra.mrb[0].mxu0 %v697
    %v788 = vpop.f32.mrb[0].mxu0
    %v789 = vadd.f32 0.0, %v788
    %v790 = vpop.f32.mrb[0].mxu0
    %791 = vdwg.mxu0
    %v792 = vmul.f32 %v774, 0.35355338
    %v793 = vmul.f32 %v779, 0.35355338
    %v794 = vmul.f32 %v784, 0.35355338
    %v795 = vmul.f32 %v789, 0.35355338
    %v796 = vsel %vm134, %v792, -inf
    %797 = vmax.xlane.f32.xlu0 %v796
    %v798 = vpop.xlane.xlu0 %797
    %v799 = vsel %vm134, %v793, -inf
    %800 = vmax.xlane.f32.xlu0 %v799
    %v801 = vpop.xlane.xlu0 %800
    %v802 = vsel %vm134, %v794, -inf
    %803 = vmax.xlane.f32.xlu0 %v802
    %v804 = vpop.xlane.xlu0 %803
    %v805 = vsel %vm134, %v795, -inf
    %806 = vmax.xlane.f32.xlu0 %v805
    %v807 = vpop.xlane.xlu0 %806
    %v808 = vsub.f32 %v792, %v798
    %v809 = vsub.f32 %v793, %v801
    %v810 = vsub.f32 %v794, %v804
    %v811 = vsub.f32 %v795, %v807
    %v812 = vmul.f32 %v808, 1.442695
    %v813 = vpow.pop %v812
    %v814 = vmul.f32 %v809, 1.442695
    %v815 = vpow.pop %v814
    %v816 = vmul.f32 %v810, 1.442695
    %v817 = vpow.pop %v816
    %v818 = vmul.f32 %v811, 1.442695
    %v819 = vpow.pop %v818
    %v820 = vsel %vm134, %v813, 0.0
    %821 = vadd.xlane.f32.xlu0 %v820
    %v822 = vpop.xlane.xlu0 %821
    %v823 = vsel %vm134, %v815, 0.0
    %824 = vadd.xlane.f32.xlu0 %v823
    %v825 = vpop.xlane.xlu0 %824
    %v826 = vsel %vm134, %v817, 0.0
    %827 = vadd.xlane.f32.xlu0 %v826
    %v828 = vpop.xlane.xlu0 %827
    %v829 = vsel %vm134, %v819, 0.0
    %830 = vadd.xlane.f32.xlu0 %v829
    %v831 = vpop.xlane.xlu0 %830
    %v832 = vrcp.pop %v822
    %v833 = vrcp.pop %v825
    %v834 = vrcp.pop %v828
    %v835 = vrcp.pop %v831
    %v836 = vmul.f32 %v813, %v832
    %v837 = vmul.f32 %v815, %v833
    %v838 = vmul.f32 %v817, %v834
    %v839 = vmul.f32 %v819, %v835
    %840 = vrot.lane.b32.xlu0 %v226, 88
    %v841 = vpop.permute.xlu0 %840
    %842 = vrot.lane.b32.xlu0 %v231, 88
    %v843 = vpop.permute.xlu0 %842
    %844 = vrot.lane.b32.xlu0 %v236, 88
    %v845 = vpop.permute.xlu0 %844
    %846 = vrot.lane.b32.xlu0 %v241, 88
    %v847 = vpop.permute.xlu0 %846
    %v853 = vsel %vm134, %v836, 0
    %v856 = vsel %vm134, %v837, 0
    %v859 = vsel %vm134, %v838, 0
    %v862 = vsel %vm134, %v839, 0
    %864 = vmatprep.subr.mxu0 0.0
    %865 = vmatpush1.msra.mxu0 %v841
    %866 = vmatprep.subr.mxu0 0.0
    %867 = vmatpush1.msra.mxu0 %v843
    %868 = vmatprep.subr.mxu0 0.0
    %869 = vmatpush1.msra.mxu0 %v845
    %870 = vmatprep.subr.mxu0 0.0
    %871 = vmatpush1.msra.mxu0 %v847
    %872 = vmatprep.subr.mxu0 0.0
    %873 = vmatpush1.msra.mxu0 0.0
    %874 = vmatprep.subr.mxu0 0.0
    %875 = vmatpush1.msra.mxu0 0.0
    %876 = vmatprep.subr.mxu0 0.0
    %877 = vmatpush1.msra.mxu0 0.0
    %878 = vmatprep.subr.mxu0 0.0
    %879 = vmatpush1.msra.mxu0 0.0
    %880 = vmatprep.subr.mxu0 0.0
    %881 = vmatpush1.msra.mxu0 0.0
    %882 = vmatprep.subr.mxu0 0.0
    %883 = vmatpush1.msra.mxu0 0.0
    %884 = vmatprep.subr.mxu0 0.0
    %885 = vmatpush1.msra.mxu0 0.0
    %886 = vmatprep.subr.mxu0 0.0
    %887 = vmatpush1.msra.mxu0 0.0
    %888 = vmatprep.subr.mxu0 0.0
    %889 = vmatpush1.msra.mxu0 0.0
    %890 = vmatprep.subr.mxu0 0.0
    %891 = vmatpush1.msra.mxu0 0.0
    %892 = vmatprep.subr.mxu0 0.0
    %893 = vmatpush1.msra.mxu0 0.0
    %894 = vmatprep.subr.mxu0 0.0
    %895 = vmatpush1.msra.mxu0 0.0
    %896 = vmatprep.subr.mxu0 0.0
    %897 = vmatpush1.msra.mxu0 0.0
    %898 = vmatprep.subr.mxu0 0.0
    %899 = vmatpush1.msra.mxu0 0.0
    %900 = vmatprep.subr.mxu0 0.0
    %901 = vmatpush1.msra.mxu0 0.0
    %902 = vmatprep.subr.mxu0 0.0
    %903 = vmatpush1.msra.mxu0 0.0
    %904 = vmatprep.subr.mxu0 0.0
    %905 = vmatpush1.msra.mxu0 0.0
    %906 = vmatprep.subr.mxu0 0.0
    %907 = vmatpush1.msra.mxu0 0.0
    %908 = vmatprep.subr.mxu0 0.0
    %909 = vmatpush1.msra.mxu0 0.0
    %910 = vmatprep.subr.mxu0 0.0
    %911 = vmatpush1.msra.mxu0 0.0
    %912 = vmatprep.subr.mxu0 0.0
    %913 = vmatpush1.msra.mxu0 0.0
    %914 = vmatprep.subr.mxu0 0.0
    %915 = vmatpush1.msra.mxu0 0.0
    %916 = vmatprep.subr.mxu0 0.0
    %917 = vmatpush1.msra.mxu0 0.0
    %918 = vmatprep.subr.mxu0 0.0
    %919 = vmatpush1.msra.mxu0 0.0
    %920 = vmatprep.subr.mxu0 0.0
    %921 = vmatpush1.msra.mxu0 0.0
    %922 = vmatprep.subr.mxu0 0.0
    %923 = vmatpush1.msra.mxu0 0.0
    %924 = vmatprep.subr.mxu0 0.0
    %925 = vmatpush1.msra.mxu0 0.0
    %926 = vmatprep.subr.mxu0 0.0
    %927 = vmatpush1.msra.mxu0 0.0
    %928 = vmatprep.mubr.f32.mxu0 0.0
    %929 = vmatmul.mubr.f32.gmra.mrb[0].mxu0 %v853
    %v930 = vpop.f32.mrb[0].mxu0
    %v931 = vadd.f32 0.0, %v930
    %v932 = vpop.f32.mrb[0].mxu0
    %933 = vmatprep.mubr.f32.mxu0 0.0
    %934 = vmatmul.mubr.f32.gmra.mrb[0].mxu0 %v856
    %v935 = vpop.f32.mrb[0].mxu0
    %v936 = vadd.f32 0.0, %v935
    %v937 = vpop.f32.mrb[0].mxu0
    %938 = vmatprep.mubr.f32.mxu0 0.0
    %939 = vmatmul.mubr.f32.gmra.mrb[0].mxu0 %v859
    %v940 = vpop.f32.mrb[0].mxu0
    %v941 = vadd.f32 0.0, %v940
    %v942 = vpop.f32.mrb[0].mxu0
    %943 = vmatprep.mubr.f32.mxu0 0.0
    %944 = vmatmul.mubr.f32.gmra.mrb[0].mxu0 %v862
    %v945 = vpop.f32.mrb[0].mxu0
    %v946 = vadd.f32 0.0, %v945
    %v947 = vpop.f32.mrb[0].mxu0
    %948 = vdwg.mxu0
    %v950 = vsel %vm408, %v931, 0
    %v953 = vsel %vm408, %v936, 0
    %v956 = vsel %vm408, %v941, 0
    %v959 = vsel %vm408, %v946, 0
    %961 = vmatprep.subr.mxu0 0.0
    %962 = vmatpush1.msra.mxu0 %v270
    %963 = vmatprep.subr.mxu0 0.0
    %964 = vmatpush1.msra.mxu0 0.0
    %965 = vmatprep.subr.mxu0 0.0
    %966 = vmatpush1.msra.mxu0 0.0
    %967 = vmatprep.subr.mxu0 0.0
    %968 = vmatpush1.msra.mxu0 0.0
    %969 = vmatprep.subr.mxu0 0.0
    %970 = vmatpush1.msra.mxu0 0.0
    %971 = vmatprep.subr.mxu0 0.0
    %972 = vmatpush1.msra.mxu0 0.0
    %973 = vmatprep.subr.mxu0 0.0
    %974 = vmatpush1.msra.mxu0 0.0
    %975 = vmatprep.subr.mxu0 0.0
    %976 = vmatpush1.msra.mxu0 0.0
    %977 = vmatprep.subr.mxu0 0.0
    %978 = vmatpush1.msra.mxu0 0.0
    %979 = vmatprep.subr.mxu0 0.0
    %980 = vmatpush1.msra.mxu0 0.0
    %981 = vmatprep.subr.mxu0 0.0
    %982 = vmatpush1.msra.mxu0 0.0
    %983 = vmatprep.subr.mxu0 0.0
    %984 = vmatpush1.msra.mxu0 0.0
    %985 = vmatprep.subr.mxu0 0.0
    %986 = vmatpush1.msra.mxu0 0.0
    %987 = vmatprep.subr.mxu0 0.0
    %988 = vmatpush1.msra.mxu0 0.0
    %989 = vmatprep.subr.mxu0 0.0
    %990 = vmatpush1.msra.mxu0 0.0
    %991 = vmatprep.subr.mxu0 0.0
    %992 = vmatpush1.msra.mxu0 0.0
    %993 = vmatprep.subr.mxu0 0.0
    %994 = vmatpush1.msra.mxu0 0.0
    %995 = vmatprep.subr.mxu0 0.0
    %996 = vmatpush1.msra.mxu0 0.0
    %997 = vmatprep.subr.mxu0 0.0
    %998 = vmatpush1.msra.mxu0 0.0
    %999 = vmatprep.subr.mxu0 0.0
    %1000 = vmatpush1.msra.mxu0 0.0
    %1001 = vmatprep.subr.mxu0 0.0
    %1002 = vmatpush1.msra.mxu0 0.0
    %1003 = vmatprep.subr.mxu0 0.0
    %1004 = vmatpush1.msra.mxu0 0.0
    %1005 = vmatprep.subr.mxu0 0.0
    %1006 = vmatpush1.msra.mxu0 0.0
    %1007 = vmatprep.subr.mxu0 0.0
    %1008 = vmatpush1.msra.mxu0 0.0
    %1009 = vmatprep.subr.mxu0 0.0
    %1010 = vmatpush1.msra.mxu0 0.0
    %1011 = vmatprep.subr.mxu0 0.0
    %1012 = vmatpush1.msra.mxu0 0.0
    %1013 = vmatprep.subr.mxu0 0.0
    %1014 = vmatpush1.msra.mxu0 0.0
    %1015 = vmatprep.subr.mxu0 0.0
    %1016 = vmatpush1.msra.mxu0 0.0
    %1017 = vmatprep.subr.mxu0 0.0
    %1018 = vmatpush1.msra.mxu0 0.0
    %1019 = vmatprep.subr.mxu0 0.0
    %1020 = vmatpush1.msra.mxu0 0.0
    %1021 = vmatprep.subr.mxu0 0.0
    %1022 = vmatpush1.msra.mxu0 0.0
    %1023 = vmatprep.subr.mxu0 0.0
    %1024 = vmatpush1.msra.mxu0 0.0
    %1025 = vmatprep.mubr.f32.mxu0 0.0
    %1026 = vmatmul.mubr.f32.gmra.mrb[0].mxu0 %v950
    %v1027 = vpop.f32.mrb[0].mxu0
    %v1028 = vadd.f32 0.0, %v1027
    %v1029 = vpop.f32.mrb[0].mxu0
    %1030 = vmatprep.mubr.f32.mxu0 0.0
    %1031 = vmatmul.mubr.f32.gmra.mrb[0].mxu0 %v953
    %v1032 = vpop.f32.mrb[0].mxu0
    %v1033 = vadd.f32 0.0, %v1032
    %v1034 = vpop.f32.mrb[0].mxu0
    %1035 = vmatprep.mubr.f32.mxu0 0.0
    %1036 = vmatmul.mubr.f32.gmra.mrb[0].mxu0 %v956
    %v1037 = vpop.f32.mrb[0].mxu0
    %v1038 = vadd.f32 0.0, %v1037
    %v1039 = vpop.f32.mrb[0].mxu0
    %1040 = vmatprep.mubr.f32.mxu0 0.0
    %1041 = vmatmul.mubr.f32.gmra.mrb[0].mxu0 %v959
    %v1042 = vpop.f32.mrb[0].mxu0
    %v1043 = vadd.f32 0.0, %v1042
    %v1044 = vpop.f32.mrb[0].mxu0
    %1045 = vdwg.mxu0
    %v1047 = vsel %vm408, %v657, 0
    %v1050 = vsel %vm408, %v662, 0
    %v1053 = vsel %vm408, %v667, 0
    %v1056 = vsel %vm408, %v672, 0
    %1058 = vmatprep.subr.mxu0 0.0
    %1059 = vmatpush1.msra.mxu0 %v269
    %1060 = vmatprep.subr.mxu0 0.0
    %1061 = vmatpush1.msra.mxu0 0.0
    %1062 = vmatprep.subr.mxu0 0.0
    %1063 = vmatpush1.msra.mxu0 0.0
    %1064 = vmatprep.subr.mxu0 0.0
    %1065 = vmatpush1.msra.mxu0 0.0
    %1066 = vmatprep.subr.mxu0 0.0
    %1067 = vmatpush1.msra.mxu0 0.0
    %1068 = vmatprep.subr.mxu0 0.0
    %1069 = vmatpush1.msra.mxu0 0.0
    %1070 = vmatprep.subr.mxu0 0.0
    %1071 = vmatpush1.msra.mxu0 0.0
    %1072 = vmatprep.subr.mxu0 0.0
    %1073 = vmatpush1.msra.mxu0 0.0
    %1074 = vmatprep.subr.mxu0 0.0
    %1075 = vmatpush1.msra.mxu0 0.0
    %1076 = vmatprep.subr.mxu0 0.0
    %1077 = vmatpush1.msra.mxu0 0.0
    %1078 = vmatprep.subr.mxu0 0.0
    %1079 = vmatpush1.msra.mxu0 0.0
    %1080 = vmatprep.subr.mxu0 0.0
    %1081 = vmatpush1.msra.mxu0 0.0
    %1082 = vmatprep.subr.mxu0 0.0
    %1083 = vmatpush1.msra.mxu0 0.0
    %1084 = vmatprep.subr.mxu0 0.0
    %1085 = vmatpush1.msra.mxu0 0.0
    %1086 = vmatprep.subr.mxu0 0.0
    %1087 = vmatpush1.msra.mxu0 0.0
    %1088 = vmatprep.subr.mxu0 0.0
    %1089 = vmatpush1.msra.mxu0 0.0
    %1090 = vmatprep.subr.mxu0 0.0
    %1091 = vmatpush1.msra.mxu0 0.0
    %1092 = vmatprep.subr.mxu0 0.0
    %1093 = vmatpush1.msra.mxu0 0.0
    %1094 = vmatprep.subr.mxu0 0.0
    %1095 = vmatpush1.msra.mxu0 0.0
    %1096 = vmatprep.subr.mxu0 0.0
    %1097 = vmatpush1.msra.mxu0 0.0
    %1098 = vmatprep.subr.mxu0 0.0
    %1099 = vmatpush1.msra.mxu0 0.0
    %1100 = vmatprep.subr.mxu0 0.0
    %1101 = vmatpush1.msra.mxu0 0.0
    %1102 = vmatprep.subr.mxu0 0.0
    %1103 = vmatpush1.msra.mxu0 0.0
    %1104 = vmatprep.subr.mxu0 0.0
    %1105 = vmatpush1.msra.mxu0 0.0
    %1106 = vmatprep.subr.mxu0 0.0
    %1107 = vmatpush1.msra.mxu0 0.0
    %1108 = vmatprep.subr.mxu0 0.0
    %1109 = vmatpush1.msra.mxu0 0.0
    %1110 = vmatprep.subr.mxu0 0.0
    %1111 = vmatpush1.msra.mxu0 0.0
    %1112 = vmatprep.subr.mxu0 0.0
    %1113 = vmatpush1.msra.mxu0 0.0
    %1114 = vmatprep.subr.mxu0 0.0
    %1115 = vmatpush1.msra.mxu0 0.0
    %1116 = vmatprep.subr.mxu0 0.0
    %1117 = vmatpush1.msra.mxu0 0.0
    %1118 = vmatprep.subr.mxu0 0.0
    %1119 = vmatpush1.msra.mxu0 0.0
    %1120 = vmatprep.subr.mxu0 0.0
    %1121 = vmatpush1.msra.mxu0 0.0
    %1122 = vmatprep.mubr.f32.mxu0 0.0
    %1123 = vmatmul.mubr.f32.gmra.mrb[0].mxu0 %v1047
    %v1124 = vpop.f32.mrb[0].mxu0
    %v1125 = vadd.f32 %v1028, %v1124
    %v1126 = vpop.f32.mrb[0].mxu0
    %1127 = vmatprep.mubr.f32.mxu0 0.0
    %1128 = vmatmul.mubr.f32.gmra.mrb[0].mxu0 %v1050
    %v1129 = vpop.f32.mrb[0].mxu0
    %v1130 = vadd.f32 %v1033, %v1129
    %v1131 = vpop.f32.mrb[0].mxu0
    %1132 = vmatprep.mubr.f32.mxu0 0.0
    %1133 = vmatmul.mubr.f32.gmra.mrb[0].mxu0 %v1053
    %v1134 = vpop.f32.mrb[0].mxu0
    %v1135 = vadd.f32 %v1038, %v1134
    %v1136 = vpop.f32.mrb[0].mxu0
    %1137 = vmatprep.mubr.f32.mxu0 0.0
    %1138 = vmatmul.mubr.f32.gmra.mrb[0].mxu0 %v1056
    %v1139 = vpop.f32.mrb[0].mxu0
    %v1140 = vadd.f32 %v1043, %v1139
    %v1141 = vpop.f32.mrb[0].mxu0
    %1142 = vdwg.mxu0
    %1143 = vrot.lane.b32.xlu0 %v226, 112
    %v1144 = vpop.permute.xlu0 %1143
    %1145 = vrot.lane.b32.xlu0 %v231, 112
    %v1146 = vpop.permute.xlu0 %1145
    %1147 = vrot.lane.b32.xlu0 %v236, 112
    %v1148 = vpop.permute.xlu0 %1147
    %1149 = vrot.lane.b32.xlu0 %v241, 112
    %v1150 = vpop.permute.xlu0 %1149
    %1151 = vrot.lane.b32.xlu0 %v390, 112
    %v1152 = vpop.permute.xlu0 %1151
    %1153 = vrot.lane.b32.xlu0 %v395, 112
    %v1154 = vpop.permute.xlu0 %1153
    %1155 = vrot.lane.b32.xlu0 %v400, 112
    %v1156 = vpop.permute.xlu0 %1155
    %1157 = vrot.lane.b32.xlu0 %v405, 112
    %v1158 = vpop.permute.xlu0 %1157
    %v1159 = vsel %vm408, %v1144, 0
    %v1161 = vsel %vm408, %v1146, 0
    %v1163 = vsel %vm408, %v1148, 0
    %v1165 = vsel %vm408, %v1150, 0
    %v1167 = vsel %vm408, %v1152, 0
    %v1169 = vsel %vm408, %v1154, 0
    %v1171 = vsel %vm408, %v1156, 0
    %v1173 = vsel %vm408, %v1158, 0
    %1175 = vmatprep.subr.mxu0 0.0
    %1176 = vmatpush1.xpose.msra.mxu0 %v1167
    %1177 = vmatprep.subr.mxu0 0.0
    %1178 = vmatpush1.xpose.msra.mxu0 %v1169
    %1179 = vmatprep.subr.mxu0 0.0
    %1180 = vmatpush1.xpose.msra.mxu0 %v1171
    %1181 = vmatprep.subr.mxu0 0.0
    %1182 = vmatpush1.xpose.msra.mxu0 %v1173
    %1183 = vmatprep.subr.mxu0 0.0
    %1184 = vmatpush1.xpose.msra.mxu0 0.0
    %1185 = vmatprep.subr.mxu0 0.0
    %1186 = vmatpush1.xpose.msra.mxu0 0.0
    %1187 = vmatprep.subr.mxu0 0.0
    %1188 = vmatpush1.xpose.msra.mxu0 0.0
    %1189 = vmatprep.subr.mxu0 0.0
    %1190 = vmatpush1.xpose.msra.mxu0 0.0
    %1191 = vmatprep.subr.mxu0 0.0
    %1192 = vmatpush1.xpose.msra.mxu0 0.0
    %1193 = vmatprep.subr.mxu0 0.0
    %1194 = vmatpush1.xpose.msra.mxu0 0.0
    %1195 = vmatprep.subr.mxu0 0.0
    %1196 = vmatpush1.xpose.msra.mxu0 0.0
    %1197 = vmatprep.subr.mxu0 0.0
    %1198 = vmatpush1.xpose.msra.mxu0 0.0
    %1199 = vmatprep.subr.mxu0 0.0
    %1200 = vmatpush1.xpose.msra.mxu0 0.0
    %1201 = vmatprep.subr.mxu0 0.0
    %1202 = vmatpush1.xpose.msra.mxu0 0.0
    %1203 = vmatprep.subr.mxu0 0.0
    %1204 = vmatpush1.xpose.msra.mxu0 0.0
    %1205 = vmatprep.subr.mxu0 0.0
    %1206 = vmatpush1.xpose.msra.mxu0 0.0
    %1207 = vmatprep.subr.mxu0 0.0
    %1208 = vmatpush1.xpose.msra.mxu0 0.0
    %1209 = vmatprep.subr.mxu0 0.0
    %1210 = vmatpush1.xpose.msra.mxu0 0.0
    %1211 = vmatprep.subr.mxu0 0.0
    %1212 = vmatpush1.xpose.msra.mxu0 0.0
    %1213 = vmatprep.subr.mxu0 0.0
    %1214 = vmatpush1.xpose.msra.mxu0 0.0
    %1215 = vmatprep.subr.mxu0 0.0
    %1216 = vmatpush1.xpose.msra.mxu0 0.0
    %1217 = vmatprep.subr.mxu0 0.0
    %1218 = vmatpush1.xpose.msra.mxu0 0.0
    %1219 = vmatprep.subr.mxu0 0.0
    %1220 = vmatpush1.xpose.msra.mxu0 0.0
    %1221 = vmatprep.subr.mxu0 0.0
    %1222 = vmatpush1.xpose.msra.mxu0 0.0
    %1223 = vmatprep.subr.mxu0 0.0
    %1224 = vmatpush1.xpose.msra.mxu0 0.0
    %1225 = vmatprep.subr.mxu0 0.0
    %1226 = vmatpush1.xpose.msra.mxu0 0.0
    %1227 = vmatprep.subr.mxu0 0.0
    %1228 = vmatpush1.xpose.msra.mxu0 0.0
    %1229 = vmatprep.subr.mxu0 0.0
    %1230 = vmatpush1.xpose.msra.mxu0 0.0
    %1231 = vmatprep.subr.mxu0 0.0
    %1232 = vmatpush1.xpose.msra.mxu0 0.0
    %1233 = vmatprep.subr.mxu0 0.0
    %1234 = vmatpush1.xpose.msra.mxu0 0.0
    %1235 = vmatprep.subr.mxu0 0.0
    %1236 = vmatpush1.xpose.msra.mxu0 0.0
    %1237 = vmatprep.subr.mxu0 0.0
    %1238 = vmatpush1.xpose.msra.mxu0 0.0
    %1239 = vmatprep.mubr.f32.mxu0 0.0
    %1240 = vmatmul.mubr.f32.gmra.mrb[0].mxu0 %v1159
    %v1241 = vpop.f32.mrb[0].mxu0
    %v1242 = vadd.f32 0.0, %v1241
    %v1243 = vpop.f32.mrb[0].mxu0
    %1244 = vmatprep.mubr.f32.mxu0 0.0
    %1245 = vmatmul.mubr.f32.gmra.mrb[0].mxu0 %v1161
    %v1246 = vpop.f32.mrb[0].mxu0
    %v1247 = vadd.f32 0.0, %v1246
    %v1248 = vpop.f32.mrb[0].mxu0
    %1249 = vmatprep.mubr.f32.mxu0 0.0
    %1250 = vmatmul.mubr.f32.gmra.mrb[0].mxu0 %v1163
    %v1251 = vpop.f32.mrb[0].mxu0
    %v1252 = vadd.f32 0.0, %v1251
    %v1253 = vpop.f32.mrb[0].mxu0
    %1254 = vmatprep.mubr.f32.mxu0 0.0
    %1255 = vmatmul.mubr.f32.gmra.mrb[0].mxu0 %v1165
    %v1256 = vpop.f32.mrb[0].mxu0
    %v1257 = vadd.f32 0.0, %v1256
    %v1258 = vpop.f32.mrb[0].mxu0
    %1259 = vdwg.mxu0
    %v1260 = vmul.f32 %v1242, 0.35355338
    %v1261 = vmul.f32 %v1247, 0.35355338
    %v1262 = vmul.f32 %v1252, 0.35355338
    %v1263 = vmul.f32 %v1257, 0.35355338
    %v1264 = vsel %vm134, %v1260, -inf
    %1265 = vmax.xlane.f32.xlu0 %v1264
    %v1266 = vpop.xlane.xlu0 %1265
    %v1267 = vsel %vm134, %v1261, -inf
    %1268 = vmax.xlane.f32.xlu0 %v1267
    %v1269 = vpop.xlane.xlu0 %1268
    %v1270 = vsel %vm134, %v1262, -inf
    %1271 = vmax.xlane.f32.xlu0 %v1270
    %v1272 = vpop.xlane.xlu0 %1271
    %v1273 = vsel %vm134, %v1263, -inf
    %1274 = vmax.xlane.f32.xlu0 %v1273
    %v1275 = vpop.xlane.xlu0 %1274
    %v1276 = vsub.f32 %v1260, %v1266
    %v1277 = vsub.f32 %v1261, %v1269
    %v1278 = vsub.f32 %v1262, %v1272
    %v1279 = vsub.f32 %v1263, %v1275
    %v1280 = vmul.f32 %v1276, 1.442695
    %v1281 = vpow.pop %v1280
    %v1282 = vmul.f32 %v1277, 1.442695
    %v1283 = vpow.pop %v1282
    %v1284 = vmul.f32 %v1278, 1.442695
    %v1285 = vpow.pop %v1284
    %v1286 = vmul.f32 %v1279, 1.442695
    %v1287 = vpow.pop %v1286
    %v1288 = vsel %vm134, %v1281, 0.0
    %1289 = vadd.xlane.f32.xlu0 %v1288
    %v1290 = vpop.xlane.xlu0 %1289
    %v1291 = vsel %vm134, %v1283, 0.0
    %1292 = vadd.xlane.f32.xlu0 %v1291
    %v1293 = vpop.xlane.xlu0 %1292
    %v1294 = vsel %vm134, %v1285, 0.0
    %1295 = vadd.xlane.f32.xlu0 %v1294
    %v1296 = vpop.xlane.xlu0 %1295
    %v1297 = vsel %vm134, %v1287, 0.0
    %1298 = vadd.xlane.f32.xlu0 %v1297
    %v1299 = vpop.xlane.xlu0 %1298
    %v1300 = vrcp.pop %v1290
    %v1301 = vrcp.pop %v1293
    %v1302 = vrcp.pop %v1296
    %v1303 = vrcp.pop %v1299
    %v1304 = vmul.f32 %v1281, %v1300
    %v1305 = vmul.f32 %v1283, %v1301
    %v1306 = vmul.f32 %v1285, %v1302
    %v1307 = vmul.f32 %v1287, %v1303
    %1308 = vrot.lane.b32.xlu0 %v226, 80
    %v1309 = vpop.permute.xlu0 %1308
    %1310 = vrot.lane.b32.xlu0 %v231, 80
    %v1311 = vpop.permute.xlu0 %1310
    %1312 = vrot.lane.b32.xlu0 %v236, 80
    %v1313 = vpop.permute.xlu0 %1312
    %1314 = vrot.lane.b32.xlu0 %v241, 80
    %v1315 = vpop.permute.xlu0 %1314
    %v1321 = vsel %vm134, %v1304, 0
    %v1324 = vsel %vm134, %v1305, 0
    %v1327 = vsel %vm134, %v1306, 0
    %v1330 = vsel %vm134, %v1307, 0
    %1332 = vmatprep.subr.mxu0 0.0
    %1333 = vmatpush1.msra.mxu0 %v1309
    %1334 = vmatprep.subr.mxu0 0.0
    %1335 = vmatpush1.msra.mxu0 %v1311
    %1336 = vmatprep.subr.mxu0 0.0
    %1337 = vmatpush1.msra.mxu0 %v1313
    %1338 = vmatprep.subr.mxu0 0.0
    %1339 = vmatpush1.msra.mxu0 %v1315
    %1340 = vmatprep.subr.mxu0 0.0
    %1341 = vmatpush1.msra.mxu0 0.0
    %1342 = vmatprep.subr.mxu0 0.0
    %1343 = vmatpush1.msra.mxu0 0.0
    %1344 = vmatprep.subr.mxu0 0.0
    %1345 = vmatpush1.msra.mxu0 0.0
    %1346 = vmatprep.subr.mxu0 0.0
    %1347 = vmatpush1.msra.mxu0 0.0
    %1348 = vmatprep.subr.mxu0 0.0
    %1349 = vmatpush1.msra.mxu0 0.0
    %1350 = vmatprep.subr.mxu0 0.0
    %1351 = vmatpush1.msra.mxu0 0.0
    %1352 = vmatprep.subr.mxu0 0.0
    %1353 = vmatpush1.msra.mxu0 0.0
    %1354 = vmatprep.subr.mxu0 0.0
    %1355 = vmatpush1.msra.mxu0 0.0
    %1356 = vmatprep.subr.mxu0 0.0
    %1357 = vmatpush1.msra.mxu0 0.0
    %1358 = vmatprep.subr.mxu0 0.0
    %1359 = vmatpush1.msra.mxu0 0.0
    %1360 = vmatprep.subr.mxu0 0.0
    %1361 = vmatpush1.msra.mxu0 0.0
    %1362 = vmatprep.subr.mxu0 0.0
    %1363 = vmatpush1.msra.mxu0 0.0
    %1364 = vmatprep.subr.mxu0 0.0
    %1365 = vmatpush1.msra.mxu0 0.0
    %1366 = vmatprep.subr.mxu0 0.0
    %1367 = vmatpush1.msra.mxu0 0.0
    %1368 = vmatprep.subr.mxu0 0.0
    %1369 = vmatpush1.msra.mxu0 0.0
    %1370 = vmatprep.subr.mxu0 0.0
    %1371 = vmatpush1.msra.mxu0 0.0
    %1372 = vmatprep.subr.mxu0 0.0
    %1373 = vmatpush1.msra.mxu0 0.0
    %1374 = vmatprep.subr.mxu0 0.0
    %1375 = vmatpush1.msra.mxu0 0.0
    %1376 = vmatprep.subr.mxu0 0.0
    %1377 = vmatpush1.msra.mxu0 0.0
    %1378 = vmatprep.subr.mxu0 0.0
    %1379 = vmatpush1.msra.mxu0 0.0
    %1380 = vmatprep.subr.mxu0 0.0
    %1381 = vmatpush1.msra.mxu0 0.0
    %1382 = vmatprep.subr.mxu0 0.0
    %1383 = vmatpush1.msra.mxu0 0.0
    %1384 = vmatprep.subr.mxu0 0.0
    %1385 = vmatpush1.msra.mxu0 0.0
    %1386 = vmatprep.subr.mxu0 0.0
    %1387 = vmatpush1.msra.mxu0 0.0
    %1388 = vmatprep.subr.mxu0 0.0
    %1389 = vmatpush1.msra.mxu0 0.0
    %1390 = vmatprep.subr.mxu0 0.0
    %1391 = vmatpush1.msra.mxu0 0.0
    %1392 = vmatprep.subr.mxu0 0.0
    %1393 = vmatpush1.msra.mxu0 0.0
    %1394 = vmatprep.subr.mxu0 0.0
    %1395 = vmatpush1.msra.mxu0 0.0
    %1396 = vmatprep.mubr.f32.mxu0 0.0
    %1397 = vmatmul.mubr.f32.gmra.mrb[0].mxu0 %v1321
    %v1398 = vpop.f32.mrb[0].mxu0
    %v1399 = vadd.f32 0.0, %v1398
    %v1400 = vpop.f32.mrb[0].mxu0
    %1401 = vmatprep.mubr.f32.mxu0 0.0
    %1402 = vmatmul.mubr.f32.gmra.mrb[0].mxu0 %v1324
    %v1403 = vpop.f32.mrb[0].mxu0
    %v1404 = vadd.f32 0.0, %v1403
    %v1405 = vpop.f32.mrb[0].mxu0
    %1406 = vmatprep.mubr.f32.mxu0 0.0
    %1407 = vmatmul.mubr.f32.gmra.mrb[0].mxu0 %v1327
    %v1408 = vpop.f32.mrb[0].mxu0
    %v1409 = vadd.f32 0.0, %v1408
    %v1410 = vpop.f32.mrb[0].mxu0
    %1411 = vmatprep.mubr.f32.mxu0 0.0
    %1412 = vmatmul.mubr.f32.gmra.mrb[0].mxu0 %v1330
    %v1413 = vpop.f32.mrb[0].mxu0
    %v1414 = vadd.f32 0.0, %v1413
    %v1415 = vpop.f32.mrb[0].mxu0
    %1416 = vdwg.mxu0
    %v1418 = vsel %vm408, %v1399, 0
    %v1421 = vsel %vm408, %v1404, 0
    %v1424 = vsel %vm408, %v1409, 0
    %v1427 = vsel %vm408, %v1414, 0
    %1429 = vmatprep.subr.mxu0 0.0
    %1430 = vmatpush1.msra.mxu0 %v271
    %1431 = vmatprep.subr.mxu0 0.0
    %1432 = vmatpush1.msra.mxu0 0.0
    %1433 = vmatprep.subr.mxu0 0.0
    %1434 = vmatpush1.msra.mxu0 0.0
    %1435 = vmatprep.subr.mxu0 0.0
    %1436 = vmatpush1.msra.mxu0 0.0
    %1437 = vmatprep.subr.mxu0 0.0
    %1438 = vmatpush1.msra.mxu0 0.0
    %1439 = vmatprep.subr.mxu0 0.0
    %1440 = vmatpush1.msra.mxu0 0.0
    %1441 = vmatprep.subr.mxu0 0.0
    %1442 = vmatpush1.msra.mxu0 0.0
    %1443 = vmatprep.subr.mxu0 0.0
    %1444 = vmatpush1.msra.mxu0 0.0
    %1445 = vmatprep.subr.mxu0 0.0
    %1446 = vmatpush1.msra.mxu0 0.0
    %1447 = vmatprep.subr.mxu0 0.0
    %1448 = vmatpush1.msra.mxu0 0.0
    %1449 = vmatprep.subr.mxu0 0.0
    %1450 = vmatpush1.msra.mxu0 0.0
    %1451 = vmatprep.subr.mxu0 0.0
    %1452 = vmatpush1.msra.mxu0 0.0
    %1453 = vmatprep.subr.mxu0 0.0
    %1454 = vmatpush1.msra.mxu0 0.0
    %1455 = vmatprep.subr.mxu0 0.0
    %1456 = vmatpush1.msra.mxu0 0.0
    %1457 = vmatprep.subr.mxu0 0.0
    %1458 = vmatpush1.msra.mxu0 0.0
    %1459 = vmatprep.subr.mxu0 0.0
    %1460 = vmatpush1.msra.mxu0 0.0
    %1461 = vmatprep.subr.mxu0 0.0
    %1462 = vmatpush1.msra.mxu0 0.0
    %1463 = vmatprep.subr.mxu0 0.0
    %1464 = vmatpush1.msra.mxu0 0.0
    %1465 = vmatprep.subr.mxu0 0.0
    %1466 = vmatpush1.msra.mxu0 0.0
    %1467 = vmatprep.subr.mxu0 0.0
    %1468 = vmatpush1.msra.mxu0 0.0
    %1469 = vmatprep.subr.mxu0 0.0
    %1470 = vmatpush1.msra.mxu0 0.0
    %1471 = vmatprep.subr.mxu0 0.0
    %1472 = vmatpush1.msra.mxu0 0.0
    %1473 = vmatprep.subr.mxu0 0.0
    %1474 = vmatpush1.msra.mxu0 0.0
    %1475 = vmatprep.subr.mxu0 0.0
    %1476 = vmatpush1.msra.mxu0 0.0
    %1477 = vmatprep.subr.mxu0 0.0
    %1478 = vmatpush1.msra.mxu0 0.0
    %1479 = vmatprep.subr.mxu0 0.0
    %1480 = vmatpush1.msra.mxu0 0.0
    %1481 = vmatprep.subr.mxu0 0.0
    %1482 = vmatpush1.msra.mxu0 0.0
    %1483 = vmatprep.subr.mxu0 0.0
    %1484 = vmatpush1.msra.mxu0 0.0
    %1485 = vmatprep.subr.mxu0 0.0
    %1486 = vmatpush1.msra.mxu0 0.0
    %1487 = vmatprep.subr.mxu0 0.0
    %1488 = vmatpush1.msra.mxu0 0.0
    %1489 = vmatprep.subr.mxu0 0.0
    %1490 = vmatpush1.msra.mxu0 0.0
    %1491 = vmatprep.subr.mxu0 0.0
    %1492 = vmatpush1.msra.mxu0 0.0
    %1493 = vmatprep.mubr.f32.mxu0 0.0
    %1494 = vmatmul.mubr.f32.gmra.mrb[0].mxu0 %v1418
    %v1495 = vpop.f32.mrb[0].mxu0
    %v1496 = vadd.f32 0.0, %v1495
    %v1497 = vpop.f32.mrb[0].mxu0
    %1498 = vmatprep.mubr.f32.mxu0 0.0
    %1499 = vmatmul.mubr.f32.gmra.mrb[0].mxu0 %v1421
    %v1500 = vpop.f32.mrb[0].mxu0
    %v1501 = vadd.f32 0.0, %v1500
    %v1502 = vpop.f32.mrb[0].mxu0
    %1503 = vmatprep.mubr.f32.mxu0 0.0
    %1504 = vmatmul.mubr.f32.gmra.mrb[0].mxu0 %v1424
    %v1505 = vpop.f32.mrb[0].mxu0
    %v1506 = vadd.f32 0.0, %v1505
    %v1507 = vpop.f32.mrb[0].mxu0
    %1508 = vmatprep.mubr.f32.mxu0 0.0
    %1509 = vmatmul.mubr.f32.gmra.mrb[0].mxu0 %v1427
    %v1510 = vpop.f32.mrb[0].mxu0
    %v1511 = vadd.f32 0.0, %v1510
    %v1512 = vpop.f32.mrb[0].mxu0
    %1513 = vdwg.mxu0
    %v1514 = vadd.f32 %v1125, %v1496
    %v1515 = vadd.f32 %v1130, %v1501
    %v1516 = vadd.f32 %v1135, %v1506
    %v1517 = vadd.f32 %v1140, %v1511
    %1518 = vrot.lane.b32.xlu0 %v226, 104
    %v1519 = vpop.permute.xlu0 %1518
    %1520 = vrot.lane.b32.xlu0 %v231, 104
    %v1521 = vpop.permute.xlu0 %1520
    %1522 = vrot.lane.b32.xlu0 %v236, 104
    %v1523 = vpop.permute.xlu0 %1522
    %1524 = vrot.lane.b32.xlu0 %v241, 104
    %v1525 = vpop.permute.xlu0 %1524
    %1526 = vrot.lane.b32.xlu0 %v390, 104
    %v1527 = vpop.permute.xlu0 %1526
    %1528 = vrot.lane.b32.xlu0 %v395, 104
    %v1529 = vpop.permute.xlu0 %1528
    %1530 = vrot.lane.b32.xlu0 %v400, 104
    %v1531 = vpop.permute.xlu0 %1530
    %1532 = vrot.lane.b32.xlu0 %v405, 104
    %v1533 = vpop.permute.xlu0 %1532
    %v1534 = vsel %vm408, %v1519, 0
    %v1536 = vsel %vm408, %v1521, 0
    %v1538 = vsel %vm408, %v1523, 0
    %v1540 = vsel %vm408, %v1525, 0
    %v1542 = vsel %vm408, %v1527, 0
    %v1544 = vsel %vm408, %v1529, 0
    %v1546 = vsel %vm408, %v1531, 0
    %v1548 = vsel %vm408, %v1533, 0
    %1550 = vmatprep.subr.mxu0 0.0
    %1551 = vmatpush1.xpose.msra.mxu0 %v1542
    %1552 = vmatprep.subr.mxu0 0.0
    %1553 = vmatpush1.xpose.msra.mxu0 %v1544
    %1554 = vmatprep.subr.mxu0 0.0
    %1555 = vmatpush1.xpose.msra.mxu0 %v1546
    %1556 = vmatprep.subr.mxu0 0.0
    %1557 = vmatpush1.xpose.msra.mxu0 %v1548
    %1558 = vmatprep.subr.mxu0 0.0
    %1559 = vmatpush1.xpose.msra.mxu0 0.0
    %1560 = vmatprep.subr.mxu0 0.0
    %1561 = vmatpush1.xpose.msra.mxu0 0.0
    %1562 = vmatprep.subr.mxu0 0.0
    %1563 = vmatpush1.xpose.msra.mxu0 0.0
    %1564 = vmatprep.subr.mxu0 0.0
    %1565 = vmatpush1.xpose.msra.mxu0 0.0
    %1566 = vmatprep.subr.mxu0 0.0
    %1567 = vmatpush1.xpose.msra.mxu0 0.0
    %1568 = vmatprep.subr.mxu0 0.0
    %1569 = vmatpush1.xpose.msra.mxu0 0.0
    %1570 = vmatprep.subr.mxu0 0.0
    %1571 = vmatpush1.xpose.msra.mxu0 0.0
    %1572 = vmatprep.subr.mxu0 0.0
    %1573 = vmatpush1.xpose.msra.mxu0 0.0
    %1574 = vmatprep.subr.mxu0 0.0
    %1575 = vmatpush1.xpose.msra.mxu0 0.0
    %1576 = vmatprep.subr.mxu0 0.0
    %1577 = vmatpush1.xpose.msra.mxu0 0.0
    %1578 = vmatprep.subr.mxu0 0.0
    %1579 = vmatpush1.xpose.msra.mxu0 0.0
    %1580 = vmatprep.subr.mxu0 0.0
    %1581 = vmatpush1.xpose.msra.mxu0 0.0
    %1582 = vmatprep.subr.mxu0 0.0
    %1583 = vmatpush1.xpose.msra.mxu0 0.0
    %1584 = vmatprep.subr.mxu0 0.0
    %1585 = vmatpush1.xpose.msra.mxu0 0.0
    %1586 = vmatprep.subr.mxu0 0.0
    %1587 = vmatpush1.xpose.msra.mxu0 0.0
    %1588 = vmatprep.subr.mxu0 0.0
    %1589 = vmatpush1.xpose.msra.mxu0 0.0
    %1590 = vmatprep.subr.mxu0 0.0
    %1591 = vmatpush1.xpose.msra.mxu0 0.0
    %1592 = vmatprep.subr.mxu0 0.0
    %1593 = vmatpush1.xpose.msra.mxu0 0.0
    %1594 = vmatprep.subr.mxu0 0.0
    %1595 = vmatpush1.xpose.msra.mxu0 0.0
    %1596 = vmatprep.subr.mxu0 0.0
    %1597 = vmatpush1.xpose.msra.mxu0 0.0
    %1598 = vmatprep.subr.mxu0 0.0
    %1599 = vmatpush1.xpose.msra.mxu0 0.0
    %1600 = vmatprep.subr.mxu0 0.0
    %1601 = vmatpush1.xpose.msra.mxu0 0.0
    %1602 = vmatprep.subr.mxu0 0.0
    %1603 = vmatpush1.xpose.msra.mxu0 0.0
    %1604 = vmatprep.subr.mxu0 0.0
    %1605 = vmatpush1.xpose.msra.mxu0 0.0
    %1606 = vmatprep.subr.mxu0 0.0
    %1607 = vmatpush1.xpose.msra.mxu0 0.0
    %1608 = vmatprep.subr.mxu0 0.0
    %1609 = vmatpush1.xpose.msra.mxu0 0.0
    %1610 = vmatprep.subr.mxu0 0.0
    %1611 = vmatpush1.xpose.msra.mxu0 0.0
    %1612 = vmatprep.subr.mxu0 0.0
    %1613 = vmatpush1.xpose.msra.mxu0 0.0
    %1614 = vmatprep.mubr.f32.mxu0 0.0
    %1615 = vmatmul.mubr.f32.gmra.mrb[0].mxu0 %v1534
    %v1616 = vpop.f32.mrb[0].mxu0
    %v1617 = vadd.f32 0.0, %v1616
    %v1618 = vpop.f32.mrb[0].mxu0
    %1619 = vmatprep.mubr.f32.mxu0 0.0
    %1620 = vmatmul.mubr.f32.gmra.mrb[0].mxu0 %v1536
    %v1621 = vpop.f32.mrb[0].mxu0
    %v1622 = vadd.f32 0.0, %v1621
    %v1623 = vpop.f32.mrb[0].mxu0
    %1624 = vmatprep.mubr.f32.mxu0 0.0
    %1625 = vmatmul.mubr.f32.gmra.mrb[0].mxu0 %v1538
    %v1626 = vpop.f32.mrb[0].mxu0
    %v1627 = vadd.f32 0.0, %v1626
    %v1628 = vpop.f32.mrb[0].mxu0
    %1629 = vmatprep.mubr.f32.mxu0 0.0
    %1630 = vmatmul.mubr.f32.gmra.mrb[0].mxu0 %v1540
    %v1631 = vpop.f32.mrb[0].mxu0
    %v1632 = vadd.f32 0.0, %v1631
    %v1633 = vpop.f32.mrb[0].mxu0
    %1634 = vdwg.mxu0
    %v1635 = vmul.f32 %v1617, 0.35355338
    %v1636 = vmul.f32 %v1622, 0.35355338
    %v1637 = vmul.f32 %v1627, 0.35355338
    %v1638 = vmul.f32 %v1632, 0.35355338
    %v1639 = vsel %vm134, %v1635, -inf
    %1640 = vmax.xlane.f32.xlu0 %v1639
    %v1641 = vpop.xlane.xlu0 %1640
    %v1642 = vsel %vm134, %v1636, -inf
    %1643 = vmax.xlane.f32.xlu0 %v1642
    %v1644 = vpop.xlane.xlu0 %1643
    %v1645 = vsel %vm134, %v1637, -inf
    %1646 = vmax.xlane.f32.xlu0 %v1645
    %v1647 = vpop.xlane.xlu0 %1646
    %v1648 = vsel %vm134, %v1638, -inf
    %1649 = vmax.xlane.f32.xlu0 %v1648
    %v1650 = vpop.xlane.xlu0 %1649
    %v1651 = vsub.f32 %v1635, %v1641
    %v1652 = vsub.f32 %v1636, %v1644
    %v1653 = vsub.f32 %v1637, %v1647
    %v1654 = vsub.f32 %v1638, %v1650
    %v1655 = vmul.f32 %v1651, 1.442695
    %v1656 = vpow.pop %v1655
    %v1657 = vmul.f32 %v1652, 1.442695
    %v1658 = vpow.pop %v1657
    %v1659 = vmul.f32 %v1653, 1.442695
    %v1660 = vpow.pop %v1659
    %v1661 = vmul.f32 %v1654, 1.442695
    %v1662 = vpow.pop %v1661
    %v1663 = vsel %vm134, %v1656, 0.0
    %1664 = vadd.xlane.f32.xlu0 %v1663
    %v1665 = vpop.xlane.xlu0 %1664
    %v1666 = vsel %vm134, %v1658, 0.0
    %1667 = vadd.xlane.f32.xlu0 %v1666
    %v1668 = vpop.xlane.xlu0 %1667
    %v1669 = vsel %vm134, %v1660, 0.0
    %1670 = vadd.xlane.f32.xlu0 %v1669
    %v1671 = vpop.xlane.xlu0 %1670
    %v1672 = vsel %vm134, %v1662, 0.0
    %1673 = vadd.xlane.f32.xlu0 %v1672
    %v1674 = vpop.xlane.xlu0 %1673
    %v1675 = vrcp.pop %v1665
    %v1676 = vrcp.pop %v1668
    %v1677 = vrcp.pop %v1671
    %v1678 = vrcp.pop %v1674
    %v1679 = vmul.f32 %v1656, %v1675
    %v1680 = vmul.f32 %v1658, %v1676
    %v1681 = vmul.f32 %v1660, %v1677
    %v1682 = vmul.f32 %v1662, %v1678
    %1683 = vrot.lane.b32.xlu0 %v226, 72
    %v1684 = vpop.permute.xlu0 %1683
    %1685 = vrot.lane.b32.xlu0 %v231, 72
    %v1686 = vpop.permute.xlu0 %1685
    %1687 = vrot.lane.b32.xlu0 %v236, 72
    %v1688 = vpop.permute.xlu0 %1687
    %1689 = vrot.lane.b32.xlu0 %v241, 72
    %v1690 = vpop.permute.xlu0 %1689
    %v1696 = vsel %vm134, %v1679, 0
    %v1699 = vsel %vm134, %v1680, 0
    %v1702 = vsel %vm134, %v1681, 0
    %v1705 = vsel %vm134, %v1682, 0
    %1707 = vmatprep.subr.mxu0 0.0
    %1708 = vmatpush1.msra.mxu0 %v1684
    %1709 = vmatprep.subr.mxu0 0.0
    %1710 = vmatpush1.msra.mxu0 %v1686
    %1711 = vmatprep.subr.mxu0 0.0
    %1712 = vmatpush1.msra.mxu0 %v1688
    %1713 = vmatprep.subr.mxu0 0.0
    %1714 = vmatpush1.msra.mxu0 %v1690
    %1715 = vmatprep.subr.mxu0 0.0
    %1716 = vmatpush1.msra.mxu0 0.0
    %1717 = vmatprep.subr.mxu0 0.0
    %1718 = vmatpush1.msra.mxu0 0.0
    %1719 = vmatprep.subr.mxu0 0.0
    %1720 = vmatpush1.msra.mxu0 0.0
    %1721 = vmatprep.subr.mxu0 0.0
    %1722 = vmatpush1.msra.mxu0 0.0
    %1723 = vmatprep.subr.mxu0 0.0
    %1724 = vmatpush1.msra.mxu0 0.0
    %1725 = vmatprep.subr.mxu0 0.0
    %1726 = vmatpush1.msra.mxu0 0.0
    %1727 = vmatprep.subr.mxu0 0.0
    %1728 = vmatpush1.msra.mxu0 0.0
    %1729 = vmatprep.subr.mxu0 0.0
    %1730 = vmatpush1.msra.mxu0 0.0
    %1731 = vmatprep.subr.mxu0 0.0
    %1732 = vmatpush1.msra.mxu0 0.0
    %1733 = vmatprep.subr.mxu0 0.0
    %1734 = vmatpush1.msra.mxu0 0.0
    %1735 = vmatprep.subr.mxu0 0.0
    %1736 = vmatpush1.msra.mxu0 0.0
    %1737 = vmatprep.subr.mxu0 0.0
    %1738 = vmatpush1.msra.mxu0 0.0
    %1739 = vmatprep.subr.mxu0 0.0
    %1740 = vmatpush1.msra.mxu0 0.0
    %1741 = vmatprep.subr.mxu0 0.0
    %1742 = vmatpush1.msra.mxu0 0.0
    %1743 = vmatprep.subr.mxu0 0.0
    %1744 = vmatpush1.msra.mxu0 0.0
    %1745 = vmatprep.subr.mxu0 0.0
    %1746 = vmatpush1.msra.mxu0 0.0
    %1747 = vmatprep.subr.mxu0 0.0
    %1748 = vmatpush1.msra.mxu0 0.0
    %1749 = vmatprep.subr.mxu0 0.0
    %1750 = vmatpush1.msra.mxu0 0.0
    %1751 = vmatprep.subr.mxu0 0.0
    %1752 = vmatpush1.msra.mxu0 0.0
    %1753 = vmatprep.subr.mxu0 0.0
    %1754 = vmatpush1.msra.mxu0 0.0
    %1755 = vmatprep.subr.mxu0 0.0
    %1756 = vmatpush1.msra.mxu0 0.0
    %1757 = vmatprep.subr.mxu0 0.0
    %1758 = vmatpush1.msra.mxu0 0.0
    %1759 = vmatprep.subr.mxu0 0.0
    %1760 = vmatpush1.msra.mxu0 0.0
    %1761 = vmatprep.subr.mxu0 0.0
    %1762 = vmatpush1.msra.mxu0 0.0
    %1763 = vmatprep.subr.mxu0 0.0
    %1764 = vmatpush1.msra.mxu0 0.0
    %1765 = vmatprep.subr.mxu0 0.0
    %1766 = vmatpush1.msra.mxu0 0.0
    %1767 = vmatprep.subr.mxu0 0.0
    %1768 = vmatpush1.msra.mxu0 0.0
    %1769 = vmatprep.subr.mxu0 0.0
    %1770 = vmatpush1.msra.mxu0 0.0
    %1771 = vmatprep.mubr.f32.mxu0 0.0
    %1772 = vmatmul.mubr.f32.gmra.mrb[0].mxu0 %v1696
    %v1773 = vpop.f32.mrb[0].mxu0
    %v1774 = vadd.f32 0.0, %v1773
    %v1775 = vpop.f32.mrb[0].mxu0
    %1776 = vmatprep.mubr.f32.mxu0 0.0
    %1777 = vmatmul.mubr.f32.gmra.mrb[0].mxu0 %v1699
    %v1778 = vpop.f32.mrb[0].mxu0
    %v1779 = vadd.f32 0.0, %v1778
    %v1780 = vpop.f32.mrb[0].mxu0
    %1781 = vmatprep.mubr.f32.mxu0 0.0
    %1782 = vmatmul.mubr.f32.gmra.mrb[0].mxu0 %v1702
    %v1783 = vpop.f32.mrb[0].mxu0
    %v1784 = vadd.f32 0.0, %v1783
    %v1785 = vpop.f32.mrb[0].mxu0
    %1786 = vmatprep.mubr.f32.mxu0 0.0
    %1787 = vmatmul.mubr.f32.gmra.mrb[0].mxu0 %v1705
    %v1788 = vpop.f32.mrb[0].mxu0
    %v1789 = vadd.f32 0.0, %v1788
    %v1790 = vpop.f32.mrb[0].mxu0
    %1791 = vdwg.mxu0
    %v1793 = vsel %vm408, %v1774, 0
    %v1796 = vsel %vm408, %v1779, 0
    %v1799 = vsel %vm408, %v1784, 0
    %v1802 = vsel %vm408, %v1789, 0
    %1804 = vmatprep.subr.mxu0 0.0
    %1805 = vmatpush1.msra.mxu0 %v272
    %1806 = vmatprep.subr.mxu0 0.0
    %1807 = vmatpush1.msra.mxu0 0.0
    %1808 = vmatprep.subr.mxu0 0.0
    %1809 = vmatpush1.msra.mxu0 0.0
    %1810 = vmatprep.subr.mxu0 0.0
    %1811 = vmatpush1.msra.mxu0 0.0
    %1812 = vmatprep.subr.mxu0 0.0
    %1813 = vmatpush1.msra.mxu0 0.0
    %1814 = vmatprep.subr.mxu0 0.0
    %1815 = vmatpush1.msra.mxu0 0.0
    %1816 = vmatprep.subr.mxu0 0.0
    %1817 = vmatpush1.msra.mxu0 0.0
    %1818 = vmatprep.subr.mxu0 0.0
    %1819 = vmatpush1.msra.mxu0 0.0
    %1820 = vmatprep.subr.mxu0 0.0
    %1821 = vmatpush1.msra.mxu0 0.0
    %1822 = vmatprep.subr.mxu0 0.0
    %1823 = vmatpush1.msra.mxu0 0.0
    %1824 = vmatprep.subr.mxu0 0.0
    %1825 = vmatpush1.msra.mxu0 0.0
    %1826 = vmatprep.subr.mxu0 0.0
    %1827 = vmatpush1.msra.mxu0 0.0
    %1828 = vmatprep.subr.mxu0 0.0
    %1829 = vmatpush1.msra.mxu0 0.0
    %1830 = vmatprep.subr.mxu0 0.0
    %1831 = vmatpush1.msra.mxu0 0.0
    %1832 = vmatprep.subr.mxu0 0.0
    %1833 = vmatpush1.msra.mxu0 0.0
    %1834 = vmatprep.subr.mxu0 0.0
    %1835 = vmatpush1.msra.mxu0 0.0
    %1836 = vmatprep.subr.mxu0 0.0
    %1837 = vmatpush1.msra.mxu0 0.0
    %1838 = vmatprep.subr.mxu0 0.0
    %1839 = vmatpush1.msra.mxu0 0.0
    %1840 = vmatprep.subr.mxu0 0.0
    %1841 = vmatpush1.msra.mxu0 0.0
    %1842 = vmatprep.subr.mxu0 0.0
    %1843 = vmatpush1.msra.mxu0 0.0
    %1844 = vmatprep.subr.mxu0 0.0
    %1845 = vmatpush1.msra.mxu0 0.0
    %1846 = vmatprep.subr.mxu0 0.0
    %1847 = vmatpush1.msra.mxu0 0.0
    %1848 = vmatprep.subr.mxu0 0.0
    %1849 = vmatpush1.msra.mxu0 0.0
    %1850 = vmatprep.subr.mxu0 0.0
    %1851 = vmatpush1.msra.mxu0 0.0
    %1852 = vmatprep.subr.mxu0 0.0
    %1853 = vmatpush1.msra.mxu0 0.0
    %1854 = vmatprep.subr.mxu0 0.0
    %1855 = vmatpush1.msra.mxu0 0.0
    %1856 = vmatprep.subr.mxu0 0.0
    %1857 = vmatpush1.msra.mxu0 0.0
    %1858 = vmatprep.subr.mxu0 0.0
    %1859 = vmatpush1.msra.mxu0 0.0
    %1860 = vmatprep.subr.mxu0 0.0
    %1861 = vmatpush1.msra.mxu0 0.0
    %1862 = vmatprep.subr.mxu0 0.0
    %1863 = vmatpush1.msra.mxu0 0.0
    %1864 = vmatprep.subr.mxu0 0.0
    %1865 = vmatpush1.msra.mxu0 0.0
    %1866 = vmatprep.subr.mxu0 0.0
    %1867 = vmatpush1.msra.mxu0 0.0
    %1868 = vmatprep.mubr.f32.mxu0 0.0
    %1869 = vmatmul.mubr.f32.gmra.mrb[0].mxu0 %v1793
    %v1870 = vpop.f32.mrb[0].mxu0
    %v1871 = vadd.f32 0.0, %v1870
    %v1872 = vpop.f32.mrb[0].mxu0
    %1873 = vmatprep.mubr.f32.mxu0 0.0
    %1874 = vmatmul.mubr.f32.gmra.mrb[0].mxu0 %v1796
    %v1875 = vpop.f32.mrb[0].mxu0
    %v1876 = vadd.f32 0.0, %v1875
    %v1877 = vpop.f32.mrb[0].mxu0
    %1878 = vmatprep.mubr.f32.mxu0 0.0
    %1879 = vmatmul.mubr.f32.gmra.mrb[0].mxu0 %v1799
    %v1880 = vpop.f32.mrb[0].mxu0
    %v1881 = vadd.f32 0.0, %v1880
    %v1882 = vpop.f32.mrb[0].mxu0
    %1883 = vmatprep.mubr.f32.mxu0 0.0
    %1884 = vmatmul.mubr.f32.gmra.mrb[0].mxu0 %v1802
    %v1885 = vpop.f32.mrb[0].mxu0
    %v1886 = vadd.f32 0.0, %v1885
    %v1887 = vpop.f32.mrb[0].mxu0
    %1888 = vdwg.mxu0
    %v1889 = vadd.f32 %v1514, %v1871
    %v1890 = vadd.f32 %v1515, %v1876
    %v1891 = vadd.f32 %v1516, %v1881
    %v1892 = vadd.f32 %v1517, %v1886
    %1893 = vxpose.xlu0.b32.start [1/16] %v119, 128
    %1894 = vxpose.xlu0.b32.cont [2/16] %v120, 128
    %1895 = vxpose.xlu0.b32.cont [3/16] %v121, 128
    %1896 = vxpose.xlu0.b32.cont [4/16] %v122, 128
    %1897 = vxpose.xlu0.b32.cont [5/16] 0.0, 128
    %1898 = vxpose.xlu0.b32.cont [6/16] 0.0, 128
    %1899 = vxpose.xlu0.b32.cont [7/16] 0.0, 128
    %1900 = vxpose.xlu0.b32.cont [8/16] 0.0, 128
    %1901 = vxpose.xlu0.b32.cont [9/16] 0.0, 128
    %1902 = vxpose.xlu0.b32.cont [10/16] 0.0, 128
    %1903 = vxpose.xlu0.b32.cont [11/16] 0.0, 128
    %1904 = vxpose.xlu0.b32.cont [12/16] 0.0, 128
    %1905 = vxpose.xlu0.b32.cont [13/16] 0.0, 128
    %1906 = vxpose.xlu0.b32.cont [14/16] 0.0, 128
    %1907 = vxpose.xlu0.b32.cont [15/16] 0.0, 128
    %1908 = vxpose.xlu0.b32.end [16/16] 0.0, 128
    %v1909 = vpop.trf.xlu0
    %v1910 = vpop.trf.xlu0
    %v1911 = vpop.trf.xlu0
    %v1912 = vpop.trf.xlu0
    %v1913 = vpop.trf.xlu0
    %v1914 = vpop.trf.xlu0
    %v1915 = vpop.trf.xlu0
    %v1916 = vpop.trf.xlu0
    %v1917 = vpop.trf.xlu0
    %v1918 = vpop.trf.xlu0
    %v1919 = vpop.trf.xlu0
    %v1920 = vpop.trf.xlu0
    %v1921 = vpop.trf.xlu0
    %v1922 = vpop.trf.xlu0
    %v1923 = vpop.trf.xlu0
    %v1924 = vpop.trf.xlu0
    %v1926 = vsel %vm134, %v1909, 0
    %v1929 = vsel %vm134, %v1910, 0
    %v1932 = vsel %vm134, %v1911, 0
    %v1935 = vsel %vm134, %v1912, 0
    %1937 = vmatprep.subr.mxu0 0.0
    %1938 = vmatpush1.msra.mxu0 %v264
    %1939 = vmatprep.subr.mxu0 0.0
    %1940 = vmatpush1.msra.mxu0 %v265
    %1941 = vmatprep.subr.mxu0 0.0
    %1942 = vmatpush1.msra.mxu0 %v266
    %1943 = vmatprep.subr.mxu0 0.0
    %1944 = vmatpush1.msra.mxu0 %v267
    %1945 = vmatprep.subr.mxu0 0.0
    %1946 = vmatpush1.msra.mxu0 0.0
    %1947 = vmatprep.subr.mxu0 0.0
    %1948 = vmatpush1.msra.mxu0 0.0
    %1949 = vmatprep.subr.mxu0 0.0
    %1950 = vmatpush1.msra.mxu0 0.0
    %1951 = vmatprep.subr.mxu0 0.0
    %1952 = vmatpush1.msra.mxu0 0.0
    %1953 = vmatprep.subr.mxu0 0.0
    %1954 = vmatpush1.msra.mxu0 0.0
    %1955 = vmatprep.subr.mxu0 0.0
    %1956 = vmatpush1.msra.mxu0 0.0
    %1957 = vmatprep.subr.mxu0 0.0
    %1958 = vmatpush1.msra.mxu0 0.0
    %1959 = vmatprep.subr.mxu0 0.0
    %1960 = vmatpush1.msra.mxu0 0.0
    %1961 = vmatprep.subr.mxu0 0.0
    %1962 = vmatpush1.msra.mxu0 0.0
    %1963 = vmatprep.subr.mxu0 0.0
    %1964 = vmatpush1.msra.mxu0 0.0
    %1965 = vmatprep.subr.mxu0 0.0
    %1966 = vmatpush1.msra.mxu0 0.0
    %1967 = vmatprep.subr.mxu0 0.0
    %1968 = vmatpush1.msra.mxu0 0.0
    %1969 = vmatprep.subr.mxu0 0.0
    %1970 = vmatpush1.msra.mxu0 0.0
    %1971 = vmatprep.subr.mxu0 0.0
    %1972 = vmatpush1.msra.mxu0 0.0
    %1973 = vmatprep.subr.mxu0 0.0
    %1974 = vmatpush1.msra.mxu0 0.0
    %1975 = vmatprep.subr.mxu0 0.0
    %1976 = vmatpush1.msra.mxu0 0.0
    %1977 = vmatprep.subr.mxu0 0.0
    %1978 = vmatpush1.msra.mxu0 0.0
    %1979 = vmatprep.subr.mxu0 0.0
    %1980 = vmatpush1.msra.mxu0 0.0
    %1981 = vmatprep.subr.mxu0 0.0
    %1982 = vmatpush1.msra.mxu0 0.0
    %1983 = vmatprep.subr.mxu0 0.0
    %1984 = vmatpush1.msra.mxu0 0.0
    %1985 = vmatprep.subr.mxu0 0.0
    %1986 = vmatpush1.msra.mxu0 0.0
    %1987 = vmatprep.subr.mxu0 0.0
    %1988 = vmatpush1.msra.mxu0 0.0
    %1989 = vmatprep.subr.mxu0 0.0
    %1990 = vmatpush1.msra.mxu0 0.0
    %1991 = vmatprep.subr.mxu0 0.0
    %1992 = vmatpush1.msra.mxu0 0.0
    %1993 = vmatprep.subr.mxu0 0.0
    %1994 = vmatpush1.msra.mxu0 0.0
    %1995 = vmatprep.subr.mxu0 0.0
    %1996 = vmatpush1.msra.mxu0 0.0
    %1997 = vmatprep.subr.mxu0 0.0
    %1998 = vmatpush1.msra.mxu0 0.0
    %1999 = vmatprep.subr.mxu0 0.0
    %2000 = vmatpush1.msra.mxu0 0.0
    %2001 = vmatprep.mubr.f32.mxu0 0.0
    %2002 = vmatmul.mubr.f32.gmra.mrb[0].mxu0 %v1926
    %v2003 = vpop.f32.mrb[0].mxu0
    %v2004 = vadd.f32 %v309, %v2003
    %v2005 = vpop.f32.mrb[0].mxu0
    %2006 = vmatprep.mubr.f32.mxu0 0.0
    %2007 = vmatmul.mubr.f32.gmra.mrb[0].mxu0 %v1929
    %v2008 = vpop.f32.mrb[0].mxu0
    %v2009 = vadd.f32 %v309, %v2008
    %v2010 = vpop.f32.mrb[0].mxu0
    %2011 = vmatprep.mubr.f32.mxu0 0.0
    %2012 = vmatmul.mubr.f32.gmra.mrb[0].mxu0 %v1932
    %v2013 = vpop.f32.mrb[0].mxu0
    %v2014 = vadd.f32 %v309, %v2013
    %v2015 = vpop.f32.mrb[0].mxu0
    %2016 = vmatprep.mubr.f32.mxu0 0.0
    %2017 = vmatmul.mubr.f32.gmra.mrb[0].mxu0 %v1935
    %v2018 = vpop.f32.mrb[0].mxu0
    %v2019 = vadd.f32 %v309, %v2018
    %v2020 = vpop.f32.mrb[0].mxu0
    %2021 = vdwg.mxu0
    %v2023 = vsel %vm408, %v246, 0
    %v2026 = vsel %vm408, %v251, 0
    %v2029 = vsel %vm408, %v256, 0
    %v2032 = vsel %vm408, %v261, 0
    %v2035 = vsel %vm408, %v2004, 0
    %v2038 = vsel %vm408, %v2009, 0
    %v2041 = vsel %vm408, %v2014, 0
    %v2044 = vsel %vm408, %v2019, 0
    %2046 = vmatprep.subr.mxu0 0.0
    %2047 = vmatpush1.xpose.msra.mxu0 %v2035
    %2048 = vmatprep.subr.mxu0 0.0
    %2049 = vmatpush1.xpose.msra.mxu0 %v2038
    %2050 = vmatprep.subr.mxu0 0.0
    %2051 = vmatpush1.xpose.msra.mxu0 %v2041
    %2052 = vmatprep.subr.mxu0 0.0
    %2053 = vmatpush1.xpose.msra.mxu0 %v2044
    %2054 = vmatprep.subr.mxu0 0.0
    %2055 = vmatpush1.xpose.msra.mxu0 0.0
    %2056 = vmatprep.subr.mxu0 0.0
    %2057 = vmatpush1.xpose.msra.mxu0 0.0
    %2058 = vmatprep.subr.mxu0 0.0
    %2059 = vmatpush1.xpose.msra.mxu0 0.0
    %2060 = vmatprep.subr.mxu0 0.0
    %2061 = vmatpush1.xpose.msra.mxu0 0.0
    %2062 = vmatprep.subr.mxu0 0.0
    %2063 = vmatpush1.xpose.msra.mxu0 0.0
    %2064 = vmatprep.subr.mxu0 0.0
    %2065 = vmatpush1.xpose.msra.mxu0 0.0
    %2066 = vmatprep.subr.mxu0 0.0
    %2067 = vmatpush1.xpose.msra.mxu0 0.0
    %2068 = vmatprep.subr.mxu0 0.0
    %2069 = vmatpush1.xpose.msra.mxu0 0.0
    %2070 = vmatprep.subr.mxu0 0.0
    %2071 = vmatpush1.xpose.msra.mxu0 0.0
    %2072 = vmatprep.subr.mxu0 0.0
    %2073 = vmatpush1.xpose.msra.mxu0 0.0
    %2074 = vmatprep.subr.mxu0 0.0
    %2075 = vmatpush1.xpose.msra.mxu0 0.0
    %2076 = vmatprep.subr.mxu0 0.0
    %2077 = vmatpush1.xpose.msra.mxu0 0.0
    %2078 = vmatprep.subr.mxu0 0.0
    %2079 = vmatpush1.xpose.msra.mxu0 0.0
    %2080 = vmatprep.subr.mxu0 0.0
    %2081 = vmatpush1.xpose.msra.mxu0 0.0
    %2082 = vmatprep.subr.mxu0 0.0
    %2083 = vmatpush1.xpose.msra.mxu0 0.0
    %2084 = vmatprep.subr.mxu0 0.0
    %2085 = vmatpush1.xpose.msra.mxu0 0.0
    %2086 = vmatprep.subr.mxu0 0.0
    %2087 = vmatpush1.xpose.msra.mxu0 0.0
    %2088 = vmatprep.subr.mxu0 0.0
    %2089 = vmatpush1.xpose.msra.mxu0 0.0
    %2090 = vmatprep.subr.mxu0 0.0
    %2091 = vmatpush1.xpose.msra.mxu0 0.0
    %2092 = vmatprep.subr.mxu0 0.0
    %2093 = vmatpush1.xpose.msra.mxu0 0.0
    %2094 = vmatprep.subr.mxu0 0.0
    %2095 = vmatpush1.xpose.msra.mxu0 0.0
    %2096 = vmatprep.subr.mxu0 0.0
    %2097 = vmatpush1.xpose.msra.mxu0 0.0
    %2098 = vmatprep.subr.mxu0 0.0
    %2099 = vmatpush1.xpose.msra.mxu0 0.0
    %2100 = vmatprep.subr.mxu0 0.0
    %2101 = vmatpush1.xpose.msra.mxu0 0.0
    %2102 = vmatprep.subr.mxu0 0.0
    %2103 = vmatpush1.xpose.msra.mxu0 0.0
    %2104 = vmatprep.subr.mxu0 0.0
    %2105 = vmatpush1.xpose.msra.mxu0 0.0
    %2106 = vmatprep.subr.mxu0 0.0
    %2107 = vmatpush1.xpose.msra.mxu0 0.0
    %2108 = vmatprep.subr.mxu0 0.0
    %2109 = vmatpush1.xpose.msra.mxu0 0.0
    %2110 = vmatprep.mubr.f32.mxu0 0.0
    %2111 = vmatmul.mubr.f32.gmra.mrb[0].mxu0 %v2023
    %v2112 = vpop.f32.mrb[0].mxu0
    %v2113 = vadd.f32 0.0, %v2112
    %v2114 = vpop.f32.mrb[0].mxu0
    %2115 = vmatprep.mubr.f32.mxu0 0.0
    %2116 = vmatmul.mubr.f32.gmra.mrb[0].mxu0 %v2026
    %v2117 = vpop.f32.mrb[0].mxu0
    %v2118 = vadd.f32 0.0, %v2117
    %v2119 = vpop.f32.mrb[0].mxu0
    %2120 = vmatprep.mubr.f32.mxu0 0.0
    %2121 = vmatmul.mubr.f32.gmra.mrb[0].mxu0 %v2029
    %v2122 = vpop.f32.mrb[0].mxu0
    %v2123 = vadd.f32 0.0, %v2122
    %v2124 = vpop.f32.mrb[0].mxu0
    %2125 = vmatprep.mubr.f32.mxu0 0.0
    %2126 = vmatmul.mubr.f32.gmra.mrb[0].mxu0 %v2032
    %v2127 = vpop.f32.mrb[0].mxu0
    %v2128 = vadd.f32 0.0, %v2127
    %v2129 = vpop.f32.mrb[0].mxu0
    %2130 = vdwg.mxu0
    %v2131 = vmul.f32 %v2113, 0.35355338
    %v2132 = vmul.f32 %v2118, 0.35355338
    %v2133 = vmul.f32 %v2123, 0.35355338
    %v2134 = vmul.f32 %v2128, 0.35355338
    %v2135 = vsel %vm134, %v2131, -inf
    %2136 = vmax.xlane.f32.xlu0 %v2135
    %v2137 = vpop.xlane.xlu0 %2136
    %v2138 = vsel %vm134, %v2132, -inf
    %2139 = vmax.xlane.f32.xlu0 %v2138
    %v2140 = vpop.xlane.xlu0 %2139
    %v2141 = vsel %vm134, %v2133, -inf
    %2142 = vmax.xlane.f32.xlu0 %v2141
    %v2143 = vpop.xlane.xlu0 %2142
    %v2144 = vsel %vm134, %v2134, -inf
    %2145 = vmax.xlane.f32.xlu0 %v2144
    %v2146 = vpop.xlane.xlu0 %2145
    %v2147 = vsub.f32 %v2131, %v2137
    %v2148 = vsub.f32 %v2132, %v2140
    %v2149 = vsub.f32 %v2133, %v2143
    %v2150 = vsub.f32 %v2134, %v2146
    %v2151 = vmul.f32 %v2147, 1.442695
    %v2152 = vpow.pop %v2151
    %v2153 = vmul.f32 %v2148, 1.442695
    %v2154 = vpow.pop %v2153
    %v2155 = vmul.f32 %v2149, 1.442695
    %v2156 = vpow.pop %v2155
    %v2157 = vmul.f32 %v2150, 1.442695
    %v2158 = vpow.pop %v2157
    %v2159 = vsel %vm134, %v2152, 0.0
    %2160 = vadd.xlane.f32.xlu0 %v2159
    %v2161 = vpop.xlane.xlu0 %2160
    %v2162 = vsel %vm134, %v2154, 0.0
    %2163 = vadd.xlane.f32.xlu0 %v2162
    %v2164 = vpop.xlane.xlu0 %2163
    %v2165 = vsel %vm134, %v2156, 0.0
    %2166 = vadd.xlane.f32.xlu0 %v2165
    %v2167 = vpop.xlane.xlu0 %2166
    %v2168 = vsel %vm134, %v2158, 0.0
    %2169 = vadd.xlane.f32.xlu0 %v2168
    %v2170 = vpop.xlane.xlu0 %2169
    %v2171 = vrcp.pop %v2161
    %v2172 = vrcp.pop %v2164
    %v2173 = vrcp.pop %v2167
    %v2174 = vrcp.pop %v2170
    %v2175 = vmul.f32 %v2152, %v2171
    %v2176 = vmul.f32 %v2154, %v2172
    %v2177 = vmul.f32 %v2156, %v2173
    %v2178 = vmul.f32 %v2158, %v2174
    %2179 = vrot.lane.b32.xlu0 %v246, 96
    %v2180 = vpop.permute.xlu0 %2179
    %2181 = vrot.lane.b32.xlu0 %v251, 96
    %v2182 = vpop.permute.xlu0 %2181
    %2183 = vrot.lane.b32.xlu0 %v256, 96
    %v2184 = vpop.permute.xlu0 %2183
    %2185 = vrot.lane.b32.xlu0 %v261, 96
    %v2186 = vpop.permute.xlu0 %2185
    %v2192 = vsel %vm134, %v2175, 0
    %v2195 = vsel %vm134, %v2176, 0
    %v2198 = vsel %vm134, %v2177, 0
    %v2201 = vsel %vm134, %v2178, 0
    %2203 = vmatprep.subr.mxu0 0.0
    %2204 = vmatpush1.msra.mxu0 %v2180
    %2205 = vmatprep.subr.mxu0 0.0
    %2206 = vmatpush1.msra.mxu0 %v2182
    %2207 = vmatprep.subr.mxu0 0.0
    %2208 = vmatpush1.msra.mxu0 %v2184
    %2209 = vmatprep.subr.mxu0 0.0
    %2210 = vmatpush1.msra.mxu0 %v2186
    %2211 = vmatprep.subr.mxu0 0.0
    %2212 = vmatpush1.msra.mxu0 0.0
    %2213 = vmatprep.subr.mxu0 0.0
    %2214 = vmatpush1.msra.mxu0 0.0
    %2215 = vmatprep.subr.mxu0 0.0
    %2216 = vmatpush1.msra.mxu0 0.0
    %2217 = vmatprep.subr.mxu0 0.0
    %2218 = vmatpush1.msra.mxu0 0.0
    %2219 = vmatprep.subr.mxu0 0.0
    %2220 = vmatpush1.msra.mxu0 0.0
    %2221 = vmatprep.subr.mxu0 0.0
    %2222 = vmatpush1.msra.mxu0 0.0
    %2223 = vmatprep.subr.mxu0 0.0
    %2224 = vmatpush1.msra.mxu0 0.0
    %2225 = vmatprep.subr.mxu0 0.0
    %2226 = vmatpush1.msra.mxu0 0.0
    %2227 = vmatprep.subr.mxu0 0.0
    %2228 = vmatpush1.msra.mxu0 0.0
    %2229 = vmatprep.subr.mxu0 0.0
    %2230 = vmatpush1.msra.mxu0 0.0
    %2231 = vmatprep.subr.mxu0 0.0
    %2232 = vmatpush1.msra.mxu0 0.0
    %2233 = vmatprep.subr.mxu0 0.0
    %2234 = vmatpush1.msra.mxu0 0.0
    %2235 = vmatprep.subr.mxu0 0.0
    %2236 = vmatpush1.msra.mxu0 0.0
    %2237 = vmatprep.subr.mxu0 0.0
    %2238 = vmatpush1.msra.mxu0 0.0
    %2239 = vmatprep.subr.mxu0 0.0
    %2240 = vmatpush1.msra.mxu0 0.0
    %2241 = vmatprep.subr.mxu0 0.0
    %2242 = vmatpush1.msra.mxu0 0.0
    %2243 = vmatprep.subr.mxu0 0.0
    %2244 = vmatpush1.msra.mxu0 0.0
    %2245 = vmatprep.subr.mxu0 0.0
    %2246 = vmatpush1.msra.mxu0 0.0
    %2247 = vmatprep.subr.mxu0 0.0
    %2248 = vmatpush1.msra.mxu0 0.0
    %2249 = vmatprep.subr.mxu0 0.0
    %2250 = vmatpush1.msra.mxu0 0.0
    %2251 = vmatprep.subr.mxu0 0.0
    %2252 = vmatpush1.msra.mxu0 0.0
    %2253 = vmatprep.subr.mxu0 0.0
    %2254 = vmatpush1.msra.mxu0 0.0
    %2255 = vmatprep.subr.mxu0 0.0
    %2256 = vmatpush1.msra.mxu0 0.0
    %2257 = vmatprep.subr.mxu0 0.0
    %2258 = vmatpush1.msra.mxu0 0.0
    %2259 = vmatprep.subr.mxu0 0.0
    %2260 = vmatpush1.msra.mxu0 0.0
    %2261 = vmatprep.subr.mxu0 0.0
    %2262 = vmatpush1.msra.mxu0 0.0
    %2263 = vmatprep.subr.mxu0 0.0
    %2264 = vmatpush1.msra.mxu0 0.0
    %2265 = vmatprep.subr.mxu0 0.0
    %2266 = vmatpush1.msra.mxu0 0.0
    %2267 = vmatprep.mubr.f32.mxu0 0.0
    %2268 = vmatmul.mubr.f32.gmra.mrb[0].mxu0 %v2192
    %v2269 = vpop.f32.mrb[0].mxu0
    %v2270 = vadd.f32 0.0, %v2269
    %v2271 = vpop.f32.mrb[0].mxu0
    %2272 = vmatprep.mubr.f32.mxu0 0.0
    %2273 = vmatmul.mubr.f32.gmra.mrb[0].mxu0 %v2195
    %v2274 = vpop.f32.mrb[0].mxu0
    %v2275 = vadd.f32 0.0, %v2274
    %v2276 = vpop.f32.mrb[0].mxu0
    %2277 = vmatprep.mubr.f32.mxu0 0.0
    %2278 = vmatmul.mubr.f32.gmra.mrb[0].mxu0 %v2198
    %v2279 = vpop.f32.mrb[0].mxu0
    %v2280 = vadd.f32 0.0, %v2279
    %v2281 = vpop.f32.mrb[0].mxu0
    %2282 = vmatprep.mubr.f32.mxu0 0.0
    %2283 = vmatmul.mubr.f32.gmra.mrb[0].mxu0 %v2201
    %v2284 = vpop.f32.mrb[0].mxu0
    %v2285 = vadd.f32 0.0, %v2284
    %v2286 = vpop.f32.mrb[0].mxu0
    %2287 = vdwg.mxu0
    %2288 = vrot.lane.b32.xlu0 %v246, 120
    %v2289 = vpop.permute.xlu0 %2288
    %2290 = vrot.lane.b32.xlu0 %v251, 120
    %v2291 = vpop.permute.xlu0 %2290
    %2292 = vrot.lane.b32.xlu0 %v256, 120
    %v2293 = vpop.permute.xlu0 %2292
    %2294 = vrot.lane.b32.xlu0 %v261, 120
    %v2295 = vpop.permute.xlu0 %2294
    %2296 = vrot.lane.b32.xlu0 %v2004, 120
    %v2297 = vpop.permute.xlu0 %2296
    %2298 = vrot.lane.b32.xlu0 %v2009, 120
    %v2299 = vpop.permute.xlu0 %2298
    %2300 = vrot.lane.b32.xlu0 %v2014, 120
    %v2301 = vpop.permute.xlu0 %2300
    %2302 = vrot.lane.b32.xlu0 %v2019, 120
    %v2303 = vpop.permute.xlu0 %2302
    %v2304 = vsel %vm408, %v2289, 0
    %v2306 = vsel %vm408, %v2291, 0
    %v2308 = vsel %vm408, %v2293, 0
    %v2310 = vsel %vm408, %v2295, 0
    %v2312 = vsel %vm408, %v2297, 0
    %v2314 = vsel %vm408, %v2299, 0
    %v2316 = vsel %vm408, %v2301, 0
    %v2318 = vsel %vm408, %v2303, 0
    %2320 = vmatprep.subr.mxu0 0.0
    %2321 = vmatpush1.xpose.msra.mxu0 %v2312
    %2322 = vmatprep.subr.mxu0 0.0
    %2323 = vmatpush1.xpose.msra.mxu0 %v2314
    %2324 = vmatprep.subr.mxu0 0.0
    %2325 = vmatpush1.xpose.msra.mxu0 %v2316
    %2326 = vmatprep.subr.mxu0 0.0
    %2327 = vmatpush1.xpose.msra.mxu0 %v2318
    %2328 = vmatprep.subr.mxu0 0.0
    %2329 = vmatpush1.xpose.msra.mxu0 0.0
    %2330 = vmatprep.subr.mxu0 0.0
    %2331 = vmatpush1.xpose.msra.mxu0 0.0
    %2332 = vmatprep.subr.mxu0 0.0
    %2333 = vmatpush1.xpose.msra.mxu0 0.0
    %2334 = vmatprep.subr.mxu0 0.0
    %2335 = vmatpush1.xpose.msra.mxu0 0.0
    %2336 = vmatprep.subr.mxu0 0.0
    %2337 = vmatpush1.xpose.msra.mxu0 0.0
    %2338 = vmatprep.subr.mxu0 0.0
    %2339 = vmatpush1.xpose.msra.mxu0 0.0
    %2340 = vmatprep.subr.mxu0 0.0
    %2341 = vmatpush1.xpose.msra.mxu0 0.0
    %2342 = vmatprep.subr.mxu0 0.0
    %2343 = vmatpush1.xpose.msra.mxu0 0.0
    %2344 = vmatprep.subr.mxu0 0.0
    %2345 = vmatpush1.xpose.msra.mxu0 0.0
    %2346 = vmatprep.subr.mxu0 0.0
    %2347 = vmatpush1.xpose.msra.mxu0 0.0
    %2348 = vmatprep.subr.mxu0 0.0
    %2349 = vmatpush1.xpose.msra.mxu0 0.0
    %2350 = vmatprep.subr.mxu0 0.0
    %2351 = vmatpush1.xpose.msra.mxu0 0.0
    %2352 = vmatprep.subr.mxu0 0.0
    %2353 = vmatpush1.xpose.msra.mxu0 0.0
    %2354 = vmatprep.subr.mxu0 0.0
    %2355 = vmatpush1.xpose.msra.mxu0 0.0
    %2356 = vmatprep.subr.mxu0 0.0
    %2357 = vmatpush1.xpose.msra.mxu0 0.0
    %2358 = vmatprep.subr.mxu0 0.0
    %2359 = vmatpush1.xpose.msra.mxu0 0.0
    %2360 = vmatprep.subr.mxu0 0.0
    %2361 = vmatpush1.xpose.msra.mxu0 0.0
    %2362 = vmatprep.subr.mxu0 0.0
    %2363 = vmatpush1.xpose.msra.mxu0 0.0
    %2364 = vmatprep.subr.mxu0 0.0
    %2365 = vmatpush1.xpose.msra.mxu0 0.0
    %2366 = vmatprep.subr.mxu0 0.0
    %2367 = vmatpush1.xpose.msra.mxu0 0.0
    %2368 = vmatprep.subr.mxu0 0.0
    %2369 = vmatpush1.xpose.msra.mxu0 0.0
    %2370 = vmatprep.subr.mxu0 0.0
    %2371 = vmatpush1.xpose.msra.mxu0 0.0
    %2372 = vmatprep.subr.mxu0 0.0
    %2373 = vmatpush1.xpose.msra.mxu0 0.0
    %2374 = vmatprep.subr.mxu0 0.0
    %2375 = vmatpush1.xpose.msra.mxu0 0.0
    %2376 = vmatprep.subr.mxu0 0.0
    %2377 = vmatpush1.xpose.msra.mxu0 0.0
    %2378 = vmatprep.subr.mxu0 0.0
    %2379 = vmatpush1.xpose.msra.mxu0 0.0
    %2380 = vmatprep.subr.mxu0 0.0
    %2381 = vmatpush1.xpose.msra.mxu0 0.0
    %2382 = vmatprep.subr.mxu0 0.0
    %2383 = vmatpush1.xpose.msra.mxu0 0.0
    %2384 = vmatprep.mubr.f32.mxu0 0.0
    %2385 = vmatmul.mubr.f32.gmra.mrb[0].mxu0 %v2304
    %v2386 = vpop.f32.mrb[0].mxu0
    %v2387 = vadd.f32 0.0, %v2386
    %v2388 = vpop.f32.mrb[0].mxu0
    %2389 = vmatprep.mubr.f32.mxu0 0.0
    %2390 = vmatmul.mubr.f32.gmra.mrb[0].mxu0 %v2306
    %v2391 = vpop.f32.mrb[0].mxu0
    %v2392 = vadd.f32 0.0, %v2391
    %v2393 = vpop.f32.mrb[0].mxu0
    %2394 = vmatprep.mubr.f32.mxu0 0.0
    %2395 = vmatmul.mubr.f32.gmra.mrb[0].mxu0 %v2308
    %v2396 = vpop.f32.mrb[0].mxu0
    %v2397 = vadd.f32 0.0, %v2396
    %v2398 = vpop.f32.mrb[0].mxu0
    %2399 = vmatprep.mubr.f32.mxu0 0.0
    %2400 = vmatmul.mubr.f32.gmra.mrb[0].mxu0 %v2310
    %v2401 = vpop.f32.mrb[0].mxu0
    %v2402 = vadd.f32 0.0, %v2401
    %v2403 = vpop.f32.mrb[0].mxu0
    %2404 = vdwg.mxu0
    %v2405 = vmul.f32 %v2387, 0.35355338
    %v2406 = vmul.f32 %v2392, 0.35355338
    %v2407 = vmul.f32 %v2397, 0.35355338
    %v2408 = vmul.f32 %v2402, 0.35355338
    %v2409 = vsel %vm134, %v2405, -inf
    %2410 = vmax.xlane.f32.xlu0 %v2409
    %v2411 = vpop.xlane.xlu0 %2410
    %v2412 = vsel %vm134, %v2406, -inf
    %2413 = vmax.xlane.f32.xlu0 %v2412
    %v2414 = vpop.xlane.xlu0 %2413
    %v2415 = vsel %vm134, %v2407, -inf
    %2416 = vmax.xlane.f32.xlu0 %v2415
    %v2417 = vpop.xlane.xlu0 %2416
    %v2418 = vsel %vm134, %v2408, -inf
    %2419 = vmax.xlane.f32.xlu0 %v2418
    %v2420 = vpop.xlane.xlu0 %2419
    %v2421 = vsub.f32 %v2405, %v2411
    %v2422 = vsub.f32 %v2406, %v2414
    %v2423 = vsub.f32 %v2407, %v2417
    %v2424 = vsub.f32 %v2408, %v2420
    %v2425 = vmul.f32 %v2421, 1.442695
    %v2426 = vpow.pop %v2425
    %v2427 = vmul.f32 %v2422, 1.442695
    %v2428 = vpow.pop %v2427
    %v2429 = vmul.f32 %v2423, 1.442695
    %v2430 = vpow.pop %v2429
    %v2431 = vmul.f32 %v2424, 1.442695
    %v2432 = vpow.pop %v2431
    %v2433 = vsel %vm134, %v2426, 0.0
    %2434 = vadd.xlane.f32.xlu0 %v2433
    %v2435 = vpop.xlane.xlu0 %2434
    %v2436 = vsel %vm134, %v2428, 0.0
    %2437 = vadd.xlane.f32.xlu0 %v2436
    %v2438 = vpop.xlane.xlu0 %2437
    %v2439 = vsel %vm134, %v2430, 0.0
    %2440 = vadd.xlane.f32.xlu0 %v2439
    %v2441 = vpop.xlane.xlu0 %2440
    %v2442 = vsel %vm134, %v2432, 0.0
    %2443 = vadd.xlane.f32.xlu0 %v2442
    %v2444 = vpop.xlane.xlu0 %2443
    %v2445 = vrcp.pop %v2435
    %v2446 = vrcp.pop %v2438
    %v2447 = vrcp.pop %v2441
    %v2448 = vrcp.pop %v2444
    %v2449 = vmul.f32 %v2426, %v2445
    %v2450 = vmul.f32 %v2428, %v2446
    %v2451 = vmul.f32 %v2430, %v2447
    %v2452 = vmul.f32 %v2432, %v2448
    %2453 = vrot.lane.b32.xlu0 %v246, 88
    %v2454 = vpop.permute.xlu0 %2453
    %2455 = vrot.lane.b32.xlu0 %v251, 88
    %v2456 = vpop.permute.xlu0 %2455
    %2457 = vrot.lane.b32.xlu0 %v256, 88
    %v2458 = vpop.permute.xlu0 %2457
    %2459 = vrot.lane.b32.xlu0 %v261, 88
    %v2460 = vpop.permute.xlu0 %2459
    %v2466 = vsel %vm134, %v2449, 0
    %v2469 = vsel %vm134, %v2450, 0
    %v2472 = vsel %vm134, %v2451, 0
    %v2475 = vsel %vm134, %v2452, 0
    %2477 = vmatprep.subr.mxu0 0.0
    %2478 = vmatpush1.msra.mxu0 %v2454
    %2479 = vmatprep.subr.mxu0 0.0
    %2480 = vmatpush1.msra.mxu0 %v2456
    %2481 = vmatprep.subr.mxu0 0.0
    %2482 = vmatpush1.msra.mxu0 %v2458
    %2483 = vmatprep.subr.mxu0 0.0
    %2484 = vmatpush1.msra.mxu0 %v2460
    %2485 = vmatprep.subr.mxu0 0.0
    %2486 = vmatpush1.msra.mxu0 0.0
    %2487 = vmatprep.subr.mxu0 0.0
    %2488 = vmatpush1.msra.mxu0 0.0
    %2489 = vmatprep.subr.mxu0 0.0
    %2490 = vmatpush1.msra.mxu0 0.0
    %2491 = vmatprep.subr.mxu0 0.0
    %2492 = vmatpush1.msra.mxu0 0.0
    %2493 = vmatprep.subr.mxu0 0.0
    %2494 = vmatpush1.msra.mxu0 0.0
    %2495 = vmatprep.subr.mxu0 0.0
    %2496 = vmatpush1.msra.mxu0 0.0
    %2497 = vmatprep.subr.mxu0 0.0
    %2498 = vmatpush1.msra.mxu0 0.0
    %2499 = vmatprep.subr.mxu0 0.0
    %2500 = vmatpush1.msra.mxu0 0.0
    %2501 = vmatprep.subr.mxu0 0.0
    %2502 = vmatpush1.msra.mxu0 0.0
    %2503 = vmatprep.subr.mxu0 0.0
    %2504 = vmatpush1.msra.mxu0 0.0
    %2505 = vmatprep.subr.mxu0 0.0
    %2506 = vmatpush1.msra.mxu0 0.0
    %2507 = vmatprep.subr.mxu0 0.0
    %2508 = vmatpush1.msra.mxu0 0.0
    %2509 = vmatprep.subr.mxu0 0.0
    %2510 = vmatpush1.msra.mxu0 0.0
    %2511 = vmatprep.subr.mxu0 0.0
    %2512 = vmatpush1.msra.mxu0 0.0
    %2513 = vmatprep.subr.mxu0 0.0
    %2514 = vmatpush1.msra.mxu0 0.0
    %2515 = vmatprep.subr.mxu0 0.0
    %2516 = vmatpush1.msra.mxu0 0.0
    %2517 = vmatprep.subr.mxu0 0.0
    %2518 = vmatpush1.msra.mxu0 0.0
    %2519 = vmatprep.subr.mxu0 0.0
    %2520 = vmatpush1.msra.mxu0 0.0
    %2521 = vmatprep.subr.mxu0 0.0
    %2522 = vmatpush1.msra.mxu0 0.0
    %2523 = vmatprep.subr.mxu0 0.0
    %2524 = vmatpush1.msra.mxu0 0.0
    %2525 = vmatprep.subr.mxu0 0.0
    %2526 = vmatpush1.msra.mxu0 0.0
    %2527 = vmatprep.subr.mxu0 0.0
    %2528 = vmatpush1.msra.mxu0 0.0
    %2529 = vmatprep.subr.mxu0 0.0
    %2530 = vmatpush1.msra.mxu0 0.0
    %2531 = vmatprep.subr.mxu0 0.0
    %2532 = vmatpush1.msra.mxu0 0.0
    %2533 = vmatprep.subr.mxu0 0.0
    %2534 = vmatpush1.msra.mxu0 0.0
    %2535 = vmatprep.subr.mxu0 0.0
    %2536 = vmatpush1.msra.mxu0 0.0
    %2537 = vmatprep.subr.mxu0 0.0
    %2538 = vmatpush1.msra.mxu0 0.0
    %2539 = vmatprep.subr.mxu0 0.0
    %2540 = vmatpush1.msra.mxu0 0.0
    %2541 = vmatprep.mubr.f32.mxu0 0.0
    %2542 = vmatmul.mubr.f32.gmra.mrb[0].mxu0 %v2466
    %v2543 = vpop.f32.mrb[0].mxu0
    %v2544 = vadd.f32 0.0, %v2543
    %v2545 = vpop.f32.mrb[0].mxu0
    %2546 = vmatprep.mubr.f32.mxu0 0.0
    %2547 = vmatmul.mubr.f32.gmra.mrb[0].mxu0 %v2469
    %v2548 = vpop.f32.mrb[0].mxu0
    %v2549 = vadd.f32 0.0, %v2548
    %v2550 = vpop.f32.mrb[0].mxu0
    %2551 = vmatprep.mubr.f32.mxu0 0.0
    %2552 = vmatmul.mubr.f32.gmra.mrb[0].mxu0 %v2472
    %v2553 = vpop.f32.mrb[0].mxu0
    %v2554 = vadd.f32 0.0, %v2553
    %v2555 = vpop.f32.mrb[0].mxu0
    %2556 = vmatprep.mubr.f32.mxu0 0.0
    %2557 = vmatmul.mubr.f32.gmra.mrb[0].mxu0 %v2475
    %v2558 = vpop.f32.mrb[0].mxu0
    %v2559 = vadd.f32 0.0, %v2558
    %v2560 = vpop.f32.mrb[0].mxu0
    %2561 = vdwg.mxu0
    %v2563 = vsel %vm408, %v2544, 0
    %v2566 = vsel %vm408, %v2549, 0
    %v2569 = vsel %vm408, %v2554, 0
    %v2572 = vsel %vm408, %v2559, 0
    %2574 = vmatprep.subr.mxu0 0.0
    %2575 = vmatpush1.msra.mxu0 %v270
    %2576 = vmatprep.subr.mxu0 0.0
    %2577 = vmatpush1.msra.mxu0 0.0
    %2578 = vmatprep.subr.mxu0 0.0
    %2579 = vmatpush1.msra.mxu0 0.0
    %2580 = vmatprep.subr.mxu0 0.0
    %2581 = vmatpush1.msra.mxu0 0.0
    %2582 = vmatprep.subr.mxu0 0.0
    %2583 = vmatpush1.msra.mxu0 0.0
    %2584 = vmatprep.subr.mxu0 0.0
    %2585 = vmatpush1.msra.mxu0 0.0
    %2586 = vmatprep.subr.mxu0 0.0
    %2587 = vmatpush1.msra.mxu0 0.0
    %2588 = vmatprep.subr.mxu0 0.0
    %2589 = vmatpush1.msra.mxu0 0.0
    %2590 = vmatprep.subr.mxu0 0.0
    %2591 = vmatpush1.msra.mxu0 0.0
    %2592 = vmatprep.subr.mxu0 0.0
    %2593 = vmatpush1.msra.mxu0 0.0
    %2594 = vmatprep.subr.mxu0 0.0
    %2595 = vmatpush1.msra.mxu0 0.0
    %2596 = vmatprep.subr.mxu0 0.0
    %2597 = vmatpush1.msra.mxu0 0.0
    %2598 = vmatprep.subr.mxu0 0.0
    %2599 = vmatpush1.msra.mxu0 0.0
    %2600 = vmatprep.subr.mxu0 0.0
    %2601 = vmatpush1.msra.mxu0 0.0
    %2602 = vmatprep.subr.mxu0 0.0
    %2603 = vmatpush1.msra.mxu0 0.0
    %2604 = vmatprep.subr.mxu0 0.0
    %2605 = vmatpush1.msra.mxu0 0.0
    %2606 = vmatprep.subr.mxu0 0.0
    %2607 = vmatpush1.msra.mxu0 0.0
    %2608 = vmatprep.subr.mxu0 0.0
    %2609 = vmatpush1.msra.mxu0 0.0
    %2610 = vmatprep.subr.mxu0 0.0
    %2611 = vmatpush1.msra.mxu0 0.0
    %2612 = vmatprep.subr.mxu0 0.0
    %2613 = vmatpush1.msra.mxu0 0.0
    %2614 = vmatprep.subr.mxu0 0.0
    %2615 = vmatpush1.msra.mxu0 0.0
    %2616 = vmatprep.subr.mxu0 0.0
    %2617 = vmatpush1.msra.mxu0 0.0
    %2618 = vmatprep.subr.mxu0 0.0
    %2619 = vmatpush1.msra.mxu0 0.0
    %2620 = vmatprep.subr.mxu0 0.0
    %2621 = vmatpush1.msra.mxu0 0.0
    %2622 = vmatprep.subr.mxu0 0.0
    %2623 = vmatpush1.msra.mxu0 0.0
    %2624 = vmatprep.subr.mxu0 0.0
    %2625 = vmatpush1.msra.mxu0 0.0
    %2626 = vmatprep.subr.mxu0 0.0
    %2627 = vmatpush1.msra.mxu0 0.0
    %2628 = vmatprep.subr.mxu0 0.0
    %2629 = vmatpush1.msra.mxu0 0.0
    %2630 = vmatprep.subr.mxu0 0.0
    %2631 = vmatpush1.msra.mxu0 0.0
    %2632 = vmatprep.subr.mxu0 0.0
    %2633 = vmatpush1.msra.mxu0 0.0
    %2634 = vmatprep.subr.mxu0 0.0
    %2635 = vmatpush1.msra.mxu0 0.0
    %2636 = vmatprep.subr.mxu0 0.0
    %2637 = vmatpush1.msra.mxu0 0.0
    %2638 = vmatprep.mubr.f32.mxu0 0.0
    %2639 = vmatmul.mubr.f32.gmra.mrb[0].mxu0 %v2563
    %v2640 = vpop.f32.mrb[0].mxu0
    %v2641 = vadd.f32 0.0, %v2640
    %v2642 = vpop.f32.mrb[0].mxu0
    %2643 = vmatprep.mubr.f32.mxu0 0.0
    %2644 = vmatmul.mubr.f32.gmra.mrb[0].mxu0 %v2566
    %v2645 = vpop.f32.mrb[0].mxu0
    %v2646 = vadd.f32 0.0, %v2645
    %v2647 = vpop.f32.mrb[0].mxu0
    %2648 = vmatprep.mubr.f32.mxu0 0.0
    %2649 = vmatmul.mubr.f32.gmra.mrb[0].mxu0 %v2569
    %v2650 = vpop.f32.mrb[0].mxu0
    %v2651 = vadd.f32 0.0, %v2650
    %v2652 = vpop.f32.mrb[0].mxu0
    %2653 = vmatprep.mubr.f32.mxu0 0.0
    %2654 = vmatmul.mubr.f32.gmra.mrb[0].mxu0 %v2572
    %v2655 = vpop.f32.mrb[0].mxu0
    %v2656 = vadd.f32 0.0, %v2655
    %v2657 = vpop.f32.mrb[0].mxu0
    %2658 = vdwg.mxu0
    %v2660 = vsel %vm408, %v2270, 0
    %v2663 = vsel %vm408, %v2275, 0
    %v2666 = vsel %vm408, %v2280, 0
    %v2669 = vsel %vm408, %v2285, 0
    %2671 = vmatprep.subr.mxu0 0.0
    %2672 = vmatpush1.msra.mxu0 %v269
    %2673 = vmatprep.subr.mxu0 0.0
    %2674 = vmatpush1.msra.mxu0 0.0
    %2675 = vmatprep.subr.mxu0 0.0
    %2676 = vmatpush1.msra.mxu0 0.0
    %2677 = vmatprep.subr.mxu0 0.0
    %2678 = vmatpush1.msra.mxu0 0.0
    %2679 = vmatprep.subr.mxu0 0.0
    %2680 = vmatpush1.msra.mxu0 0.0
    %2681 = vmatprep.subr.mxu0 0.0
    %2682 = vmatpush1.msra.mxu0 0.0
    %2683 = vmatprep.subr.mxu0 0.0
    %2684 = vmatpush1.msra.mxu0 0.0
    %2685 = vmatprep.subr.mxu0 0.0
    %2686 = vmatpush1.msra.mxu0 0.0
    %2687 = vmatprep.subr.mxu0 0.0
    %2688 = vmatpush1.msra.mxu0 0.0
    %2689 = vmatprep.subr.mxu0 0.0
    %2690 = vmatpush1.msra.mxu0 0.0
    %2691 = vmatprep.subr.mxu0 0.0
    %2692 = vmatpush1.msra.mxu0 0.0
    %2693 = vmatprep.subr.mxu0 0.0
    %2694 = vmatpush1.msra.mxu0 0.0
    %2695 = vmatprep.subr.mxu0 0.0
    %2696 = vmatpush1.msra.mxu0 0.0
    %2697 = vmatprep.subr.mxu0 0.0
    %2698 = vmatpush1.msra.mxu0 0.0
    %2699 = vmatprep.subr.mxu0 0.0
    %2700 = vmatpush1.msra.mxu0 0.0
    %2701 = vmatprep.subr.mxu0 0.0
    %2702 = vmatpush1.msra.mxu0 0.0
    %2703 = vmatprep.subr.mxu0 0.0
    %2704 = vmatpush1.msra.mxu0 0.0
    %2705 = vmatprep.subr.mxu0 0.0
    %2706 = vmatpush1.msra.mxu0 0.0
    %2707 = vmatprep.subr.mxu0 0.0
    %2708 = vmatpush1.msra.mxu0 0.0
    %2709 = vmatprep.subr.mxu0 0.0
    %2710 = vmatpush1.msra.mxu0 0.0
    %2711 = vmatprep.subr.mxu0 0.0
    %2712 = vmatpush1.msra.mxu0 0.0
    %2713 = vmatprep.subr.mxu0 0.0
    %2714 = vmatpush1.msra.mxu0 0.0
    %2715 = vmatprep.subr.mxu0 0.0
    %2716 = vmatpush1.msra.mxu0 0.0
    %2717 = vmatprep.subr.mxu0 0.0
    %2718 = vmatpush1.msra.mxu0 0.0
    %2719 = vmatprep.subr.mxu0 0.0
    %2720 = vmatpush1.msra.mxu0 0.0
    %2721 = vmatprep.subr.mxu0 0.0
    %2722 = vmatpush1.msra.mxu0 0.0
    %2723 = vmatprep.subr.mxu0 0.0
    %2724 = vmatpush1.msra.mxu0 0.0
    %2725 = vmatprep.subr.mxu0 0.0
    %2726 = vmatpush1.msra.mxu0 0.0
    %2727 = vmatprep.subr.mxu0 0.0
    %2728 = vmatpush1.msra.mxu0 0.0
    %2729 = vmatprep.subr.mxu0 0.0
    %2730 = vmatpush1.msra.mxu0 0.0
    %2731 = vmatprep.subr.mxu0 0.0
    %2732 = vmatpush1.msra.mxu0 0.0
    %2733 = vmatprep.subr.mxu0 0.0
    %2734 = vmatpush1.msra.mxu0 0.0
    %2735 = vmatprep.mubr.f32.mxu0 0.0
    %2736 = vmatmul.mubr.f32.gmra.mrb[0].mxu0 %v2660
    %v2737 = vpop.f32.mrb[0].mxu0
    %v2738 = vadd.f32 %v2641, %v2737
    %v2739 = vpop.f32.mrb[0].mxu0
    %2740 = vmatprep.mubr.f32.mxu0 0.0
    %2741 = vmatmul.mubr.f32.gmra.mrb[0].mxu0 %v2663
    %v2742 = vpop.f32.mrb[0].mxu0
    %v2743 = vadd.f32 %v2646, %v2742
    %v2744 = vpop.f32.mrb[0].mxu0
    %2745 = vmatprep.mubr.f32.mxu0 0.0
    %2746 = vmatmul.mubr.f32.gmra.mrb[0].mxu0 %v2666
    %v2747 = vpop.f32.mrb[0].mxu0
    %v2748 = vadd.f32 %v2651, %v2747
    %v2749 = vpop.f32.mrb[0].mxu0
    %2750 = vmatprep.mubr.f32.mxu0 0.0
    %2751 = vmatmul.mubr.f32.gmra.mrb[0].mxu0 %v2669
    %v2752 = vpop.f32.mrb[0].mxu0
    %v2753 = vadd.f32 %v2656, %v2752
    %v2754 = vpop.f32.mrb[0].mxu0
    %2755 = vdwg.mxu0
    %2756 = vrot.lane.b32.xlu0 %v246, 112
    %v2757 = vpop.permute.xlu0 %2756
    %2758 = vrot.lane.b32.xlu0 %v251, 112
    %v2759 = vpop.permute.xlu0 %2758
    %2760 = vrot.lane.b32.xlu0 %v256, 112
    %v2761 = vpop.permute.xlu0 %2760
    %2762 = vrot.lane.b32.xlu0 %v261, 112
    %v2763 = vpop.permute.xlu0 %2762
    %2764 = vrot.lane.b32.xlu0 %v2004, 112
    %v2765 = vpop.permute.xlu0 %2764
    %2766 = vrot.lane.b32.xlu0 %v2009, 112
    %v2767 = vpop.permute.xlu0 %2766
    %2768 = vrot.lane.b32.xlu0 %v2014, 112
    %v2769 = vpop.permute.xlu0 %2768
    %2770 = vrot.lane.b32.xlu0 %v2019, 112
    %v2771 = vpop.permute.xlu0 %2770
    %v2772 = vsel %vm408, %v2757, 0
    %v2774 = vsel %vm408, %v2759, 0
    %v2776 = vsel %vm408, %v2761, 0
    %v2778 = vsel %vm408, %v2763, 0
    %v2780 = vsel %vm408, %v2765, 0
    %v2782 = vsel %vm408, %v2767, 0
    %v2784 = vsel %vm408, %v2769, 0
    %v2786 = vsel %vm408, %v2771, 0
    %2788 = vmatprep.subr.mxu0 0.0
    %2789 = vmatpush1.xpose.msra.mxu0 %v2780
    %2790 = vmatprep.subr.mxu0 0.0
    %2791 = vmatpush1.xpose.msra.mxu0 %v2782
    %2792 = vmatprep.subr.mxu0 0.0
    %2793 = vmatpush1.xpose.msra.mxu0 %v2784
    %2794 = vmatprep.subr.mxu0 0.0
    %2795 = vmatpush1.xpose.msra.mxu0 %v2786
    %2796 = vmatprep.subr.mxu0 0.0
    %2797 = vmatpush1.xpose.msra.mxu0 0.0
    %2798 = vmatprep.subr.mxu0 0.0
    %2799 = vmatpush1.xpose.msra.mxu0 0.0
    %2800 = vmatprep.subr.mxu0 0.0
    %2801 = vmatpush1.xpose.msra.mxu0 0.0
    %2802 = vmatprep.subr.mxu0 0.0
    %2803 = vmatpush1.xpose.msra.mxu0 0.0
    %2804 = vmatprep.subr.mxu0 0.0
    %2805 = vmatpush1.xpose.msra.mxu0 0.0
    %2806 = vmatprep.subr.mxu0 0.0
    %2807 = vmatpush1.xpose.msra.mxu0 0.0
    %2808 = vmatprep.subr.mxu0 0.0
    %2809 = vmatpush1.xpose.msra.mxu0 0.0
    %2810 = vmatprep.subr.mxu0 0.0
    %2811 = vmatpush1.xpose.msra.mxu0 0.0
    %2812 = vmatprep.subr.mxu0 0.0
    %2813 = vmatpush1.xpose.msra.mxu0 0.0
    %2814 = vmatprep.subr.mxu0 0.0
    %2815 = vmatpush1.xpose.msra.mxu0 0.0
    %2816 = vmatprep.subr.mxu0 0.0
    %2817 = vmatpush1.xpose.msra.mxu0 0.0
    %2818 = vmatprep.subr.mxu0 0.0
    %2819 = vmatpush1.xpose.msra.mxu0 0.0
    %2820 = vmatprep.subr.mxu0 0.0
    %2821 = vmatpush1.xpose.msra.mxu0 0.0
    %2822 = vmatprep.subr.mxu0 0.0
    %2823 = vmatpush1.xpose.msra.mxu0 0.0
    %2824 = vmatprep.subr.mxu0 0.0
    %2825 = vmatpush1.xpose.msra.mxu0 0.0
    %2826 = vmatprep.subr.mxu0 0.0
    %2827 = vmatpush1.xpose.msra.mxu0 0.0
    %2828 = vmatprep.subr.mxu0 0.0
    %2829 = vmatpush1.xpose.msra.mxu0 0.0
    %2830 = vmatprep.subr.mxu0 0.0
    %2831 = vmatpush1.xpose.msra.mxu0 0.0
    %2832 = vmatprep.subr.mxu0 0.0
    %2833 = vmatpush1.xpose.msra.mxu0 0.0
    %2834 = vmatprep.subr.mxu0 0.0
    %2835 = vmatpush1.xpose.msra.mxu0 0.0
    %2836 = vmatprep.subr.mxu0 0.0
    %2837 = vmatpush1.xpose.msra.mxu0 0.0
    %2838 = vmatprep.subr.mxu0 0.0
    %2839 = vmatpush1.xpose.msra.mxu0 0.0
    %2840 = vmatprep.subr.mxu0 0.0
    %2841 = vmatpush1.xpose.msra.mxu0 0.0
    %2842 = vmatprep.subr.mxu0 0.0
    %2843 = vmatpush1.xpose.msra.mxu0 0.0
    %2844 = vmatprep.subr.mxu0 0.0
    %2845 = vmatpush1.xpose.msra.mxu0 0.0
    %2846 = vmatprep.subr.mxu0 0.0
    %2847 = vmatpush1.xpose.msra.mxu0 0.0
    %2848 = vmatprep.subr.mxu0 0.0
    %2849 = vmatpush1.xpose.msra.mxu0 0.0
    %2850 = vmatprep.subr.mxu0 0.0
    %2851 = vmatpush1.xpose.msra.mxu0 0.0
    %2852 = vmatprep.mubr.f32.mxu0 0.0
    %2853 = vmatmul.mubr.f32.gmra.mrb[0].mxu0 %v2772
    %v2854 = vpop.f32.mrb[0].mxu0
    %v2855 = vadd.f32 0.0, %v2854
    %v2856 = vpop.f32.mrb[0].mxu0
    %2857 = vmatprep.mubr.f32.mxu0 0.0
    %2858 = vmatmul.mubr.f32.gmra.mrb[0].mxu0 %v2774
    %v2859 = vpop.f32.mrb[0].mxu0
    %v2860 = vadd.f32 0.0, %v2859
    %v2861 = vpop.f32.mrb[0].mxu0
    %2862 = vmatprep.mubr.f32.mxu0 0.0
    %2863 = vmatmul.mubr.f32.gmra.mrb[0].mxu0 %v2776
    %v2864 = vpop.f32.mrb[0].mxu0
    %v2865 = vadd.f32 0.0, %v2864
    %v2866 = vpop.f32.mrb[0].mxu0
    %2867 = vmatprep.mubr.f32.mxu0 0.0
    %2868 = vmatmul.mubr.f32.gmra.mrb[0].mxu0 %v2778
    %v2869 = vpop.f32.mrb[0].mxu0
    %v2870 = vadd.f32 0.0, %v2869
    %v2871 = vpop.f32.mrb[0].mxu0
    %2872 = vdwg.mxu0
    %v2873 = vmul.f32 %v2855, 0.35355338
    %v2874 = vmul.f32 %v2860, 0.35355338
    %v2875 = vmul.f32 %v2865, 0.35355338
    %v2876 = vmul.f32 %v2870, 0.35355338
    %v2877 = vsel %vm134, %v2873, -inf
    %2878 = vmax.xlane.f32.xlu0 %v2877
    %v2879 = vpop.xlane.xlu0 %2878
    %v2880 = vsel %vm134, %v2874, -inf
    %2881 = vmax.xlane.f32.xlu0 %v2880
    %v2882 = vpop.xlane.xlu0 %2881
    %v2883 = vsel %vm134, %v2875, -inf
    %2884 = vmax.xlane.f32.xlu0 %v2883
    %v2885 = vpop.xlane.xlu0 %2884
    %v2886 = vsel %vm134, %v2876, -inf
    %2887 = vmax.xlane.f32.xlu0 %v2886
    %v2888 = vpop.xlane.xlu0 %2887
    %v2889 = vsub.f32 %v2873, %v2879
    %v2890 = vsub.f32 %v2874, %v2882
    %v2891 = vsub.f32 %v2875, %v2885
    %v2892 = vsub.f32 %v2876, %v2888
    %v2893 = vmul.f32 %v2889, 1.442695
    %v2894 = vpow.pop %v2893
    %v2895 = vmul.f32 %v2890, 1.442695
    %v2896 = vpow.pop %v2895
    %v2897 = vmul.f32 %v2891, 1.442695
    %v2898 = vpow.pop %v2897
    %v2899 = vmul.f32 %v2892, 1.442695
    %v2900 = vpow.pop %v2899
    %v2901 = vsel %vm134, %v2894, 0.0
    %2902 = vadd.xlane.f32.xlu0 %v2901
    %v2903 = vpop.xlane.xlu0 %2902
    %v2904 = vsel %vm134, %v2896, 0.0
    %2905 = vadd.xlane.f32.xlu0 %v2904
    %v2906 = vpop.xlane.xlu0 %2905
    %v2907 = vsel %vm134, %v2898, 0.0
    %2908 = vadd.xlane.f32.xlu0 %v2907
    %v2909 = vpop.xlane.xlu0 %2908
    %v2910 = vsel %vm134, %v2900, 0.0
    %2911 = vadd.xlane.f32.xlu0 %v2910
    %v2912 = vpop.xlane.xlu0 %2911
    %v2913 = vrcp.pop %v2903
    %v2914 = vrcp.pop %v2906
    %v2915 = vrcp.pop %v2909
    %v2916 = vrcp.pop %v2912
    %v2917 = vmul.f32 %v2894, %v2913
    %v2918 = vmul.f32 %v2896, %v2914
    %v2919 = vmul.f32 %v2898, %v2915
    %v2920 = vmul.f32 %v2900, %v2916
    %2921 = vrot.lane.b32.xlu0 %v246, 80
    %v2922 = vpop.permute.xlu0 %2921
    %2923 = vrot.lane.b32.xlu0 %v251, 80
    %v2924 = vpop.permute.xlu0 %2923
    %2925 = vrot.lane.b32.xlu0 %v256, 80
    %v2926 = vpop.permute.xlu0 %2925
    %2927 = vrot.lane.b32.xlu0 %v261, 80
    %v2928 = vpop.permute.xlu0 %2927
    %v2934 = vsel %vm134, %v2917, 0
    %v2937 = vsel %vm134, %v2918, 0
    %v2940 = vsel %vm134, %v2919, 0
    %v2943 = vsel %vm134, %v2920, 0
    %2945 = vmatprep.subr.mxu0 0.0
    %2946 = vmatpush1.msra.mxu0 %v2922
    %2947 = vmatprep.subr.mxu0 0.0
    %2948 = vmatpush1.msra.mxu0 %v2924
    %2949 = vmatprep.subr.mxu0 0.0
    %2950 = vmatpush1.msra.mxu0 %v2926
    %2951 = vmatprep.subr.mxu0 0.0
    %2952 = vmatpush1.msra.mxu0 %v2928
    %2953 = vmatprep.subr.mxu0 0.0
    %2954 = vmatpush1.msra.mxu0 0.0
    %2955 = vmatprep.subr.mxu0 0.0
    %2956 = vmatpush1.msra.mxu0 0.0
    %2957 = vmatprep.subr.mxu0 0.0
    %2958 = vmatpush1.msra.mxu0 0.0
    %2959 = vmatprep.subr.mxu0 0.0
    %2960 = vmatpush1.msra.mxu0 0.0
    %2961 = vmatprep.subr.mxu0 0.0
    %2962 = vmatpush1.msra.mxu0 0.0
    %2963 = vmatprep.subr.mxu0 0.0
    %2964 = vmatpush1.msra.mxu0 0.0
    %2965 = vmatprep.subr.mxu0 0.0
    %2966 = vmatpush1.msra.mxu0 0.0
    %2967 = vmatprep.subr.mxu0 0.0
    %2968 = vmatpush1.msra.mxu0 0.0
    %2969 = vmatprep.subr.mxu0 0.0
    %2970 = vmatpush1.msra.mxu0 0.0
    %2971 = vmatprep.subr.mxu0 0.0
    %2972 = vmatpush1.msra.mxu0 0.0
    %2973 = vmatprep.subr.mxu0 0.0
    %2974 = vmatpush1.msra.mxu0 0.0
    %2975 = vmatprep.subr.mxu0 0.0
    %2976 = vmatpush1.msra.mxu0 0.0
    %2977 = vmatprep.subr.mxu0 0.0
    %2978 = vmatpush1.msra.mxu0 0.0
    %2979 = vmatprep.subr.mxu0 0.0
    %2980 = vmatpush1.msra.mxu0 0.0
    %2981 = vmatprep.subr.mxu0 0.0
    %2982 = vmatpush1.msra.mxu0 0.0
    %2983 = vmatprep.subr.mxu0 0.0
    %2984 = vmatpush1.msra.mxu0 0.0
    %2985 = vmatprep.subr.mxu0 0.0
    %2986 = vmatpush1.msra.mxu0 0.0
    %2987 = vmatprep.subr.mxu0 0.0
    %2988 = vmatpush1.msra.mxu0 0.0
    %2989 = vmatprep.subr.mxu0 0.0
    %2990 = vmatpush1.msra.mxu0 0.0
    %2991 = vmatprep.subr.mxu0 0.0
    %2992 = vmatpush1.msra.mxu0 0.0
    %2993 = vmatprep.subr.mxu0 0.0
    %2994 = vmatpush1.msra.mxu0 0.0
    %2995 = vmatprep.subr.mxu0 0.0
    %2996 = vmatpush1.msra.mxu0 0.0
    %2997 = vmatprep.subr.mxu0 0.0
    %2998 = vmatpush1.msra.mxu0 0.0
    %2999 = vmatprep.subr.mxu0 0.0
    %3000 = vmatpush1.msra.mxu0 0.0
    %3001 = vmatprep.subr.mxu0 0.0
    %3002 = vmatpush1.msra.mxu0 0.0
    %3003 = vmatprep.subr.mxu0 0.0
    %3004 = vmatpush1.msra.mxu0 0.0
    %3005 = vmatprep.subr.mxu0 0.0
    %3006 = vmatpush1.msra.mxu0 0.0
    %3007 = vmatprep.subr.mxu0 0.0
    %3008 = vmatpush1.msra.mxu0 0.0
    %3009 = vmatprep.mubr.f32.mxu0 0.0
    %3010 = vmatmul.mubr.f32.gmra.mrb[0].mxu0 %v2934
    %v3011 = vpop.f32.mrb[0].mxu0
    %v3012 = vadd.f32 0.0, %v3011
    %v3013 = vpop.f32.mrb[0].mxu0
    %3014 = vmatprep.mubr.f32.mxu0 0.0
    %3015 = vmatmul.mubr.f32.gmra.mrb[0].mxu0 %v2937
    %v3016 = vpop.f32.mrb[0].mxu0
    %v3017 = vadd.f32 0.0, %v3016
    %v3018 = vpop.f32.mrb[0].mxu0
    %3019 = vmatprep.mubr.f32.mxu0 0.0
    %3020 = vmatmul.mubr.f32.gmra.mrb[0].mxu0 %v2940
    %v3021 = vpop.f32.mrb[0].mxu0
    %v3022 = vadd.f32 0.0, %v3021
    %v3023 = vpop.f32.mrb[0].mxu0
    %3024 = vmatprep.mubr.f32.mxu0 0.0
    %3025 = vmatmul.mubr.f32.gmra.mrb[0].mxu0 %v2943
    %v3026 = vpop.f32.mrb[0].mxu0
    %v3027 = vadd.f32 0.0, %v3026
    %v3028 = vpop.f32.mrb[0].mxu0
    %3029 = vdwg.mxu0
    %v3031 = vsel %vm408, %v3012, 0
    %v3034 = vsel %vm408, %v3017, 0
    %v3037 = vsel %vm408, %v3022, 0
    %v3040 = vsel %vm408, %v3027, 0
    %3042 = vmatprep.subr.mxu0 0.0
    %3043 = vmatpush1.msra.mxu0 %v271
    %3044 = vmatprep.subr.mxu0 0.0
    %3045 = vmatpush1.msra.mxu0 0.0
    %3046 = vmatprep.subr.mxu0 0.0
    %3047 = vmatpush1.msra.mxu0 0.0
    %3048 = vmatprep.subr.mxu0 0.0
    %3049 = vmatpush1.msra.mxu0 0.0
    %3050 = vmatprep.subr.mxu0 0.0
    %3051 = vmatpush1.msra.mxu0 0.0
    %3052 = vmatprep.subr.mxu0 0.0
    %3053 = vmatpush1.msra.mxu0 0.0
    %3054 = vmatprep.subr.mxu0 0.0
    %3055 = vmatpush1.msra.mxu0 0.0
    %3056 = vmatprep.subr.mxu0 0.0
    %3057 = vmatpush1.msra.mxu0 0.0
    %3058 = vmatprep.subr.mxu0 0.0
    %3059 = vmatpush1.msra.mxu0 0.0
    %3060 = vmatprep.subr.mxu0 0.0
    %3061 = vmatpush1.msra.mxu0 0.0
    %3062 = vmatprep.subr.mxu0 0.0
    %3063 = vmatpush1.msra.mxu0 0.0
    %3064 = vmatprep.subr.mxu0 0.0
    %3065 = vmatpush1.msra.mxu0 0.0
    %3066 = vmatprep.subr.mxu0 0.0
    %3067 = vmatpush1.msra.mxu0 0.0
    %3068 = vmatprep.subr.mxu0 0.0
    %3069 = vmatpush1.msra.mxu0 0.0
    %3070 = vmatprep.subr.mxu0 0.0
    %3071 = vmatpush1.msra.mxu0 0.0
    %3072 = vmatprep.subr.mxu0 0.0
    %3073 = vmatpush1.msra.mxu0 0.0
    %3074 = vmatprep.subr.mxu0 0.0
    %3075 = vmatpush1.msra.mxu0 0.0
    %3076 = vmatprep.subr.mxu0 0.0
    %3077 = vmatpush1.msra.mxu0 0.0
    %3078 = vmatprep.subr.mxu0 0.0
    %3079 = vmatpush1.msra.mxu0 0.0
    %3080 = vmatprep.subr.mxu0 0.0
    %3081 = vmatpush1.msra.mxu0 0.0
    %3082 = vmatprep.subr.mxu0 0.0
    %3083 = vmatpush1.msra.mxu0 0.0
    %3084 = vmatprep.subr.mxu0 0.0
    %3085 = vmatpush1.msra.mxu0 0.0
    %3086 = vmatprep.subr.mxu0 0.0
    %3087 = vmatpush1.msra.mxu0 0.0
    %3088 = vmatprep.subr.mxu0 0.0
    %3089 = vmatpush1.msra.mxu0 0.0
    %3090 = vmatprep.subr.mxu0 0.0
    %3091 = vmatpush1.msra.mxu0 0.0
    %3092 = vmatprep.subr.mxu0 0.0
    %3093 = vmatpush1.msra.mxu0 0.0
    %3094 = vmatprep.subr.mxu0 0.0
    %3095 = vmatpush1.msra.mxu0 0.0
    %3096 = vmatprep.subr.mxu0 0.0
    %3097 = vmatpush1.msra.mxu0 0.0
    %3098 = vmatprep.subr.mxu0 0.0
    %3099 = vmatpush1.msra.mxu0 0.0
    %3100 = vmatprep.subr.mxu0 0.0
    %3101 = vmatpush1.msra.mxu0 0.0
    %3102 = vmatprep.subr.mxu0 0.0
    %3103 = vmatpush1.msra.mxu0 0.0
    %3104 = vmatprep.subr.mxu0 0.0
    %3105 = vmatpush1.msra.mxu0 0.0
    %3106 = vmatprep.mubr.f32.mxu0 0.0
    %3107 = vmatmul.mubr.f32.gmra.mrb[0].mxu0 %v3031
    %v3108 = vpop.f32.mrb[0].mxu0
    %v3109 = vadd.f32 0.0, %v3108
    %v3110 = vpop.f32.mrb[0].mxu0
    %3111 = vmatprep.mubr.f32.mxu0 0.0
    %3112 = vmatmul.mubr.f32.gmra.mrb[0].mxu0 %v3034
    %v3113 = vpop.f32.mrb[0].mxu0
    %v3114 = vadd.f32 0.0, %v3113
    %v3115 = vpop.f32.mrb[0].mxu0
    %3116 = vmatprep.mubr.f32.mxu0 0.0
    %3117 = vmatmul.mubr.f32.gmra.mrb[0].mxu0 %v3037
    %v3118 = vpop.f32.mrb[0].mxu0
    %v3119 = vadd.f32 0.0, %v3118
    %v3120 = vpop.f32.mrb[0].mxu0
    %3121 = vmatprep.mubr.f32.mxu0 0.0
    %3122 = vmatmul.mubr.f32.gmra.mrb[0].mxu0 %v3040
    %v3123 = vpop.f32.mrb[0].mxu0
    %v3124 = vadd.f32 0.0, %v3123
    %v3125 = vpop.f32.mrb[0].mxu0
    %3126 = vdwg.mxu0
    %v3127 = vadd.f32 %v2738, %v3109
    %v3128 = vadd.f32 %v2743, %v3114
    %v3129 = vadd.f32 %v2748, %v3119
    %v3130 = vadd.f32 %v2753, %v3124
    %3131 = vrot.lane.b32.xlu0 %v246, 104
    %v3132 = vpop.permute.xlu0 %3131
    %3133 = vrot.lane.b32.xlu0 %v251, 104
    %v3134 = vpop.permute.xlu0 %3133
    %3135 = vrot.lane.b32.xlu0 %v256, 104
    %v3136 = vpop.permute.xlu0 %3135
    %3137 = vrot.lane.b32.xlu0 %v261, 104
    %v3138 = vpop.permute.xlu0 %3137
    %3139 = vrot.lane.b32.xlu0 %v2004, 104
    %v3140 = vpop.permute.xlu0 %3139
    %3141 = vrot.lane.b32.xlu0 %v2009, 104
    %v3142 = vpop.permute.xlu0 %3141
    %3143 = vrot.lane.b32.xlu0 %v2014, 104
    %v3144 = vpop.permute.xlu0 %3143
    %3145 = vrot.lane.b32.xlu0 %v2019, 104
    %v3146 = vpop.permute.xlu0 %3145
    %v3147 = vsel %vm408, %v3132, 0
    %v3149 = vsel %vm408, %v3134, 0
    %v3151 = vsel %vm408, %v3136, 0
    %v3153 = vsel %vm408, %v3138, 0
    %v3155 = vsel %vm408, %v3140, 0
    %v3157 = vsel %vm408, %v3142, 0
    %v3159 = vsel %vm408, %v3144, 0
    %v3161 = vsel %vm408, %v3146, 0
    %3163 = vmatprep.subr.mxu0 0.0
    %3164 = vmatpush1.xpose.msra.mxu0 %v3155
    %3165 = vmatprep.subr.mxu0 0.0
    %3166 = vmatpush1.xpose.msra.mxu0 %v3157
    %3167 = vmatprep.subr.mxu0 0.0
    %3168 = vmatpush1.xpose.msra.mxu0 %v3159
    %3169 = vmatprep.subr.mxu0 0.0
    %3170 = vmatpush1.xpose.msra.mxu0 %v3161
    %3171 = vmatprep.subr.mxu0 0.0
    %3172 = vmatpush1.xpose.msra.mxu0 0.0
    %3173 = vmatprep.subr.mxu0 0.0
    %3174 = vmatpush1.xpose.msra.mxu0 0.0
    %3175 = vmatprep.subr.mxu0 0.0
    %3176 = vmatpush1.xpose.msra.mxu0 0.0
    %3177 = vmatprep.subr.mxu0 0.0
    %3178 = vmatpush1.xpose.msra.mxu0 0.0
    %3179 = vmatprep.subr.mxu0 0.0
    %3180 = vmatpush1.xpose.msra.mxu0 0.0
    %3181 = vmatprep.subr.mxu0 0.0
    %3182 = vmatpush1.xpose.msra.mxu0 0.0
    %3183 = vmatprep.subr.mxu0 0.0
    %3184 = vmatpush1.xpose.msra.mxu0 0.0
    %3185 = vmatprep.subr.mxu0 0.0
    %3186 = vmatpush1.xpose.msra.mxu0 0.0
    %3187 = vmatprep.subr.mxu0 0.0
    %3188 = vmatpush1.xpose.msra.mxu0 0.0
    %3189 = vmatprep.subr.mxu0 0.0
    %3190 = vmatpush1.xpose.msra.mxu0 0.0
    %3191 = vmatprep.subr.mxu0 0.0
    %3192 = vmatpush1.xpose.msra.mxu0 0.0
    %3193 = vmatprep.subr.mxu0 0.0
    %3194 = vmatpush1.xpose.msra.mxu0 0.0
    %3195 = vmatprep.subr.mxu0 0.0
    %3196 = vmatpush1.xpose.msra.mxu0 0.0
    %3197 = vmatprep.subr.mxu0 0.0
    %3198 = vmatpush1.xpose.msra.mxu0 0.0
    %3199 = vmatprep.subr.mxu0 0.0
    %3200 = vmatpush1.xpose.msra.mxu0 0.0
    %3201 = vmatprep.subr.mxu0 0.0
    %3202 = vmatpush1.xpose.msra.mxu0 0.0
    %3203 = vmatprep.subr.mxu0 0.0
    %3204 = vmatpush1.xpose.msra.mxu0 0.0
    %3205 = vmatprep.subr.mxu0 0.0
    %3206 = vmatpush1.xpose.msra.mxu0 0.0
    %3207 = vmatprep.subr.mxu0 0.0
    %3208 = vmatpush1.xpose.msra.mxu0 0.0
    %3209 = vmatprep.subr.mxu0 0.0
    %3210 = vmatpush1.xpose.msra.mxu0 0.0
    %3211 = vmatprep.subr.mxu0 0.0
    %3212 = vmatpush1.xpose.msra.mxu0 0.0
    %3213 = vmatprep.subr.mxu0 0.0
    %3214 = vmatpush1.xpose.msra.mxu0 0.0
    %3215 = vmatprep.subr.mxu0 0.0
    %3216 = vmatpush1.xpose.msra.mxu0 0.0
    %3217 = vmatprep.subr.mxu0 0.0
    %3218 = vmatpush1.xpose.msra.mxu0 0.0
    %3219 = vmatprep.subr.mxu0 0.0
    %3220 = vmatpush1.xpose.msra.mxu0 0.0
    %3221 = vmatprep.subr.mxu0 0.0
    %3222 = vmatpush1.xpose.msra.mxu0 0.0
    %3223 = vmatprep.subr.mxu0 0.0
    %3224 = vmatpush1.xpose.msra.mxu0 0.0
    %3225 = vmatprep.subr.mxu0 0.0
    %3226 = vmatpush1.xpose.msra.mxu0 0.0
    %3227 = vmatprep.mubr.f32.mxu0 0.0
    %3228 = vmatmul.mubr.f32.gmra.mrb[0].mxu0 %v3147
    %v3229 = vpop.f32.mrb[0].mxu0
    %v3230 = vadd.f32 0.0, %v3229
    %v3231 = vpop.f32.mrb[0].mxu0
    %3232 = vmatprep.mubr.f32.mxu0 0.0
    %3233 = vmatmul.mubr.f32.gmra.mrb[0].mxu0 %v3149
    %v3234 = vpop.f32.mrb[0].mxu0
    %v3235 = vadd.f32 0.0, %v3234
    %v3236 = vpop.f32.mrb[0].mxu0
    %3237 = vmatprep.mubr.f32.mxu0 0.0
    %3238 = vmatmul.mubr.f32.gmra.mrb[0].mxu0 %v3151
    %v3239 = vpop.f32.mrb[0].mxu0
    %v3240 = vadd.f32 0.0, %v3239
    %v3241 = vpop.f32.mrb[0].mxu0
    %3242 = vmatprep.mubr.f32.mxu0 0.0
    %3243 = vmatmul.mubr.f32.gmra.mrb[0].mxu0 %v3153
    %v3244 = vpop.f32.mrb[0].mxu0
    %v3245 = vadd.f32 0.0, %v3244
    %v3246 = vpop.f32.mrb[0].mxu0
    %3247 = vdwg.mxu0
    %v3248 = vmul.f32 %v3230, 0.35355338
    %v3249 = vmul.f32 %v3235, 0.35355338
    %v3250 = vmul.f32 %v3240, 0.35355338
    %v3251 = vmul.f32 %v3245, 0.35355338
    %v3252 = vsel %vm134, %v3248, -inf
    %3253 = vmax.xlane.f32.xlu0 %v3252
    %v3254 = vpop.xlane.xlu0 %3253
    %v3255 = vsel %vm134, %v3249, -inf
    %3256 = vmax.xlane.f32.xlu0 %v3255
    %v3257 = vpop.xlane.xlu0 %3256
    %v3258 = vsel %vm134, %v3250, -inf
    %3259 = vmax.xlane.f32.xlu0 %v3258
    %v3260 = vpop.xlane.xlu0 %3259
    %v3261 = vsel %vm134, %v3251, -inf
    %3262 = vmax.xlane.f32.xlu0 %v3261
    %v3263 = vpop.xlane.xlu0 %3262
    %v3264 = vsub.f32 %v3248, %v3254
    %v3265 = vsub.f32 %v3249, %v3257
    %v3266 = vsub.f32 %v3250, %v3260
    %v3267 = vsub.f32 %v3251, %v3263
    %v3268 = vmul.f32 %v3264, 1.442695
    %v3269 = vpow.pop %v3268
    %v3270 = vmul.f32 %v3265, 1.442695
    %v3271 = vpow.pop %v3270
    %v3272 = vmul.f32 %v3266, 1.442695
    %v3273 = vpow.pop %v3272
    %v3274 = vmul.f32 %v3267, 1.442695
    %v3275 = vpow.pop %v3274
    %v3276 = vsel %vm134, %v3269, 0.0
    %3277 = vadd.xlane.f32.xlu0 %v3276
    %v3278 = vpop.xlane.xlu0 %3277
    %v3279 = vsel %vm134, %v3271, 0.0
    %3280 = vadd.xlane.f32.xlu0 %v3279
    %v3281 = vpop.xlane.xlu0 %3280
    %v3282 = vsel %vm134, %v3273, 0.0
    %3283 = vadd.xlane.f32.xlu0 %v3282
    %v3284 = vpop.xlane.xlu0 %3283
    %v3285 = vsel %vm134, %v3275, 0.0
    %3286 = vadd.xlane.f32.xlu0 %v3285
    %v3287 = vpop.xlane.xlu0 %3286
    %v3288 = vrcp.pop %v3278
    %v3289 = vrcp.pop %v3281
    %v3290 = vrcp.pop %v3284
    %v3291 = vrcp.pop %v3287
    %v3292 = vmul.f32 %v3269, %v3288
    %v3293 = vmul.f32 %v3271, %v3289
    %v3294 = vmul.f32 %v3273, %v3290
    %v3295 = vmul.f32 %v3275, %v3291
    %3296 = vrot.lane.b32.xlu0 %v246, 72
    %v3297 = vpop.permute.xlu0 %3296
    %3298 = vrot.lane.b32.xlu0 %v251, 72
    %v3299 = vpop.permute.xlu0 %3298
    %3300 = vrot.lane.b32.xlu0 %v256, 72
    %v3301 = vpop.permute.xlu0 %3300
    %3302 = vrot.lane.b32.xlu0 %v261, 72
    %v3303 = vpop.permute.xlu0 %3302
    %v3309 = vsel %vm134, %v3292, 0
    %v3312 = vsel %vm134, %v3293, 0
    %v3315 = vsel %vm134, %v3294, 0
    %v3318 = vsel %vm134, %v3295, 0
    %3320 = vmatprep.subr.mxu0 0.0
    %3321 = vmatpush1.msra.mxu0 %v3297
    %3322 = vmatprep.subr.mxu0 0.0
    %3323 = vmatpush1.msra.mxu0 %v3299
    %3324 = vmatprep.subr.mxu0 0.0
    %3325 = vmatpush1.msra.mxu0 %v3301
    %3326 = vmatprep.subr.mxu0 0.0
    %3327 = vmatpush1.msra.mxu0 %v3303
    %3328 = vmatprep.subr.mxu0 0.0
    %3329 = vmatpush1.msra.mxu0 0.0
    %3330 = vmatprep.subr.mxu0 0.0
    %3331 = vmatpush1.msra.mxu0 0.0
    %3332 = vmatprep.subr.mxu0 0.0
    %3333 = vmatpush1.msra.mxu0 0.0
    %3334 = vmatprep.subr.mxu0 0.0
    %3335 = vmatpush1.msra.mxu0 0.0
    %3336 = vmatprep.subr.mxu0 0.0
    %3337 = vmatpush1.msra.mxu0 0.0
    %3338 = vmatprep.subr.mxu0 0.0
    %3339 = vmatpush1.msra.mxu0 0.0
    %3340 = vmatprep.subr.mxu0 0.0
    %3341 = vmatpush1.msra.mxu0 0.0
    %3342 = vmatprep.subr.mxu0 0.0
    %3343 = vmatpush1.msra.mxu0 0.0
    %3344 = vmatprep.subr.mxu0 0.0
    %3345 = vmatpush1.msra.mxu0 0.0
    %3346 = vmatprep.subr.mxu0 0.0
    %3347 = vmatpush1.msra.mxu0 0.0
    %3348 = vmatprep.subr.mxu0 0.0
    %3349 = vmatpush1.msra.mxu0 0.0
    %3350 = vmatprep.subr.mxu0 0.0
    %3351 = vmatpush1.msra.mxu0 0.0
    %3352 = vmatprep.subr.mxu0 0.0
    %3353 = vmatpush1.msra.mxu0 0.0
    %3354 = vmatprep.subr.mxu0 0.0
    %3355 = vmatpush1.msra.mxu0 0.0
    %3356 = vmatprep.subr.mxu0 0.0
    %3357 = vmatpush1.msra.mxu0 0.0
    %3358 = vmatprep.subr.mxu0 0.0
    %3359 = vmatpush1.msra.mxu0 0.0
    %3360 = vmatprep.subr.mxu0 0.0
    %3361 = vmatpush1.msra.mxu0 0.0
    %3362 = vmatprep.subr.mxu0 0.0
    %3363 = vmatpush1.msra.mxu0 0.0
    %3364 = vmatprep.subr.mxu0 0.0
    %3365 = vmatpush1.msra.mxu0 0.0
    %3366 = vmatprep.subr.mxu0 0.0
    %3367 = vmatpush1.msra.mxu0 0.0
    %3368 = vmatprep.subr.mxu0 0.0
    %3369 = vmatpush1.msra.mxu0 0.0
    %3370 = vmatprep.subr.mxu0 0.0
    %3371 = vmatpush1.msra.mxu0 0.0
    %3372 = vmatprep.subr.mxu0 0.0
    %3373 = vmatpush1.msra.mxu0 0.0
    %3374 = vmatprep.subr.mxu0 0.0
    %3375 = vmatpush1.msra.mxu0 0.0
    %3376 = vmatprep.subr.mxu0 0.0
    %3377 = vmatpush1.msra.mxu0 0.0
    %3378 = vmatprep.subr.mxu0 0.0
    %3379 = vmatpush1.msra.mxu0 0.0
    %3380 = vmatprep.subr.mxu0 0.0
    %3381 = vmatpush1.msra.mxu0 0.0
    %3382 = vmatprep.subr.mxu0 0.0
    %3383 = vmatpush1.msra.mxu0 0.0
    %3384 = vmatprep.mubr.f32.mxu0 0.0
    %3385 = vmatmul.mubr.f32.gmra.mrb[0].mxu0 %v3309
    %v3386 = vpop.f32.mrb[0].mxu0
    %v3387 = vadd.f32 0.0, %v3386
    %v3388 = vpop.f32.mrb[0].mxu0
    %3389 = vmatprep.mubr.f32.mxu0 0.0
    %3390 = vmatmul.mubr.f32.gmra.mrb[0].mxu0 %v3312
    %v3391 = vpop.f32.mrb[0].mxu0
    %v3392 = vadd.f32 0.0, %v3391
    %v3393 = vpop.f32.mrb[0].mxu0
    %3394 = vmatprep.mubr.f32.mxu0 0.0
    %3395 = vmatmul.mubr.f32.gmra.mrb[0].mxu0 %v3315
    %v3396 = vpop.f32.mrb[0].mxu0
    %v3397 = vadd.f32 0.0, %v3396
    %v3398 = vpop.f32.mrb[0].mxu0
    %3399 = vmatprep.mubr.f32.mxu0 0.0
    %3400 = vmatmul.mubr.f32.gmra.mrb[0].mxu0 %v3318
    %v3401 = vpop.f32.mrb[0].mxu0
    %v3402 = vadd.f32 0.0, %v3401
    %v3403 = vpop.f32.mrb[0].mxu0
    %3404 = vdwg.mxu0
    %v3406 = vsel %vm408, %v3387, 0
    %v3409 = vsel %vm408, %v3392, 0
    %v3412 = vsel %vm408, %v3397, 0
    %v3415 = vsel %vm408, %v3402, 0
    %3417 = vmatprep.subr.mxu0 0.0
    %3418 = vmatpush1.msra.mxu0 %v272
    %3419 = vmatprep.subr.mxu0 0.0
    %3420 = vmatpush1.msra.mxu0 0.0
    %3421 = vmatprep.subr.mxu0 0.0
    %3422 = vmatpush1.msra.mxu0 0.0
    %3423 = vmatprep.subr.mxu0 0.0
    %3424 = vmatpush1.msra.mxu0 0.0
    %3425 = vmatprep.subr.mxu0 0.0
    %3426 = vmatpush1.msra.mxu0 0.0
    %3427 = vmatprep.subr.mxu0 0.0
    %3428 = vmatpush1.msra.mxu0 0.0
    %3429 = vmatprep.subr.mxu0 0.0
    %3430 = vmatpush1.msra.mxu0 0.0
    %3431 = vmatprep.subr.mxu0 0.0
    %3432 = vmatpush1.msra.mxu0 0.0
    %3433 = vmatprep.subr.mxu0 0.0
    %3434 = vmatpush1.msra.mxu0 0.0
    %3435 = vmatprep.subr.mxu0 0.0
    %3436 = vmatpush1.msra.mxu0 0.0
    %3437 = vmatprep.subr.mxu0 0.0
    %3438 = vmatpush1.msra.mxu0 0.0
    %3439 = vmatprep.subr.mxu0 0.0
    %3440 = vmatpush1.msra.mxu0 0.0
    %3441 = vmatprep.subr.mxu0 0.0
    %3442 = vmatpush1.msra.mxu0 0.0
    %3443 = vmatprep.subr.mxu0 0.0
    %3444 = vmatpush1.msra.mxu0 0.0
    %3445 = vmatprep.subr.mxu0 0.0
    %3446 = vmatpush1.msra.mxu0 0.0
    %3447 = vmatprep.subr.mxu0 0.0
    %3448 = vmatpush1.msra.mxu0 0.0
    %3449 = vmatprep.subr.mxu0 0.0
    %3450 = vmatpush1.msra.mxu0 0.0
    %3451 = vmatprep.subr.mxu0 0.0
    %3452 = vmatpush1.msra.mxu0 0.0
    %3453 = vmatprep.subr.mxu0 0.0
    %3454 = vmatpush1.msra.mxu0 0.0
    %3455 = vmatprep.subr.mxu0 0.0
    %3456 = vmatpush1.msra.mxu0 0.0
    %3457 = vmatprep.subr.mxu0 0.0
    %3458 = vmatpush1.msra.mxu0 0.0
    %3459 = vmatprep.subr.mxu0 0.0
    %3460 = vmatpush1.msra.mxu0 0.0
    %3461 = vmatprep.subr.mxu0 0.0
    %3462 = vmatpush1.msra.mxu0 0.0
    %3463 = vmatprep.subr.mxu0 0.0
    %3464 = vmatpush1.msra.mxu0 0.0
    %3465 = vmatprep.subr.mxu0 0.0
    %3466 = vmatpush1.msra.mxu0 0.0
    %3467 = vmatprep.subr.mxu0 0.0
    %3468 = vmatpush1.msra.mxu0 0.0
    %3469 = vmatprep.subr.mxu0 0.0
    %3470 = vmatpush1.msra.mxu0 0.0
    %3471 = vmatprep.subr.mxu0 0.0
    %3472 = vmatpush1.msra.mxu0 0.0
    %3473 = vmatprep.subr.mxu0 0.0
    %3474 = vmatpush1.msra.mxu0 0.0
    %3475 = vmatprep.subr.mxu0 0.0
    %3476 = vmatpush1.msra.mxu0 0.0
    %3477 = vmatprep.subr.mxu0 0.0
    %3478 = vmatpush1.msra.mxu0 0.0
    %3479 = vmatprep.subr.mxu0 0.0
    %3480 = vmatpush1.msra.mxu0 0.0
    %3481 = vmatprep.mubr.f32.mxu0 0.0
    %3482 = vmatmul.mubr.f32.gmra.mrb[0].mxu0 %v3406
    %v3483 = vpop.f32.mrb[0].mxu0
    %v3484 = vadd.f32 0.0, %v3483
    %v3485 = vpop.f32.mrb[0].mxu0
    %3486 = vmatprep.mubr.f32.mxu0 0.0
    %3487 = vmatmul.mubr.f32.gmra.mrb[0].mxu0 %v3409
    %v3488 = vpop.f32.mrb[0].mxu0
    %v3489 = vadd.f32 0.0, %v3488
    %v3490 = vpop.f32.mrb[0].mxu0
    %3491 = vmatprep.mubr.f32.mxu0 0.0
    %3492 = vmatmul.mubr.f32.gmra.mrb[0].mxu0 %v3412
    %v3493 = vpop.f32.mrb[0].mxu0
    %v3494 = vadd.f32 0.0, %v3493
    %v3495 = vpop.f32.mrb[0].mxu0
    %3496 = vmatprep.mubr.f32.mxu0 0.0
    %3497 = vmatmul.mubr.f32.gmra.mrb[0].mxu0 %v3415
    %v3498 = vpop.f32.mrb[0].mxu0
    %v3499 = vadd.f32 0.0, %v3498
    %v3500 = vpop.f32.mrb[0].mxu0
    %3501 = vdwg.mxu0
    %v3502 = vadd.f32 %v3127, %v3484
    %v3503 = vadd.f32 %v3128, %v3489
    %v3504 = vadd.f32 %v3129, %v3494
    %v3505 = vadd.f32 %v3130, %v3499
    %v3506 = vld [vmem:[#allocation7] sm:$0x1]
    %v3508 = vlaneseq
    %v3509 = vshrl.u32 %v3508, 7
    %v3510 = vsub.s32 0, %v3509
    %v3511 = vrot.slane %v3506, %v3510
    %v3513 = vadd.f32 %v1889, %v3511
    %v3514 = vadd.f32 %v1890, %v3511
    %v3515 = vadd.f32 %v1891, %v3511
    %v3516 = vadd.f32 %v1892, %v3511
    %v3517 = vadd.f32 %v3502, %v3511
    %v3518 = vadd.f32 %v3503, %v3511
    %v3519 = vadd.f32 %v3504, %v3511
    %v3520 = vadd.f32 %v3505, %v3511
    %v3521 = vadd.f32 %v115, %v3513
    %v3522 = vadd.f32 %v116, %v3514
    %v3523 = vadd.f32 %v117, %v3515
    %v3524 = vadd.f32 %v118, %v3516
    %v3525 = vadd.f32 %v119, %v3517
    %v3526 = vadd.f32 %v120, %v3518
    %v3527 = vadd.f32 %v121, %v3519
    %v3528 = vadd.f32 %v122, %v3520
    %v3529 = vsel %vm134, %v3521, 0.0
    %3530 = vadd.xlane.f32.xlu0 %v3529
    %v3531 = vpop.xlane.xlu0 %3530
    %v3532 = vsel %vm134, %v3522, 0.0
    %3533 = vadd.xlane.f32.xlu0 %v3532
    %v3534 = vpop.xlane.xlu0 %3533
    %v3535 = vsel %vm134, %v3523, 0.0
    %3536 = vadd.xlane.f32.xlu0 %v3535
    %v3537 = vpop.xlane.xlu0 %3536
    %v3538 = vsel %vm134, %v3524, 0.0
    %3539 = vadd.xlane.f32.xlu0 %v3538
    %v3540 = vpop.xlane.xlu0 %3539
    %v3541 = vsel %vm134, %v3525, 0.0
    %3542 = vadd.xlane.f32.xlu0 %v3541
    %v3543 = vpop.xlane.xlu0 %3542
    %v3544 = vsel %vm134, %v3526, 0.0
    %3545 = vadd.xlane.f32.xlu0 %v3544
    %v3546 = vpop.xlane.xlu0 %3545
    %v3547 = vsel %vm134, %v3527, 0.0
    %3548 = vadd.xlane.f32.xlu0 %v3547
    %v3549 = vpop.xlane.xlu0 %3548
    %v3550 = vsel %vm134, %v3528, 0.0
    %3551 = vadd.xlane.f32.xlu0 %v3550
    %v3552 = vpop.xlane.xlu0 %3551
    %v3553 = vrcp.pop 32.0
    %v3554 = vmul.f32 %v3531, %v3553
    %v3555 = vmul.f32 %v3534, %v3553
    %v3556 = vmul.f32 %v3537, %v3553
    %v3557 = vmul.f32 %v3540, %v3553
    %v3558 = vmul.f32 %v3543, %v3553
    %v3559 = vmul.f32 %v3546, %v3553
    %v3560 = vmul.f32 %v3549, %v3553
    %v3561 = vmul.f32 %v3552, %v3553
    %v3562 = vsub.f32 %v3521, %v3554
    %v3563 = vsub.f32 %v3522, %v3555
    %v3564 = vsub.f32 %v3523, %v3556
    %v3565 = vsub.f32 %v3524, %v3557
    %v3566 = vsub.f32 %v3525, %v3558
    %v3567 = vsub.f32 %v3526, %v3559
    %v3568 = vsub.f32 %v3527, %v3560
    %v3569 = vsub.f32 %v3528, %v3561
    %v3570 = vmul.f32 %v3562, %v3562
    %v3571 = vmul.f32 %v3563, %v3563
    %v3572 = vmul.f32 %v3564, %v3564
    %v3573 = vmul.f32 %v3565, %v3565
    %v3574 = vmul.f32 %v3566, %v3566
    %v3575 = vmul.f32 %v3567, %v3567
    %v3576 = vmul.f32 %v3568, %v3568
    %v3577 = vmul.f32 %v3569, %v3569
    %v3578 = vsel %vm134, %v3570, 0.0
    %3579 = vadd.xlane.f32.xlu0 %v3578
    %v3580 = vpop.xlane.xlu0 %3579
    %v3581 = vsel %vm134, %v3571, 0.0
    %3582 = vadd.xlane.f32.xlu0 %v3581
    %v3583 = vpop.xlane.xlu0 %3582
    %v3584 = vsel %vm134, %v3572, 0.0
    %3585 = vadd.xlane.f32.xlu0 %v3584
    %v3586 = vpop.xlane.xlu0 %3585
    %v3587 = vsel %vm134, %v3573, 0.0
    %3588 = vadd.xlane.f32.xlu0 %v3587
    %v3589 = vpop.xlane.xlu0 %3588
    %v3590 = vsel %vm134, %v3574, 0.0
    %3591 = vadd.xlane.f32.xlu0 %v3590
    %v3592 = vpop.xlane.xlu0 %3591
    %v3593 = vsel %vm134, %v3575, 0.0
    %3594 = vadd.xlane.f32.xlu0 %v3593
    %v3595 = vpop.xlane.xlu0 %3594
    %v3596 = vsel %vm134, %v3576, 0.0
    %3597 = vadd.xlane.f32.xlu0 %v3596
    %v3598 = vpop.xlane.xlu0 %3597
    %v3599 = vsel %vm134, %v3577, 0.0
    %3600 = vadd.xlane.f32.xlu0 %v3599
    %v3601 = vpop.xlane.xlu0 %3600
    %v3602 = vmul.f32 %v3580, %v3553
    %v3603 = vmul.f32 %v3583, %v3553
    %v3604 = vmul.f32 %v3586, %v3553
    %v3605 = vmul.f32 %v3589, %v3553
    %v3606 = vmul.f32 %v3592, %v3553
    %v3607 = vmul.f32 %v3595, %v3553
    %v3608 = vmul.f32 %v3598, %v3553
    %v3609 = vmul.f32 %v3601, %v3553
    %v3610 = vadd.f32 %v3602, 1e-05
    %v3611 = vadd.f32 %v3603, 1e-05
    %v3612 = vadd.f32 %v3604, 1e-05
    %v3613 = vadd.f32 %v3605, 1e-05
    %v3614 = vadd.f32 %v3606, 1e-05
    %v3615 = vadd.f32 %v3607, 1e-05
    %v3616 = vadd.f32 %v3608, 1e-05
    %v3617 = vadd.f32 %v3609, 1e-05
    %v3618 = vrsqrt.pop %v3610
    %v3619 = vrsqrt.pop %v3611
    %v3620 = vrsqrt.pop %v3612
    %v3621 = vrsqrt.pop %v3613
    %v3622 = vrsqrt.pop %v3614
    %v3623 = vrsqrt.pop %v3615
    %v3624 = vrsqrt.pop %v3616
    %v3625 = vrsqrt.pop %v3617
    %v3626 = vmul.f32 %v3562, %v3618
    %v3627 = vmul.f32 %v3563, %v3619
    %v3628 = vmul.f32 %v3564, %v3620
    %v3629 = vmul.f32 %v3565, %v3621
    %v3630 = vmul.f32 %v3566, %v3622
    %v3631 = vmul.f32 %v3567, %v3623
    %v3632 = vmul.f32 %v3568, %v3624
    %v3633 = vmul.f32 %v3569, %v3625
    %v3634 = vld [vmem:[%s11] sm:$0x1]
    %v3636 = vlaneseq
    %v3637 = vshrl.u32 %v3636, 7
    %v3638 = vsub.s32 0, %v3637
    %v3639 = vrot.slane %v3634, %v3638
    %v3641 = vmul.f32 %v3626, %v3639
    %v3642 = vmul.f32 %v3627, %v3639
    %v3643 = vmul.f32 %v3628, %v3639
    %v3644 = vmul.f32 %v3629, %v3639
    %v3645 = vmul.f32 %v3630, %v3639
    %v3646 = vmul.f32 %v3631, %v3639
    %v3647 = vmul.f32 %v3632, %v3639
    %v3648 = vmul.f32 %v3633, %v3639
    %v3649 = vld [vmem:[%s12] sm:$0x1]
    %v3651 = vlaneseq
    %v3652 = vshrl.u32 %v3651, 7
    %v3653 = vsub.s32 0, %v3652
    %v3654 = vrot.slane %v3649, %v3653
    %v3656 = vadd.f32 %v3641, %v3654
    %v3657 = vadd.f32 %v3642, %v3654
    %v3658 = vadd.f32 %v3643, %v3654
    %v3659 = vadd.f32 %v3644, %v3654
    %v3660 = vadd.f32 %v3645, %v3654
    %v3661 = vadd.f32 %v3646, %v3654
    %v3662 = vadd.f32 %v3647, %v3654
    %v3663 = vadd.f32 %v3648, %v3654
    %v3664 = vld [vmem:[#allocation8] sm:$0xff]
    %v3665 = vld [vmem:[#allocation8 + $0x8] sm:$0xff]
    %v3666 = vld [vmem:[#allocation8 + $0x10] sm:$0xff]
    %v3667 = vld [vmem:[#allocation8 + $0x18] sm:$0xff]
    %v3668 = vld [vmem:[#allocation10] sm:$0x1]
    %v3670 = vlaneseq
    %v3671 = vshrl.u32 %v3670, 7
    %v3672 = vsub.s32 0, %v3671
    %v3673 = vrot.slane %v3668, %v3672
    %v3676 = vsel %vm134, %v3656, 0
    %v3679 = vsel %vm134, %v3657, 0
    %v3682 = vsel %vm134, %v3658, 0
    %v3685 = vsel %vm134, %v3659, 0
    %v3688 = vsel %vm134, %v3660, 0
    %v3691 = vsel %vm134, %v3661, 0
    %v3694 = vsel %vm134, %v3662, 0
    %v3697 = vsel %vm134, %v3663, 0
    %3699 = vmatprep.subr.mxu0 0.0
    %3700 = vmatpush1.msra.mxu0 %v3664
    %3701 = vmatprep.subr.mxu0 0.0
    %3702 = vmatpush1.msra.mxu0 %v3665
    %3703 = vmatprep.subr.mxu0 0.0
    %3704 = vmatpush1.msra.mxu0 %v3666
    %3705 = vmatprep.subr.mxu0 0.0
    %3706 = vmatpush1.msra.mxu0 %v3667
    %3707 = vmatprep.subr.mxu0 0.0
    %3708 = vmatpush1.msra.mxu0 0.0
    %3709 = vmatprep.subr.mxu0 0.0
    %3710 = vmatpush1.msra.mxu0 0.0
    %3711 = vmatprep.subr.mxu0 0.0
    %3712 = vmatpush1.msra.mxu0 0.0
    %3713 = vmatprep.subr.mxu0 0.0
    %3714 = vmatpush1.msra.mxu0 0.0
    %3715 = vmatprep.subr.mxu0 0.0
    %3716 = vmatpush1.msra.mxu0 0.0
    %3717 = vmatprep.subr.mxu0 0.0
    %3718 = vmatpush1.msra.mxu0 0.0
    %3719 = vmatprep.subr.mxu0 0.0
    %3720 = vmatpush1.msra.mxu0 0.0
    %3721 = vmatprep.subr.mxu0 0.0
    %3722 = vmatpush1.msra.mxu0 0.0
    %3723 = vmatprep.subr.mxu0 0.0
    %3724 = vmatpush1.msra.mxu0 0.0
    %3725 = vmatprep.subr.mxu0 0.0
    %3726 = vmatpush1.msra.mxu0 0.0
    %3727 = vmatprep.subr.mxu0 0.0
    %3728 = vmatpush1.msra.mxu0 0.0
    %3729 = vmatprep.subr.mxu0 0.0
    %3730 = vmatpush1.msra.mxu0 0.0
    %3731 = vmatprep.subr.mxu0 0.0
    %3732 = vmatpush1.msra.mxu0 0.0
    %3733 = vmatprep.subr.mxu0 0.0
    %3734 = vmatpush1.msra.mxu0 0.0
    %3735 = vmatprep.subr.mxu0 0.0
    %3736 = vmatpush1.msra.mxu0 0.0
    %3737 = vmatprep.subr.mxu0 0.0
    %3738 = vmatpush1.msra.mxu0 0.0
    %3739 = vmatprep.subr.mxu0 0.0
    %3740 = vmatpush1.msra.mxu0 0.0
    %3741 = vmatprep.subr.mxu0 0.0
    %3742 = vmatpush1.msra.mxu0 0.0
    %3743 = vmatprep.subr.mxu0 0.0
    %3744 = vmatpush1.msra.mxu0 0.0
    %3745 = vmatprep.subr.mxu0 0.0
    %3746 = vmatpush1.msra.mxu0 0.0
    %3747 = vmatprep.subr.mxu0 0.0
    %3748 = vmatpush1.msra.mxu0 0.0
    %3749 = vmatprep.subr.mxu0 0.0
    %3750 = vmatpush1.msra.mxu0 0.0
    %3751 = vmatprep.subr.mxu0 0.0
    %3752 = vmatpush1.msra.mxu0 0.0
    %3753 = vmatprep.subr.mxu0 0.0
    %3754 = vmatpush1.msra.mxu0 0.0
    %3755 = vmatprep.subr.mxu0 0.0
    %3756 = vmatpush1.msra.mxu0 0.0
    %3757 = vmatprep.subr.mxu0 0.0
    %3758 = vmatpush1.msra.mxu0 0.0
    %3759 = vmatprep.subr.mxu0 0.0
    %3760 = vmatpush1.msra.mxu0 0.0
    %3761 = vmatprep.subr.mxu0 0.0
    %3762 = vmatpush1.msra.mxu0 0.0
    %3763 = vmatprep.mubr.f32.mxu0 0.0
    %3764 = vmatmul.mubr.f32.gmra.mrb[0].mxu0 %v3676
    %v3765 = vpop.f32.mrb[0].mxu0
    %v3766 = vadd.f32 %v3673, %v3765
    %v3767 = vpop.f32.mrb[0].mxu0
    %3768 = vmatprep.mubr.f32.mxu0 0.0
    %3769 = vmatmul.mubr.f32.gmra.mrb[0].mxu0 %v3679
    %v3770 = vpop.f32.mrb[0].mxu0
    %v3771 = vadd.f32 %v3673, %v3770
    %v3772 = vpop.f32.mrb[0].mxu0
    %3773 = vmatprep.mubr.f32.mxu0 0.0
    %3774 = vmatmul.mubr.f32.gmra.mrb[0].mxu0 %v3682
    %v3775 = vpop.f32.mrb[0].mxu0
    %v3776 = vadd.f32 %v3673, %v3775
    %v3777 = vpop.f32.mrb[0].mxu0
    %3778 = vmatprep.mubr.f32.mxu0 0.0
    %3779 = vmatmul.mubr.f32.gmra.mrb[0].mxu0 %v3685
    %v3780 = vpop.f32.mrb[0].mxu0
    %v3781 = vadd.f32 %v3673, %v3780
    %v3782 = vpop.f32.mrb[0].mxu0
    %3783 = vmatprep.mubr.f32.mxu0 0.0
    %3784 = vmatmul.mubr.f32.gmra.mrb[0].mxu0 %v3688
    %v3785 = vpop.f32.mrb[0].mxu0
    %v3786 = vadd.f32 %v3673, %v3785
    %v3787 = vpop.f32.mrb[0].mxu0
    %3788 = vmatprep.mubr.f32.mxu0 0.0
    %3789 = vmatmul.mubr.f32.gmra.mrb[0].mxu0 %v3691
    %v3790 = vpop.f32.mrb[0].mxu0
    %v3791 = vadd.f32 %v3673, %v3790
    %v3792 = vpop.f32.mrb[0].mxu0
    %3793 = vmatprep.mubr.f32.mxu0 0.0
    %3794 = vmatmul.mubr.f32.gmra.mrb[0].mxu0 %v3694
    %v3795 = vpop.f32.mrb[0].mxu0
    %v3796 = vadd.f32 %v3673, %v3795
    %v3797 = vpop.f32.mrb[0].mxu0
    %3798 = vmatprep.mubr.f32.mxu0 0.0
    %3799 = vmatmul.mubr.f32.gmra.mrb[0].mxu0 %v3697
    %v3800 = vpop.f32.mrb[0].mxu0
    %v3801 = vadd.f32 %v3673, %v3800
    %v3802 = vpop.f32.mrb[0].mxu0
    %3803 = vdwg.mxu0
    %v3804 = vmax.f32 %v3766, 0.0
    %v3805 = vmax.f32 %v3771, 0.0
    %v3806 = vmax.f32 %v3776, 0.0
    %v3807 = vmax.f32 %v3781, 0.0
    %v3808 = vmax.f32 %v3786, 0.0
    %v3809 = vmax.f32 %v3791, 0.0
    %v3810 = vmax.f32 %v3796, 0.0
    %v3811 = vmax.f32 %v3801, 0.0
    %v3812 = vld [vmem:[%s9] sm:$0xff]
    %v3813 = vld [vmem:[%s9 + $0x8] sm:$0xff]
    %v3814 = vld [vmem:[%s9 + $0x10] sm:$0xff]
    %v3815 = vld [vmem:[%s9 + $0x18] sm:$0xff]
    %v3816 = vld [vmem:[%s9 + $0x20] sm:$0xff]
    %v3817 = vld [vmem:[%s9 + $0x28] sm:$0xff]
    %v3818 = vld [vmem:[%s9 + $0x30] sm:$0xff]
    %v3819 = vld [vmem:[%s9 + $0x38] sm:$0xff]
    %v3820 = vld [vmem:[%s10] sm:$0x1]
    %v3822 = vlaneseq
    %v3823 = vshrl.u32 %v3822, 7
    %v3824 = vsub.s32 0, %v3823
    %v3825 = vrot.slane %v3820, %v3824
    %vm3827 = vcmask 523264
    %v3829 = vsel %vm3827, %v3804, 0
    %v3832 = vsel %vm3827, %v3805, 0
    %v3835 = vsel %vm3827, %v3806, 0
    %v3838 = vsel %vm3827, %v3807, 0
    %v3841 = vsel %vm3827, %v3808, 0
    %v3844 = vsel %vm3827, %v3809, 0
    %v3847 = vsel %vm3827, %v3810, 0
    %v3850 = vsel %vm3827, %v3811, 0
    %3852 = vmatprep.subr.mxu0 0.0
    %3853 = vmatpush1.msra.mxu0 %v3812
    %3854 = vmatprep.subr.mxu0 0.0
    %3855 = vmatpush1.msra.mxu0 %v3813
    %3856 = vmatprep.subr.mxu0 0.0
    %3857 = vmatpush1.msra.mxu0 %v3814
    %3858 = vmatprep.subr.mxu0 0.0
    %3859 = vmatpush1.msra.mxu0 %v3815
    %3860 = vmatprep.subr.mxu0 0.0
    %3861 = vmatpush1.msra.mxu0 %v3816
    %3862 = vmatprep.subr.mxu0 0.0
    %3863 = vmatpush1.msra.mxu0 %v3817
    %3864 = vmatprep.subr.mxu0 0.0
    %3865 = vmatpush1.msra.mxu0 %v3818
    %3866 = vmatprep.subr.mxu0 0.0
    %3867 = vmatpush1.msra.mxu0 %v3819
    %3868 = vmatprep.subr.mxu0 0.0
    %3869 = vmatpush1.msra.mxu0 0.0
    %3870 = vmatprep.subr.mxu0 0.0
    %3871 = vmatpush1.msra.mxu0 0.0
    %3872 = vmatprep.subr.mxu0 0.0
    %3873 = vmatpush1.msra.mxu0 0.0
    %3874 = vmatprep.subr.mxu0 0.0
    %3875 = vmatpush1.msra.mxu0 0.0
    %3876 = vmatprep.subr.mxu0 0.0
    %3877 = vmatpush1.msra.mxu0 0.0
    %3878 = vmatprep.subr.mxu0 0.0
    %3879 = vmatpush1.msra.mxu0 0.0
    %3880 = vmatprep.subr.mxu0 0.0
    %3881 = vmatpush1.msra.mxu0 0.0
    %3882 = vmatprep.subr.mxu0 0.0
    %3883 = vmatpush1.msra.mxu0 0.0
    %3884 = vmatprep.subr.mxu0 0.0
    %3885 = vmatpush1.msra.mxu0 0.0
    %3886 = vmatprep.subr.mxu0 0.0
    %3887 = vmatpush1.msra.mxu0 0.0
    %3888 = vmatprep.subr.mxu0 0.0
    %3889 = vmatpush1.msra.mxu0 0.0
    %3890 = vmatprep.subr.mxu0 0.0
    %3891 = vmatpush1.msra.mxu0 0.0
    %3892 = vmatprep.subr.mxu0 0.0
    %3893 = vmatpush1.msra.mxu0 0.0
    %3894 = vmatprep.subr.mxu0 0.0
    %3895 = vmatpush1.msra.mxu0 0.0
    %3896 = vmatprep.subr.mxu0 0.0
    %3897 = vmatpush1.msra.mxu0 0.0
    %3898 = vmatprep.subr.mxu0 0.0
    %3899 = vmatpush1.msra.mxu0 0.0
    %3900 = vmatprep.subr.mxu0 0.0
    %3901 = vmatpush1.msra.mxu0 0.0
    %3902 = vmatprep.subr.mxu0 0.0
    %3903 = vmatpush1.msra.mxu0 0.0
    %3904 = vmatprep.subr.mxu0 0.0
    %3905 = vmatpush1.msra.mxu0 0.0
    %3906 = vmatprep.subr.mxu0 0.0
    %3907 = vmatpush1.msra.mxu0 0.0
    %3908 = vmatprep.subr.mxu0 0.0
    %3909 = vmatpush1.msra.mxu0 0.0
    %3910 = vmatprep.subr.mxu0 0.0
    %3911 = vmatpush1.msra.mxu0 0.0
    %3912 = vmatprep.subr.mxu0 0.0
    %3913 = vmatpush1.msra.mxu0 0.0
    %3914 = vmatprep.subr.mxu0 0.0
    %3915 = vmatpush1.msra.mxu0 0.0
    %3916 = vmatprep.mubr.f32.mxu0 0.0
    %3917 = vmatmul.mubr.f32.gmra.mrb[0].mxu0 %v3829
    %v3918 = vpop.f32.mrb[0].mxu0
    %v3919 = vadd.f32 %v3825, %v3918
    %v3920 = vpop.f32.mrb[0].mxu0
    %3921 = vmatprep.mubr.f32.mxu0 0.0
    %3922 = vmatmul.mubr.f32.gmra.mrb[0].mxu0 %v3832
    %v3923 = vpop.f32.mrb[0].mxu0
    %v3924 = vadd.f32 %v3825, %v3923
    %v3925 = vpop.f32.mrb[0].mxu0
    %3926 = vmatprep.mubr.f32.mxu0 0.0
    %3927 = vmatmul.mubr.f32.gmra.mrb[0].mxu0 %v3835
    %v3928 = vpop.f32.mrb[0].mxu0
    %v3929 = vadd.f32 %v3825, %v3928
    %v3930 = vpop.f32.mrb[0].mxu0
    %3931 = vmatprep.mubr.f32.mxu0 0.0
    %3932 = vmatmul.mubr.f32.gmra.mrb[0].mxu0 %v3838
    %v3933 = vpop.f32.mrb[0].mxu0
    %v3934 = vadd.f32 %v3825, %v3933
    %v3935 = vpop.f32.mrb[0].mxu0
    %3936 = vmatprep.mubr.f32.mxu0 0.0
    %3937 = vmatmul.mubr.f32.gmra.mrb[0].mxu0 %v3841
    %v3938 = vpop.f32.mrb[0].mxu0
    %v3939 = vadd.f32 %v3825, %v3938
    %v3940 = vpop.f32.mrb[0].mxu0
    %3941 = vmatprep.mubr.f32.mxu0 0.0
    %3942 = vmatmul.mubr.f32.gmra.mrb[0].mxu0 %v3844
    %v3943 = vpop.f32.mrb[0].mxu0
    %v3944 = vadd.f32 %v3825, %v3943
    %v3945 = vpop.f32.mrb[0].mxu0
    %3946 = vmatprep.mubr.f32.mxu0 0.0
    %3947 = vmatmul.mubr.f32.gmra.mrb[0].mxu0 %v3847
    %v3948 = vpop.f32.mrb[0].mxu0
    %v3949 = vadd.f32 %v3825, %v3948
    %v3950 = vpop.f32.mrb[0].mxu0
    %3951 = vmatprep.mubr.f32.mxu0 0.0
    %3952 = vmatmul.mubr.f32.gmra.mrb[0].mxu0 %v3850
    %v3953 = vpop.f32.mrb[0].mxu0
    %v3954 = vadd.f32 %v3825, %v3953
    %v3955 = vpop.f32.mrb[0].mxu0
    %3956 = vdwg.mxu0
    %v3957 = vadd.f32 %v3656, %v3919
    %v3958 = vadd.f32 %v3657, %v3924
    %v3959 = vadd.f32 %v3658, %v3929
    %v3960 = vadd.f32 %v3659, %v3934
    %v3961 = vadd.f32 %v3660, %v3939
    %v3962 = vadd.f32 %v3661, %v3944
    %v3963 = vadd.f32 %v3662, %v3949
    %v3964 = vadd.f32 %v3663, %v3954
    %v3965 = vsel %vm134, %v3957, 0.0
    %3966 = vadd.xlane.f32.xlu0 %v3965
    %v3967 = vpop.xlane.xlu0 %3966
    %v3968 = vsel %vm134, %v3958, 0.0
    %3969 = vadd.xlane.f32.xlu0 %v3968
    %v3970 = vpop.xlane.xlu0 %3969
    %v3971 = vsel %vm134, %v3959, 0.0
    %3972 = vadd.xlane.f32.xlu0 %v3971
    %v3973 = vpop.xlane.xlu0 %3972
    %v3974 = vsel %vm134, %v3960, 0.0
    %3975 = vadd.xlane.f32.xlu0 %v3974
    %v3976 = vpop.xlane.xlu0 %3975
    %v3977 = vsel %vm134, %v3961, 0.0
    %3978 = vadd.xlane.f32.xlu0 %v3977
    %v3979 = vpop.xlane.xlu0 %3978
    %v3980 = vsel %vm134, %v3962, 0.0
    %3981 = vadd.xlane.f32.xlu0 %v3980
    %v3982 = vpop.xlane.xlu0 %3981
    %v3983 = vsel %vm134, %v3963, 0.0
    %3984 = vadd.xlane.f32.xlu0 %v3983
    %v3985 = vpop.xlane.xlu0 %3984
    %v3986 = vsel %vm134, %v3964, 0.0
    %3987 = vadd.xlane.f32.xlu0 %v3986
    %v3988 = vpop.xlane.xlu0 %3987
    %v3989 = vmul.f32 %v3967, %v3553
    %v3990 = vmul.f32 %v3970, %v3553
    %v3991 = vmul.f32 %v3973, %v3553
    %v3992 = vmul.f32 %v3976, %v3553
    %v3993 = vmul.f32 %v3979, %v3553
    %v3994 = vmul.f32 %v3982, %v3553
    %v3995 = vmul.f32 %v3985, %v3553
    %v3996 = vmul.f32 %v3988, %v3553
    %v3997 = vsub.f32 %v3957, %v3989
    %v3998 = vsub.f32 %v3958, %v3990
    %v3999 = vsub.f32 %v3959, %v3991
    %v4000 = vsub.f32 %v3960, %v3992
    %v4001 = vsub.f32 %v3961, %v3993
    %v4002 = vsub.f32 %v3962, %v3994
    %v4003 = vsub.f32 %v3963, %v3995
    %v4004 = vsub.f32 %v3964, %v3996
    %v4005 = vmul.f32 %v3997, %v3997
    %v4006 = vmul.f32 %v3998, %v3998
    %v4007 = vmul.f32 %v3999, %v3999
    %v4008 = vmul.f32 %v4000, %v4000
    %v4009 = vmul.f32 %v4001, %v4001
    %v4010 = vmul.f32 %v4002, %v4002
    %v4011 = vmul.f32 %v4003, %v4003
    %v4012 = vmul.f32 %v4004, %v4004
    %v4013 = vsel %vm134, %v4005, 0.0
    %4014 = vadd.xlane.f32.xlu0 %v4013
    %v4015 = vpop.xlane.xlu0 %4014
    %v4016 = vsel %vm134, %v4006, 0.0
    %4017 = vadd.xlane.f32.xlu0 %v4016
    %v4018 = vpop.xlane.xlu0 %4017
    %v4019 = vsel %vm134, %v4007, 0.0
    %4020 = vadd.xlane.f32.xlu0 %v4019
    %v4021 = vpop.xlane.xlu0 %4020
    %v4022 = vsel %vm134, %v4008, 0.0
    %4023 = vadd.xlane.f32.xlu0 %v4022
    %v4024 = vpop.xlane.xlu0 %4023
    %v4025 = vsel %vm134, %v4009, 0.0
    %4026 = vadd.xlane.f32.xlu0 %v4025
    %v4027 = vpop.xlane.xlu0 %4026
    %v4028 = vsel %vm134, %v4010, 0.0
    %4029 = vadd.xlane.f32.xlu0 %v4028
    %v4030 = vpop.xlane.xlu0 %4029
    %v4031 = vsel %vm134, %v4011, 0.0
    %4032 = vadd.xlane.f32.xlu0 %v4031
    %v4033 = vpop.xlane.xlu0 %4032
    %v4034 = vsel %vm134, %v4012, 0.0
    %4035 = vadd.xlane.f32.xlu0 %v4034
    %v4036 = vpop.xlane.xlu0 %4035
    %v4037 = vmul.f32 %v4015, %v3553
    %v4038 = vmul.f32 %v4018, %v3553
    %v4039 = vmul.f32 %v4021, %v3553
    %v4040 = vmul.f32 %v4024, %v3553
    %v4041 = vmul.f32 %v4027, %v3553
    %v4042 = vmul.f32 %v4030, %v3553
    %v4043 = vmul.f32 %v4033, %v3553
    %v4044 = vmul.f32 %v4036, %v3553
    %v4045 = vadd.f32 %v4037, 1e-05
    %v4046 = vadd.f32 %v4038, 1e-05
    %v4047 = vadd.f32 %v4039, 1e-05
    %v4048 = vadd.f32 %v4040, 1e-05
    %v4049 = vadd.f32 %v4041, 1e-05
    %v4050 = vadd.f32 %v4042, 1e-05
    %v4051 = vadd.f32 %v4043, 1e-05
    %v4052 = vadd.f32 %v4044, 1e-05
    %v4053 = vrsqrt.pop %v4045
    %v4054 = vrsqrt.pop %v4046
    %v4055 = vrsqrt.pop %v4047
    %v4056 = vrsqrt.pop %v4048
    %v4057 = vrsqrt.pop %v4049
    %v4058 = vrsqrt.pop %v4050
    %v4059 = vrsqrt.pop %v4051
    %v4060 = vrsqrt.pop %v4052
    %v4061 = vmul.f32 %v3997, %v4053
    %v4062 = vmul.f32 %v3998, %v4054
    %v4063 = vmul.f32 %v3999, %v4055
    %v4064 = vmul.f32 %v4000, %v4056
    %v4065 = vmul.f32 %v4001, %v4057
    %v4066 = vmul.f32 %v4002, %v4058
    %v4067 = vmul.f32 %v4003, %v4059
    %v4068 = vmul.f32 %v4004, %v4060
    %v4069 = vld [vmem:[%s13] sm:$0x1]
    %v4071 = vlaneseq
    %v4072 = vshrl.u32 %v4071, 7
    %v4073 = vsub.s32 0, %v4072
    %v4074 = vrot.slane %v4069, %v4073
    %v4076 = vmul.f32 %v4061, %v4074
    %v4077 = vmul.f32 %v4062, %v4074
    %v4078 = vmul.f32 %v4063, %v4074
    %v4079 = vmul.f32 %v4064, %v4074
    %v4080 = vmul.f32 %v4065, %v4074
    %v4081 = vmul.f32 %v4066, %v4074
    %v4082 = vmul.f32 %v4067, %v4074
    %v4083 = vmul.f32 %v4068, %v4074
    %v4084 = vld [vmem:[%s14] sm:$0x1]
    %v4086 = vlaneseq
    %v4087 = vshrl.u32 %v4086, 7
    %v4088 = vsub.s32 0, %v4087
    %v4089 = vrot.slane %v4084, %v4088
    %v4091 = vadd.f32 %v4076, %v4089
    %v4092 = vadd.f32 %v4077, %v4089
    %v4093 = vadd.f32 %v4078, %v4089
    %v4094 = vadd.f32 %v4079, %v4089
    %v4095 = vadd.f32 %v4080, %v4089
    %v4096 = vadd.f32 %v4081, %v4089
    %v4097 = vadd.f32 %v4082, %v4089
    %v4098 = vadd.f32 %v4083, %v4089
    %4099 = vst.msk [vmem:[#allocation11] sm:$0xff] %vm134, %v4091
    %4100 = vst.msk [vmem:[#allocation11 + $0x8] sm:$0xff] %vm134, %v4092
    %4101 = vst.msk [vmem:[#allocation11 + $0x10] sm:$0xff] %vm134, %v4093
    %4102 = vst.msk [vmem:[#allocation11 + $0x18] sm:$0xff] %vm134, %v4094
    %4103 = vst.msk [vmem:[#allocation11 + $0x20] sm:$0xff] %vm134, %v4095
    %4104 = vst.msk [vmem:[#allocation11 + $0x28] sm:$0xff] %vm134, %v4096
    %4105 = vst.msk [vmem:[#allocation11 + $0x30] sm:$0xff] %vm134, %v4097
    %4106 = vst.msk [vmem:[#allocation11 + $0x38] sm:$0xff] %vm134, %v4098
    // Predicated region
    $region82: #{tpu_custom_call.1} parent=1 // pred_check
      _
    $region83: #{tpu_custom_call.1} parent=1 // pred_check_branch
      %4108 = sbr.rel (0) target = $region85
    $region84: #{tpu_custom_call.1} parent=1 // pred_region
      %s4110 = ssub.s32 1024, 1024
      %4111 = vsyncadd [#allocation4], %s4110
      %s4112 = sshll.u32 [#allocation11], 4
      %s4113 = int_to_ptr.vmem [resolvable:$true] %s4112
      %4118 = dma.vmem_to_hbm [thread:$0]  %s4113, 1024, %s15, [#allocation4], 128, 128, 8
    $region85: #{tpu_custom_call.1} parent=1 // pred_fallthru
      _
    // Predicated region
    $region86: #{tpu_custom_call.1} parent=1 // pred_check
      _
    $region87: #{tpu_custom_call.1} parent=1 // pred_check_branch
      %4120 = sbr.rel (0) target = $region89
    $region88: #{tpu_custom_call.1} parent=1 // pred_region
      %4121 = dma.done [#allocation4], 1024
    $region89: #{tpu_custom_call.1} parent=1 // pred_fallthru
      _
    %4122 = vsyncpa [#allocation3], 1
    %4123 = vsyncpa [#allocation6], 1
    %4124 = vsyncpa [#allocation9], 1
    %4125 = vsyncpa [#allocation4], 1

</llo_original>
